<compile_context>
chip_gen: v7x
topology: tpu7x:2x2x1
jax: 0.10.0
libtpu: 0.0.40
codegen_flags: <defaults>
</compile_context>

<pallas_src>
import functools
import math

import jax
import jax.numpy as jnp
import numpy as np
from jax.experimental import pallas as pl
from jax.experimental.pallas import tpu as pltpu


# --------------------------- kernel 1: 3x3 conv ------------------------------


def _conv3x3_kernel(x_ref, w_ref, b_ref, o_ref, acc_ref, *, Hc, Wc):
    """3x3 conv, padding=1, one batch element, token-major layout.

    x_ref  : (1, S, ct)    bf16  NHWC-flattened input tokens (S = Hc*Wc)
    w_ref  : (ct, 9*cout)  bf16  per-tap weights, tap = kh*3 + kw, (in, out)
    b_ref  : (1, cout)     f32   conv bias
    o_ref  : (1, S, cout)  f32   conv output tokens (NHWC-flattened)
    acc_ref: (S, cout)     f32   VMEM accumulator
    """
    S = Hc * Wc
    cout = o_ref.shape[2]

    # One MXU matmul computes every tap for every spatial position.
    y = jnp.dot(x_ref[0], w_ref[...], preferred_element_type=jnp.float32)

    # Column index of each output token, for the left/right boundary masks.
    tok = jax.lax.broadcasted_iota(jnp.int32, (S, 1), 0)
    col = tok % Wc

    # Center tap (kh=1, kw=1) + bias initializes the accumulator.
    acc_ref[...] = y[:, 4 * cout:5 * cout] + b_ref[...]

    # Remaining 8 taps: shift along the row-major token axis and mask tokens
    # whose source pixel is outside the image.  Top/bottom validity is implied
    # by the shifted row range (an out-of-range row inside the range is always
    # also column-invalid), so only columns need a mask.
    for kh in range(3):
        for kw in range(3):
            if kh == 1 and kw == 1:
                continue
            tap = kh * 3 + kw
            dh, dw = kh - 1, kw - 1
            d = dh * Wc + dw
            src0, dst0 = max(d, 0), max(-d, 0)
            L = S - abs(d)
            contrib = y[src0:src0 + L, tap * cout:(tap + 1) * cout]
            if dw != 0:
                c = col[dst0:dst0 + L]
                valid = jnp.logical_and(c + dw >= 0, c + dw < Wc)
                contrib = jnp.where(valid, contrib, 0.0)
            acc_ref[dst0:dst0 + L, :] = acc_ref[dst0:dst0 + L, :] + contrib

    o_ref[0] = acc_ref[...]


# ------------------------ kernel 2: transformer block ------------------------


def _transformer_kernel(x_ref, wqkv_ref, bqkv_ref, wc_ref, bc_ref,
                        g1_ref, be1_ref, w1_ref, bf1_ref, w2_ref, bf2_ref,
                        g2_ref, be2_ref, o_ref, *, num_heads, head_dim,
                        eps=1e-5):
    """Transformer block for one batch element.

    x_ref : (1, S, C) f32 tokens.  wqkv is the merged, head-permuted (C, 3C)
    projection; group g of the attention is the contiguous feature slice
    [g*num_heads, (g+1)*num_heads) of each of q/k/v.
    """
    x = x_ref[0]                                   # (S, C) f32
    C = x.shape[1]
    nh = num_heads
    xb = x.astype(jnp.bfloat16)

    # Merged Q/K/V projection: one (S, C) x (C, 3C) matmul.
    qkv = jnp.dot(xb, wqkv_ref[...],
                  preferred_element_type=jnp.float32) + bqkv_ref[...]

    inv_scale = 1.0 / math.sqrt(float(head_dim))
    ogs = []
    for g in range(head_dim):                      # head_dim groups of nh feats
        lo = g * nh
        qg = (qkv[:, lo:lo + nh] * inv_scale).astype(jnp.bfloat16)
        kg = qkv[:, C + lo:C + lo + nh].astype(jnp.bfloat16)
        vg = qkv[:, 2 * C + lo:2 * C + lo + nh].astype(jnp.bfloat16)
        s = jax.lax.dot_general(qg, kg, (((1,), (1,)), ((), ())),
                                preferred_element_type=jnp.float32)   # (S, S)
        m = jnp.max(s, axis=-1, keepdims=True)
        p = jnp.exp(s - m)                         # unnormalized probabilities
        rs = jnp.sum(p, axis=-1, keepdims=True)
        # attn_dropout: identity at inference.
        og = jnp.dot(p.astype(jnp.bfloat16), vg,
                     preferred_element_type=jnp.float32)              # (S, nh)
        # Softmax divide deferred to the small (S, nh) output; EUP reciprocal.
        ogs.append(og * pl.reciprocal(rs, approx=True))
    og_all = jnp.concatenate(ogs, axis=-1)         # (S, C), feature = g*nh + n

    # attn_combine as a single (S, C) x (C, C) matmul.
    attn = jnp.dot(og_all.astype(jnp.bfloat16), wc_ref[...],
                   preferred_element_type=jnp.float32) + bc_ref[...]

    # residual + LayerNorm 1 (f32 statistics)
    h = x + attn
    mu = jnp.mean(h, axis=-1, keepdims=True)
    var = jnp.mean(jnp.square(h - mu), axis=-1, keepdims=True)
    h = (h - mu) * jax.lax.rsqrt(var + eps) * g1_ref[...] + be1_ref[...]

    # FFN (Linear -> ReLU -> [dropout=id] -> Linear)
    f = jnp.dot(h.astype(jnp.bfloat16), w1_ref[...],
                preferred_element_type=jnp.float32) + bf1_ref[...]
    f = jnp.maximum(f, 0.0)
    f = jnp.dot(f.astype(jnp.bfloat16), w2_ref[...],
                preferred_element_type=jnp.float32) + bf2_ref[...]

    # residual + LayerNorm 2
    y = h + f
    mu2 = jnp.mean(y, axis=-1, keepdims=True)
    var2 = jnp.mean(jnp.square(y - mu2), axis=-1, keepdims=True)
    o_ref[0] = (y - mu2) * jax.lax.rsqrt(var2 + eps) * g2_ref[...] + be2_ref[...]


# ------------------------------ wrapper (glue) --------------------------------


def upblock_forward(x, skip, params, num_heads=8):
    B, _, H, W = x.shape
    conv_w = params["conv_w"]
    cout = conv_w.shape[0]
    ct = conv_w.shape[1]                          # = in_channels + out_channels
    hd = cout // num_heads
    Hc, Wc = 2 * H, 2 * W
    S = Hc * Wc
    ffd = 4 * cout

    cparams = pltpu.CompilerParams(dimension_semantics=("parallel",),
                                   vmem_limit_bytes=32 * 1024 * 1024)

    # 1) nearest-neighbor 2x upsample + channel concat (cheap XLA glue).
    xu = jnp.repeat(jnp.repeat(x, 2, axis=2), 2, axis=3)
    xc = jnp.concatenate([xu, skip], axis=1)      # (B, ct, Hc, Wc)

    # 2) token-major (NHWC-flat) conv input; bf16 matmul operand.
    xt = xc.transpose(0, 2, 3, 1).reshape(B, S, ct).astype(jnp.bfloat16)
    # conv weight as (in, 9*out) with tap-major column blocks; bias as (1, cout)
    wstack = conv_w.transpose(1, 2, 3, 0).reshape(ct, 9 * cout).astype(jnp.bfloat16)
    bconv = params["conv_b"].reshape(1, cout)

    conv_tok = pl.pallas_call(
        functools.partial(_conv3x3_kernel, Hc=Hc, Wc=Wc),
        out_shape=jax.ShapeDtypeStruct((B, S, cout), jnp.float32),
        grid=(B,),
        in_specs=[pl.BlockSpec((1, S, ct), lambda b: (b, 0, 0)),
                  pl.BlockSpec((ct, 9 * cout), lambda b: (0, 0)),
                  pl.BlockSpec((1, cout), lambda b: (0, 0))],
        out_specs=pl.BlockSpec((1, S, cout), lambda b: (b, 0, 0)),
        scratch_shapes=[pltpu.VMEM((S, cout), jnp.float32)],
        compiler_params=cparams,
    )(xt, wstack, bconv)

    # 3) torch's raw x.reshape(B, -1, C) of the NCHW conv output:
    #    NHWC-flat -> NCHW (small XLA transpose) -> raw reshape (free).
    tokens = conv_tok.transpose(0, 2, 1).reshape(B, S, cout)

    # 4) Transformer weights.  Fold reshape(B,S,nh,hd).permute(0,3,1,2) into a
    #    q/k/v output-feature permutation (new feature g*nh + n <- old n*hd+g)
    #    and merge q/k/v into a single (C, 3C) operand.
    perm = np.asarray([n * hd + g for g in range(hd) for n in range(num_heads)])
    wqkv = jnp.concatenate([params["wq"][perm].T,
                            params["wk"][perm].T,
                            params["wv"][perm].T], axis=1).astype(jnp.bfloat16)
    bqkv = jnp.concatenate([params["bq"][perm],
                            params["bk"][perm],
                            params["bv"][perm]]).reshape(1, 3 * cout)
    wc_t = params["wc"].T.astype(jnp.bfloat16)
    bc = params["bc"].reshape(1, cout)
    w1_t = params["w1"].T.astype(jnp.bfloat16)    # (C, 4C)
    bf1 = params["bf1"].reshape(1, ffd)
    w2_t = params["w2"].T.astype(jnp.bfloat16)    # (4C, C)
    bf2 = params["bf2"].reshape(1, cout)
    g1 = params["g1"].reshape(1, cout)
    be1 = params["be1"].reshape(1, cout)
    g2 = params["g2"].reshape(1, cout)
    be2 = params["be2"].reshape(1, cout)

    vec = lambda d: pl.BlockSpec((1, d), lambda b: (0, 0))
    mat = lambda r, c: pl.BlockSpec((r, c), lambda b: (0, 0))

    tokens_out = pl.pallas_call(
        functools.partial(_transformer_kernel, num_heads=num_heads, head_dim=hd),
        out_shape=jax.ShapeDtypeStruct((B, S, cout), jnp.float32),
        grid=(B,),
        in_specs=[pl.BlockSpec((1, S, cout), lambda b: (b, 0, 0)),
                  mat(cout, 3 * cout), vec(3 * cout),   # merged q/k/v proj
                  mat(cout, cout), vec(cout),           # attn_combine
                  vec(cout), vec(cout),                 # norm1 gamma/beta
                  mat(cout, ffd), vec(ffd),             # ffn linear1
                  mat(ffd, cout), vec(cout),            # ffn linear2
                  vec(cout), vec(cout)],                # norm2 gamma/beta
        out_specs=pl.BlockSpec((1, S, cout), lambda b: (b, 0, 0)),
        compiler_params=cparams,
    )(tokens, wqkv, bqkv, wc_t, bc, g1, be1, w1_t, bf1, w2_t, bf2, g2, be2)

    # TODO(synk): the original UpBlock.forward (dead code nested inside
    # __init__) reshapes to (B, C, sqrt(S/4), sqrt(S/4)), which is
    # element-count inconsistent; we keep the consistent raw reshape to
    # (B, C, 2H, 2W) instead (same as the previously verified version).
    return tokens_out.reshape(B, cout, Hc, Wc)


# ----------------------------- pure-JAX reference -----------------------------


def _layer_norm(h, g, b, eps=1e-5):
    mu = jnp.mean(h, axis=-1, keepdims=True)
    var = jnp.mean((h - mu) ** 2, axis=-1, keepdims=True)
    return (h - mu) * jax.lax.rsqrt(var + eps) * g + b


def reference_upblock(x, skip, p, num_heads=8):
    xu = jnp.repeat(jnp.repeat(x, 2, axis=2), 2, axis=3)
    xc = jnp.concatenate([xu, skip], axis=1)
    y = jax.lax.conv_general_dilated(
        xc, p["conv_w"], (1, 1), ((1, 1), (1, 1)),
        dimension_numbers=("NCHW", "OIHW", "NCHW"))
    y = y + p["conv_b"][None, :, None, None]
    B, C, H, W = y.shape
    t = y.reshape(B, H * W, C)

    lin = lambda z, w, b: z @ w.T + b
    q, k, v = lin(t, p["wq"], p["bq"]), lin(t, p["wk"], p["bk"]), lin(t, p["wv"], p["bv"])
    nh, hd = num_heads, C // num_heads
    split = lambda z: z.reshape(B, -1, nh, hd).transpose(0, 3, 1, 2)   # (B,hd,S,nh)
    q, k, v = split(q), split(k), split(v)
    scale = math.sqrt(float(hd))
    s = jnp.einsum("bgsn,bgtn->bgst", q / scale, k)
    w_ = jax.nn.softmax(s, axis=-1)
    o = jnp.einsum("bgst,bgtn->bgsn", w_, v)
    o = o.transpose(0, 2, 1, 3).reshape(B, -1, C)
    o = lin(o, p["wc"], p["bc"])
    h1 = _layer_norm(t + o, p["g1"], p["be1"])
    f = lin(jax.nn.relu(lin(h1, p["w1"], p["bf1"])), p["w2"], p["bf2"])
    h2 = _layer_norm(h1 + f, p["g2"], p["be2"])
    return h2.reshape(B, C, H, W)


# ----------------------------------- params -----------------------------------


def init_params(key, in_channels, out_channels):
    c = out_channels
    ct = in_channels + out_channels
    ks = jax.random.split(key, 16)
    lin = lambda k, fo, fi: jax.random.normal(k, (fo, fi), jnp.float32) / math.sqrt(fi)
    bias = lambda k, d: jax.random.normal(k, (d,), jnp.float32) * 0.1
    return dict(
        conv_w=jax.random.normal(ks[0], (c, ct, 3, 3), jnp.float32) / math.sqrt(ct * 9),
        conv_b=bias(ks[1], c),
        wq=lin(ks[2], c, c), bq=bias(ks[3], c),
        wk=lin(ks[4], c, c), bk=bias(ks[5], c),
        wv=lin(ks[6], c, c), bv=bias(ks[7], c),
        wc=lin(ks[8], c, c), bc=bias(ks[9], c),
        w1=lin(ks[10], 4 * c, c), bf1=bias(ks[11], 4 * c),
        w2=lin(ks[12], c, 4 * c), bf2=bias(ks[13], c),
        g1=jnp.ones((c,), jnp.float32), be1=jnp.zeros((c,), jnp.float32),
        g2=jnp.ones((c,), jnp.float32), be2=jnp.zeros((c,), jnp.float32),
    )


# ------------------------------------ main -------------------------------------


if __name__ == "__main__":
    in_channels, out_channels, num_heads = 16, 16, 8
    B, H, W = 2, 8, 8

    key = jax.random.PRNGKey(0)
    kx, ks, kp = jax.random.split(key, 3)
    x = jax.random.normal(kx, (B, in_channels, H, W), jnp.float32)
    skip = jax.random.normal(ks, (B, out_channels, 2 * H, 2 * W), jnp.float32)
    params = init_params(kp, in_channels, out_channels)

    out = jax.block_until_ready(upblock_forward(x, skip, params, num_heads=num_heads))
    ref = jax.block_until_ready(reference_upblock(x, skip, params, num_heads=num_heads))

    # bf16 matmul operands (f32 accumulation) vs a pure-f32 reference: expected
    # max-abs deviation is a few 1e-2 on these layer-normed unit-scale outputs;
    # structural bugs (masking / permutation / softmax) produce O(1) errors.
    err = float(jnp.max(jnp.abs(out - ref)))
    if not np.isfinite(err) or err > 1e-1:
        raise AssertionError(f"mismatch vs reference, max abs err = {err}")

    print("KERNEL_OK")
</pallas_src>

<mosaic_0001>
module attributes {stable_mosaic.version = 11 : i64} {
  func.func @_conv3x3_kernel(%arg0: i32, %arg1: memref<1x256x32xbf16, #tpu.memory_space<vmem>>, %arg2: memref<32x144xbf16, #tpu.memory_space<vmem>>, %arg3: memref<1x16xf32, #tpu.memory_space<vmem>>, %arg4: memref<1x256x16xf32, #tpu.memory_space<vmem>>, %arg5: memref<256x16xf32, #tpu.memory_space<vmem>>) attributes {dimension_semantics = [#tpu.dimension_semantics<parallel>], iteration_bounds = array<i64: 2>, scalar_prefetch = 0 : i64, scratch_operands = 1 : i64, tpu.core_type = #tpu.core_type<tc>, window_params = [{transform_indices = @transform_0, window_bounds = array<i64: 1, 256, 32>}, {pipeline_mode = #tpu.pipeline_mode<synchronous>, transform_indices = @transform_1, window_bounds = array<i64: 32, 144>}, {pipeline_mode = #tpu.pipeline_mode<synchronous>, transform_indices = @transform_2, window_bounds = array<i64: 1, 16>}, {transform_indices = @transform_3, window_bounds = array<i64: 1, 256, 16>}]} {
    %c0 = arith.constant 0 : index
    %c0_0 = arith.constant 0 : index
    %c0_1 = arith.constant 0 : index
    %0 = vector.load %arg1[%c0, %c0_0, %c0_1] : memref<1x256x32xbf16, #tpu.memory_space<vmem>>, vector<1x256x32xbf16>
    %1 = vector.shape_cast %0 : vector<1x256x32xbf16> to vector<256x32xbf16>
    %c0_2 = arith.constant 0 : index
    %c0_3 = arith.constant 0 : index
    %2 = vector.load %arg2[%c0_2, %c0_3] : memref<32x144xbf16, #tpu.memory_space<vmem>>, vector<32x144xbf16>
    %cst = arith.constant dense<0.000000e+00> : vector<256x144xf32>
    %3 = tpu.matmul %1, %2, %cst {dimension_numbers = #tpu.dot_dimension_numbers<[1], [0], [0], [1], [0, 0, 1, 1], [], []>} : vector<256x32xbf16>, vector<32x144xbf16>, vector<256x144xf32> -> vector<256x144xf32>
    %4 = tpu.iota {dimensions = array<i32: 0>} : vector<256x1xi32>
    %c16_i32 = arith.constant 16 : i32
    %c0_i32 = arith.constant 0 : i32
    %5 = arith.cmpi eq, %c16_i32, %c0_i32 : i32
    %c1_i32 = arith.constant 1 : i32
    %6 = arith.select %5, %c1_i32, %c16_i32 : i32
    %7 = vector.broadcast %6 : i32 to vector<256x1xi32>
    %8 = arith.remsi %4, %7 : vector<256x1xi32>
    %c0_i32_4 = arith.constant 0 : i32
    %9 = vector.broadcast %c0_i32_4 : i32 to vector<256x1xi32>
    %10 = arith.cmpi ne, %8, %9 : vector<256x1xi32>
    %c0_i32_5 = arith.constant 0 : i32
    %11 = vector.broadcast %c0_i32_5 : i32 to vector<256x1xi32>
    %12 = arith.cmpi slt, %8, %11 : vector<256x1xi32>
    %c0_i32_6 = arith.constant 0 : i32
    %13 = arith.cmpi slt, %6, %c0_i32_6 : i32
    %14 = vector.broadcast %13 : i1 to vector<256x1xi1>
    %15 = vector.broadcast %14 : vector<256x1xi1> to vector<256x1xi1>
    %16 = arith.xori %12, %15 : vector<256x1xi1>
    %17 = arith.andi %16, %10 : vector<256x1xi1>
    %18 = vector.broadcast %6 : i32 to vector<256x1xi32>
    %19 = arith.addi %8, %18 : vector<256x1xi32>
    %20 = arith.select %17, %19, %8 : vector<256x1xi1>, vector<256x1xi32>
    %21 = vector.extract_strided_slice %3 {offsets = [0, 64], sizes = [256, 16], strides = [1, 1]} : vector<256x144xf32> to vector<256x16xf32>
    %c0_7 = arith.constant 0 : index
    %c0_8 = arith.constant 0 : index
    %22 = vector.load %arg3[%c0_7, %c0_8] : memref<1x16xf32, #tpu.memory_space<vmem>>, vector<1x16xf32>
    %23 = vector.broadcast %22 : vector<1x16xf32> to vector<256x16xf32>
    %24 = arith.addf %21, %23 : vector<256x16xf32>
    %c0_9 = arith.constant 0 : index
    %c0_10 = arith.constant 0 : index
    %25 = vector.load %arg5[%c0_9, %c0_10] : memref<256x16xf32, #tpu.memory_space<vmem>>, vector<256x16xf32>
    tpu.vector_store %arg5[%c0_9, %c0_10], %24 {strides = array<i32>} : memref<256x16xf32, #tpu.memory_space<vmem>>, vector<256x16xf32>,
    %26 = vector.extract_strided_slice %3 {offsets = [0, 0], sizes = [239, 16], strides = [1, 1]} : vector<256x144xf32> to vector<239x16xf32>
    %27 = vector.extract_strided_slice %20 {offsets = [17, 0], sizes = [239, 1], strides = [1, 1]} : vector<256x1xi32> to vector<239x1xi32>
    %c-1_i32 = arith.constant -1 : i32
    %28 = vector.broadcast %c-1_i32 : i32 to vector<239x1xi32>
    %29 = arith.addi %27, %28 : vector<239x1xi32>
    %c0_i32_11 = arith.constant 0 : i32
    %30 = vector.broadcast %c0_i32_11 : i32 to vector<239x1xi32>
    %31 = arith.cmpi sge, %29, %30 : vector<239x1xi32>
    %c-1_i32_12 = arith.constant -1 : i32
    %32 = vector.broadcast %c-1_i32_12 : i32 to vector<239x1xi32>
    %33 = arith.addi %27, %32 : vector<239x1xi32>
    %c16_i32_13 = arith.constant 16 : i32
    %34 = vector.broadcast %c16_i32_13 : i32 to vector<239x1xi32>
    %35 = arith.cmpi slt, %33, %34 : vector<239x1xi32>
    %36 = arith.andi %31, %35 : vector<239x1xi1>
    %cst_14 = arith.constant 0.000000e+00 : f32
    %37 = vector.shape_cast %36 : vector<239x1xi1> to vector<239x1xi1>
    %38 = vector.broadcast %37 : vector<239x1xi1> to vector<239x16xi1>
    %39 = vector.broadcast %cst_14 : f32 to vector<239x16xf32>
    %40 = arith.select %38, %26, %39 : vector<239x16xi1>, vector<239x16xf32>
    %c17 = arith.constant 17 : index
    %c0_15 = arith.constant 0 : index
    %41 = vector.load %arg5[%c17, %c0_15] : memref<256x16xf32, #tpu.memory_space<vmem>>, vector<239x16xf32>
    %42 = arith.addf %41, %40 : vector<239x16xf32>
    %c17_16 = arith.constant 17 : index
    %c0_17 = arith.constant 0 : index
    %43 = vector.load %arg5[%c17_16, %c0_17] : memref<256x16xf32, #tpu.memory_space<vmem>>, vector<239x16xf32>
    tpu.vector_store %arg5[%c17_16, %c0_17], %42 {strides = array<i32>} : memref<256x16xf32, #tpu.memory_space<vmem>>, vector<239x16xf32>,
    %44 = vector.extract_strided_slice %3 {offsets = [0, 16], sizes = [240, 16], strides = [1, 1]} : vector<256x144xf32> to vector<240x16xf32>
    %c16 = arith.constant 16 : index
    %c0_18 = arith.constant 0 : index
    %45 = vector.load %arg5[%c16, %c0_18] : memref<256x16xf32, #tpu.memory_space<vmem>>, vector<240x16xf32>
    %46 = arith.addf %45, %44 : vector<240x16xf32>
    %c16_19 = arith.constant 16 : index
    %c0_20 = arith.constant 0 : index
    %47 = vector.load %arg5[%c16_19, %c0_20] : memref<256x16xf32, #tpu.memory_space<vmem>>, vector<240x16xf32>
    tpu.vector_store %arg5[%c16_19, %c0_20], %46 {strides = array<i32>} : memref<256x16xf32, #tpu.memory_space<vmem>>, vector<240x16xf32>,
    %48 = vector.extract_strided_slice %3 {offsets = [0, 32], sizes = [241, 16], strides = [1, 1]} : vector<256x144xf32> to vector<241x16xf32>
    %49 = vector.extract_strided_slice %20 {offsets = [15, 0], sizes = [241, 1], strides = [1, 1]} : vector<256x1xi32> to vector<241x1xi32>
    %c1_i32_21 = arith.constant 1 : i32
    %50 = vector.broadcast %c1_i32_21 : i32 to vector<241x1xi32>
    %51 = arith.addi %49, %50 : vector<241x1xi32>
    %c0_i32_22 = arith.constant 0 : i32
    %52 = vector.broadcast %c0_i32_22 : i32 to vector<241x1xi32>
    %53 = arith.cmpi sge, %51, %52 : vector<241x1xi32>
    %c1_i32_23 = arith.constant 1 : i32
    %54 = vector.broadcast %c1_i32_23 : i32 to vector<241x1xi32>
    %55 = arith.addi %49, %54 : vector<241x1xi32>
    %c16_i32_24 = arith.constant 16 : i32
    %56 = vector.broadcast %c16_i32_24 : i32 to vector<241x1xi32>
    %57 = arith.cmpi slt, %55, %56 : vector<241x1xi32>
    %58 = arith.andi %53, %57 : vector<241x1xi1>
    %cst_25 = arith.constant 0.000000e+00 : f32
    %59 = vector.shape_cast %58 : vector<241x1xi1> to vector<241x1xi1>
    %60 = vector.broadcast %59 : vector<241x1xi1> to vector<241x16xi1>
    %61 = vector.broadcast %cst_25 : f32 to vector<241x16xf32>
    %62 = arith.select %60, %48, %61 : vector<241x16xi1>, vector<241x16xf32>
    %c15 = arith.constant 15 : index
    %c0_26 = arith.constant 0 : index
    %63 = vector.load %arg5[%c15, %c0_26] : memref<256x16xf32, #tpu.memory_space<vmem>>, vector<241x16xf32>
    %64 = arith.addf %63, %62 : vector<241x16xf32>
    %c15_27 = arith.constant 15 : index
    %c0_28 = arith.constant 0 : index
    %65 = vector.load %arg5[%c15_27, %c0_28] : memref<256x16xf32, #tpu.memory_space<vmem>>, vector<241x16xf32>
    tpu.vector_store %arg5[%c15_27, %c0_28], %64 {strides = array<i32>} : memref<256x16xf32, #tpu.memory_space<vmem>>, vector<241x16xf32>,
    %66 = vector.extract_strided_slice %3 {offsets = [0, 48], sizes = [255, 16], strides = [1, 1]} : vector<256x144xf32> to vector<255x16xf32>
    %67 = vector.extract_strided_slice %20 {offsets = [1, 0], sizes = [255, 1], strides = [1, 1]} : vector<256x1xi32> to vector<255x1xi32>
    %c-1_i32_29 = arith.constant -1 : i32
    %68 = vector.broadcast %c-1_i32_29 : i32 to vector<255x1xi32>
    %69 = arith.addi %67, %68 : vector<255x1xi32>
    %c0_i32_30 = arith.constant 0 : i32
    %70 = vector.broadcast %c0_i32_30 : i32 to vector<255x1xi32>
    %71 = arith.cmpi sge, %69, %70 : vector<255x1xi32>
    %c-1_i32_31 = arith.constant -1 : i32
    %72 = vector.broadcast %c-1_i32_31 : i32 to vector<255x1xi32>
    %73 = arith.addi %67, %72 : vector<255x1xi32>
    %c16_i32_32 = arith.constant 16 : i32
    %74 = vector.broadcast %c16_i32_32 : i32 to vector<255x1xi32>
    %75 = arith.cmpi slt, %73, %74 : vector<255x1xi32>
    %76 = arith.andi %71, %75 : vector<255x1xi1>
    %cst_33 = arith.constant 0.000000e+00 : f32
    %77 = vector.shape_cast %76 : vector<255x1xi1> to vector<255x1xi1>
    %78 = vector.broadcast %77 : vector<255x1xi1> to vector<255x16xi1>
    %79 = vector.broadcast %cst_33 : f32 to vector<255x16xf32>
    %80 = arith.select %78, %66, %79 : vector<255x16xi1>, vector<255x16xf32>
    %c1 = arith.constant 1 : index
    %c0_34 = arith.constant 0 : index
    %81 = vector.load %arg5[%c1, %c0_34] : memref<256x16xf32, #tpu.memory_space<vmem>>, vector<255x16xf32>
    %82 = arith.addf %81, %80 : vector<255x16xf32>
    %c1_35 = arith.constant 1 : index
    %c0_36 = arith.constant 0 : index
    %83 = vector.load %arg5[%c1_35, %c0_36] : memref<256x16xf32, #tpu.memory_space<vmem>>, vector<255x16xf32>
    tpu.vector_store %arg5[%c1_35, %c0_36], %82 {strides = array<i32>} : memref<256x16xf32, #tpu.memory_space<vmem>>, vector<255x16xf32>,
    %84 = vector.extract_strided_slice %3 {offsets = [1, 80], sizes = [255, 16], strides = [1, 1]} : vector<256x144xf32> to vector<255x16xf32>
    %85 = vector.extract_strided_slice %20 {offsets = [0, 0], sizes = [255, 1], strides = [1, 1]} : vector<256x1xi32> to vector<255x1xi32>
    %c1_i32_37 = arith.constant 1 : i32
    %86 = vector.broadcast %c1_i32_37 : i32 to vector<255x1xi32>
    %87 = arith.addi %85, %86 : vector<255x1xi32>
    %c0_i32_38 = arith.constant 0 : i32
    %88 = vector.broadcast %c0_i32_38 : i32 to vector<255x1xi32>
    %89 = arith.cmpi sge, %87, %88 : vector<255x1xi32>
    %c1_i32_39 = arith.constant 1 : i32
    %90 = vector.broadcast %c1_i32_39 : i32 to vector<255x1xi32>
    %91 = arith.addi %85, %90 : vector<255x1xi32>
    %c16_i32_40 = arith.constant 16 : i32
    %92 = vector.broadcast %c16_i32_40 : i32 to vector<255x1xi32>
    %93 = arith.cmpi slt, %91, %92 : vector<255x1xi32>
    %94 = arith.andi %89, %93 : vector<255x1xi1>
    %cst_41 = arith.constant 0.000000e+00 : f32
    %95 = vector.shape_cast %94 : vector<255x1xi1> to vector<255x1xi1>
    %96 = vector.broadcast %95 : vector<255x1xi1> to vector<255x16xi1>
    %97 = vector.broadcast %cst_41 : f32 to vector<255x16xf32>
    %98 = arith.select %96, %84, %97 : vector<255x16xi1>, vector<255x16xf32>
    %c0_42 = arith.constant 0 : index
    %c0_43 = arith.constant 0 : index
    %99 = vector.load %arg5[%c0_42, %c0_43] : memref<256x16xf32, #tpu.memory_space<vmem>>, vector<255x16xf32>
    %100 = arith.addf %99, %98 : vector<255x16xf32>
    %c0_44 = arith.constant 0 : index
    %c0_45 = arith.constant 0 : index
    %101 = vector.load %arg5[%c0_44, %c0_45] : memref<256x16xf32, #tpu.memory_space<vmem>>, vector<255x16xf32>
    tpu.vector_store %arg5[%c0_44, %c0_45], %100 {strides = array<i32>} : memref<256x16xf32, #tpu.memory_space<vmem>>, vector<255x16xf32>,
    %102 = vector.extract_strided_slice %3 {offsets = [15, 96], sizes = [241, 16], strides = [1, 1]} : vector<256x144xf32> to vector<241x16xf32>
    %103 = vector.extract_strided_slice %20 {offsets = [0, 0], sizes = [241, 1], strides = [1, 1]} : vector<256x1xi32> to vector<241x1xi32>
    %c-1_i32_46 = arith.constant -1 : i32
    %104 = vector.broadcast %c-1_i32_46 : i32 to vector<241x1xi32>
    %105 = arith.addi %103, %104 : vector<241x1xi32>
    %c0_i32_47 = arith.constant 0 : i32
    %106 = vector.broadcast %c0_i32_47 : i32 to vector<241x1xi32>
    %107 = arith.cmpi sge, %105, %106 : vector<241x1xi32>
    %c-1_i32_48 = arith.constant -1 : i32
    %108 = vector.broadcast %c-1_i32_48 : i32 to vector<241x1xi32>
    %109 = arith.addi %103, %108 : vector<241x1xi32>
    %c16_i32_49 = arith.constant 16 : i32
    %110 = vector.broadcast %c16_i32_49 : i32 to vector<241x1xi32>
    %111 = arith.cmpi slt, %109, %110 : vector<241x1xi32>
    %112 = arith.andi %107, %111 : vector<241x1xi1>
    %cst_50 = arith.constant 0.000000e+00 : f32
    %113 = vector.shape_cast %112 : vector<241x1xi1> to vector<241x1xi1>
    %114 = vector.broadcast %113 : vector<241x1xi1> to vector<241x16xi1>
    %115 = vector.broadcast %cst_50 : f32 to vector<241x16xf32>
    %116 = arith.select %114, %102, %115 : vector<241x16xi1>, vector<241x16xf32>
    %c0_51 = arith.constant 0 : index
    %c0_52 = arith.constant 0 : index
    %117 = vector.load %arg5[%c0_51, %c0_52] : memref<256x16xf32, #tpu.memory_space<vmem>>, vector<241x16xf32>
    %118 = arith.addf %117, %116 : vector<241x16xf32>
    %c0_53 = arith.constant 0 : index
    %c0_54 = arith.constant 0 : index
    %119 = vector.load %arg5[%c0_53, %c0_54] : memref<256x16xf32, #tpu.memory_space<vmem>>, vector<241x16xf32>
    tpu.vector_store %arg5[%c0_53, %c0_54], %118 {strides = array<i32>} : memref<256x16xf32, #tpu.memory_space<vmem>>, vector<241x16xf32>,
    %120 = vector.extract_strided_slice %3 {offsets = [16, 112], sizes = [240, 16], strides = [1, 1]} : vector<256x144xf32> to vector<240x16xf32>
    %c0_55 = arith.constant 0 : index
    %c0_56 = arith.constant 0 : index
    %121 = vector.load %arg5[%c0_55, %c0_56] : memref<256x16xf32, #tpu.memory_space<vmem>>, vector<240x16xf32>
    %122 = arith.addf %121, %120 : vector<240x16xf32>
    %c0_57 = arith.constant 0 : index
    %c0_58 = arith.constant 0 : index
    %123 = vector.load %arg5[%c0_57, %c0_58] : memref<256x16xf32, #tpu.memory_space<vmem>>, vector<240x16xf32>
    tpu.vector_store %arg5[%c0_57, %c0_58], %122 {strides = array<i32>} : memref<256x16xf32, #tpu.memory_space<vmem>>, vector<240x16xf32>,
    %124 = vector.extract_strided_slice %3 {offsets = [17, 128], sizes = [239, 16], strides = [1, 1]} : vector<256x144xf32> to vector<239x16xf32>
    %125 = vector.extract_strided_slice %20 {offsets = [0, 0], sizes = [239, 1], strides = [1, 1]} : vector<256x1xi32> to vector<239x1xi32>
    %c1_i32_59 = arith.constant 1 : i32
    %126 = vector.broadcast %c1_i32_59 : i32 to vector<239x1xi32>
    %127 = arith.addi %125, %126 : vector<239x1xi32>
    %c0_i32_60 = arith.constant 0 : i32
    %128 = vector.broadcast %c0_i32_60 : i32 to vector<239x1xi32>
    %129 = arith.cmpi sge, %127, %128 : vector<239x1xi32>
    %c1_i32_61 = arith.constant 1 : i32
    %130 = vector.broadcast %c1_i32_61 : i32 to vector<239x1xi32>
    %131 = arith.addi %125, %130 : vector<239x1xi32>
    %c16_i32_62 = arith.constant 16 : i32
    %132 = vector.broadcast %c16_i32_62 : i32 to vector<239x1xi32>
    %133 = arith.cmpi slt, %131, %132 : vector<239x1xi32>
    %134 = arith.andi %129, %133 : vector<239x1xi1>
    %cst_63 = arith.constant 0.000000e+00 : f32
    %135 = vector.shape_cast %134 : vector<239x1xi1> to vector<239x1xi1>
    %136 = vector.broadcast %135 : vector<239x1xi1> to vector<239x16xi1>
    %137 = vector.broadcast %cst_63 : f32 to vector<239x16xf32>
    %138 = arith.select %136, %124, %137 : vector<239x16xi1>, vector<239x16xf32>
    %c0_64 = arith.constant 0 : index
    %c0_65 = arith.constant 0 : index
    %139 = vector.load %arg5[%c0_64, %c0_65] : memref<256x16xf32, #tpu.memory_space<vmem>>, vector<239x16xf32>
    %140 = arith.addf %139, %138 : vector<239x16xf32>
    %c0_66 = arith.constant 0 : index
    %c0_67 = arith.constant 0 : index
    %141 = vector.load %arg5[%c0_66, %c0_67] : memref<256x16xf32, #tpu.memory_space<vmem>>, vector<239x16xf32>
    tpu.vector_store %arg5[%c0_66, %c0_67], %140 {strides = array<i32>} : memref<256x16xf32, #tpu.memory_space<vmem>>, vector<239x16xf32>,
    %c0_68 = arith.constant 0 : index
    %c0_69 = arith.constant 0 : index
    %142 = vector.load %arg5[%c0_68, %c0_69] : memref<256x16xf32, #tpu.memory_space<vmem>>, vector<256x16xf32>
    %c0_70 = arith.constant 0 : index
    %c0_71 = arith.constant 0 : index
    %c0_72 = arith.constant 0 : index
    %143 = vector.load %arg4[%c0_70, %c0_71, %c0_72] : memref<1x256x16xf32, #tpu.memory_space<vmem>>, vector<1x256x16xf32>
    %144 = vector.shape_cast %143 : vector<1x256x16xf32> to vector<256x16xf32>
    %145 = vector.shape_cast %142 : vector<256x16xf32> to vector<1x256x16xf32>
    tpu.vector_store %arg4[%c0_70, %c0_71, %c0_72], %145 {strides = array<i32>} : memref<1x256x16xf32, #tpu.memory_space<vmem>>, vector<1x256x16xf32>,
    return
  }
  func.func @transform_0(%arg0: i32) -> (i32, i32, i32) {
    %c0_i32 = arith.constant 0 : i32
    %c0_i32_0 = arith.constant 0 : i32
    %c0_i32_1 = arith.constant 0 : i32
    return %arg0, %c0_i32, %c0_i32_0 : i32, i32, i32
  }
  func.func @transform_1(%arg0: i32) -> (i32, i32) {
    %c0_i32 = arith.constant 0 : i32
    %c0_i32_0 = arith.constant 0 : i32
    %c0_i32_1 = arith.constant 0 : i32
    return %c0_i32, %c0_i32_0 : i32, i32
  }
  func.func @transform_2(%arg0: i32) -> (i32, i32) {
    %c0_i32 = arith.constant 0 : i32
    %c0_i32_0 = arith.constant 0 : i32
    %c0_i32_1 = arith.constant 0 : i32
    return %c0_i32, %c0_i32_0 : i32, i32
  }
  func.func @transform_3(%arg0: i32) -> (i32, i32, i32) {
    %c0_i32 = arith.constant 0 : i32
    %c0_i32_0 = arith.constant 0 : i32
    %c0_i32_1 = arith.constant 0 : i32
    return %arg0, %c0_i32, %c0_i32_0 : i32, i32, i32
  }
}

</mosaic_0001>

<llo_original>
// kernel: tpu_custom_call.1
$region0: #{tpu_custom_call.1}
  #allocation0 [shape = 'u32[]', space=smem, size = 0x4, offset = 0x4, fixed_abs, tag = 'smem constant byte address 0x4 - core index']
  #allocation1 [shape = 'u32[144,128]{1,0:T(1,128)}', space=vmem, size = 0x12000, scoped, tag = 'internal scratch']
  #allocation2 [shape = 'f32[256,16]{1,0:T(8,128)}', space=vmem, size = 0x20000, scoped, tag = 'scratch operand']
  %s0 = inlined_call_operand.vmem [shape: bf16[2,256,32], index: 0, kind: input, shape index: {}]
  %s1 = inlined_call_operand.vmem [shape: bf16[32,144], index: 1, kind: input, shape index: {}]
  %s2 = inlined_call_operand.vmem [shape: f32[1,16], index: 2, kind: input, shape index: {}]
  %s3 = inlined_call_operand.vmem [shape: f32[2,256,16], index: 3, kind: output, shape index: {}]
  %s4 = sld [smem:[#allocation0]]
  $region45: #{tpu_custom_call.1} parent=0
    _
  %s6 = ssub.s32 1, %s4
  %s7 = scalar_select 0, %s6, %s4
  loop: start=0, step=1, limit=4
  $region2: #{tpu_custom_call.1} parent=0 // loop_pre_header
    _
  $region3: #{tpu_custom_call.1} parent=0 // loop_header
    %s9 = sphi 0, %s13
    %p10 = scmp.ge.s32.totalorder %s9, 4
    %s19 = sphi 0, %s21
    %s22 = sphi 0, %s19
    %s23 = sphi 0, %s22
    %s39 = sphi 0, %s23
    %s43 = sphi 0, %s43
    %s45 = sphi 0, %s43
    %s46 = sphi 0, %s45
    %s60 = sphi 0, %s46
    %s64 = sphi 0, %s64
    %s66 = sphi 0, %s64
    %s67 = sphi 0, %s66
    %s81 = sphi 0, %s67
    %s87 = sphi 0, %s89
    %s90 = sphi 0, %s87
    %s91 = sphi 0, %s90
    %s107 = sphi 0, %s91
  $region4: #{tpu_custom_call.1} parent=0 // loop_header_branch
    %12 = sbr.rel (%p10) target = $region8
  $region5: #{tpu_custom_call.1} parent=0 // loop_body
    %s14 = ssub.s32 %s9, 1
    %s15 = ssub.s32 %s9, 2
    %s16 = sadd.s32 %s9, 1
    %s17 = ssub.s32 %s9, %s16
    %p18 = scmp.eq.s32.totalorder %s17, 0
    %s20 = sadd.s32 %s19, 1
    %s21 = scalar_select %p18, %s19, %s20
    %p24 = pneg %p18
    %p25 = scmp.eq.s32.totalorder %s9, 1
    %p26 = por %p24, %p25
    %p27 = scmp.ne.s32.totalorder %s19, %s22
    %p28 = scmp.eq.s32.totalorder %s9, 0
    %p29 = por %p27, %p28
    %p30 = scmp.ne.s32.totalorder %s19, %s22
    %p31 = scmp.eq.s32.totalorder %s14, 1
    %p32 = por %p30, %p31
    %p33 = scmp.ne.s32.totalorder %s22, %s23
    %p34 = scmp.eq.s32.totalorder %s14, 0
    %p35 = por %p33, %p34
    %p36 = scmp.ne.s32.totalorder %s22, %s23
    %p37 = scmp.eq.s32.totalorder %s15, 1
    %p38 = por %p36, %p37
    %p40 = scmp.ne.s32.totalorder %s23, %s39
    %p41 = scmp.eq.s32.totalorder %s15, 0
    %p42 = por %p40, %p41
    %s44 = sadd.s32 %s43, 1
    %p47 = scmp.eq.s32.totalorder %s9, 1
    %p48 = scmp.ne.s32.totalorder %s43, %s45
    %p49 = scmp.eq.s32.totalorder %s9, 0
    %p50 = por %p48, %p49
    %p51 = scmp.ne.s32.totalorder %s43, %s45
    %p52 = scmp.eq.s32.totalorder %s14, 1
    %p53 = por %p51, %p52
    %p54 = scmp.ne.s32.totalorder %s45, %s46
    %p55 = scmp.eq.s32.totalorder %s14, 0
    %p56 = por %p54, %p55
    %p57 = scmp.ne.s32.totalorder %s45, %s46
    %p58 = scmp.eq.s32.totalorder %s15, 1
    %p59 = por %p57, %p58
    %p61 = scmp.ne.s32.totalorder %s46, %s60
    %p62 = scmp.eq.s32.totalorder %s15, 0
    %p63 = por %p61, %p62
    %s65 = sadd.s32 %s64, 1
    %p68 = scmp.eq.s32.totalorder %s9, 1
    %p69 = scmp.ne.s32.totalorder %s64, %s66
    %p70 = scmp.eq.s32.totalorder %s9, 0
    %p71 = por %p69, %p70
    %p72 = scmp.ne.s32.totalorder %s64, %s66
    %p73 = scmp.eq.s32.totalorder %s14, 1
    %p74 = por %p72, %p73
    %p75 = scmp.ne.s32.totalorder %s66, %s67
    %p76 = scmp.eq.s32.totalorder %s14, 0
    %p77 = por %p75, %p76
    %p78 = scmp.ne.s32.totalorder %s66, %s67
    %p79 = scmp.eq.s32.totalorder %s15, 1
    %p80 = por %p78, %p79
    %p82 = scmp.ne.s32.totalorder %s67, %s81
    %p83 = scmp.eq.s32.totalorder %s15, 0
    %p84 = por %p82, %p83
    %s85 = ssub.s32 %s9, %s16
    %p86 = scmp.eq.s32.totalorder %s85, 0
    %s88 = sadd.s32 %s87, 1
    %s89 = scalar_select %p86, %s87, %s88
    %p92 = pneg %p86
    %p93 = scmp.eq.s32.totalorder %s9, 1
    %p94 = por %p92, %p93
    %p95 = scmp.ne.s32.totalorder %s87, %s90
    %p96 = scmp.eq.s32.totalorder %s9, 0
    %p97 = por %p95, %p96
    %p98 = scmp.ne.s32.totalorder %s87, %s90
    %p99 = scmp.eq.s32.totalorder %s14, 1
    %p100 = por %p98, %p99
    %p101 = scmp.ne.s32.totalorder %s90, %s91
    %p102 = scmp.eq.s32.totalorder %s14, 0
    %p103 = por %p101, %p102
    %p104 = scmp.ne.s32.totalorder %s90, %s91
    %p105 = scmp.eq.s32.totalorder %s15, 1
    %p106 = por %p104, %p105
    %p108 = scmp.ne.s32.totalorder %s91, %s107
    %p109 = scmp.eq.s32.totalorder %s15, 0
    %p110 = por %p108, %p109
    %p111 = scmp.le.s32.totalorder 1, %s9
    %p112 = scmp.lt.s32.totalorder %s9, 3
    %p113 = pnand %p111, %p112
    %p114 = pneg %p113
    // Predicated region
    $region9: #{tpu_custom_call.1} parent=5 // pred_check
      _
    $region10: #{tpu_custom_call.1} parent=5 // pred_check_branch
      %116 = sbr.rel (%p113) target = $region12
    $region11: #{tpu_custom_call.1} parent=5 // pred_region
      %s117 = ssub.s32 %s9, 1
      // Predicated region
      $region13: #{tpu_custom_call.1} parent=11 // pred_check
        %p118 = pneg %p56
      $region14: #{tpu_custom_call.1} parent=11 // pred_check_branch
        %120 = sbr.rel (%p118) target = $region16
      $region15: #{tpu_custom_call.1} parent=11 // pred_region
        _
      $region16: #{tpu_custom_call.1} parent=11 // pred_fallthru
        _
      // Predicated region
      $region17: #{tpu_custom_call.1} parent=11 // pred_check
        %p121 = pneg %p77
      $region18: #{tpu_custom_call.1} parent=11 // pred_check_branch
        %123 = sbr.rel (%p121) target = $region20
      $region19: #{tpu_custom_call.1} parent=11 // pred_region
        _
      $region20: #{tpu_custom_call.1} parent=11 // pred_fallthru
        _
    $region12: #{tpu_custom_call.1} parent=5 // pred_fallthru
      _
    %p124 = scmp.lt.s32.totalorder %s9, 2
    // Predicated region
    $region21: #{tpu_custom_call.1} parent=5 // pred_check
      %p125 = pneg %p124
    $region22: #{tpu_custom_call.1} parent=5 // pred_check_branch
      %127 = sbr.rel (%p125) target = $region24
    $region23: #{tpu_custom_call.1} parent=5 // pred_region
      // Predicated region
      $region25: #{tpu_custom_call.1} parent=23 // pred_check
        %p128 = pneg %p29
      $region26: #{tpu_custom_call.1} parent=23 // pred_check_branch
        %130 = sbr.rel (%p128) target = $region28
      $region27: #{tpu_custom_call.1} parent=23 // pred_region
        %p131 = scmp.lt.s32.totalorder %s9, 1
        %s132 = scalar_select %p131, %s9, 1
        %s133 = smul.addr %s132, 32
        %s134 = smul.addr %s133, 4
        %s135 = scalar_lea.vmem %s0, %s134
      $region28: #{tpu_custom_call.1} parent=23 // pred_fallthru
        _
    $region24: #{tpu_custom_call.1} parent=5 // pred_fallthru
      _
    %p136 = scmp.le.s32.totalorder 1, %s9
    %p137 = scmp.lt.s32.totalorder %s9, 3
    %p138 = pnand %p136, %p137
    %p139 = pneg %p138
    // Predicated region
    $region29: #{tpu_custom_call.1} parent=5 // pred_check
      _
    $region30: #{tpu_custom_call.1} parent=5 // pred_check_branch
      %141 = sbr.rel (%p138) target = $region32
    $region31: #{tpu_custom_call.1} parent=5 // pred_region
      %s142 = ssub.s32 %s9, 1
      %p143 = scmp.lt.s32.totalorder %s14, 1
      %s144 = scalar_select %p143, %s14, 1
      %s145 = smul.addr %s144, 32
      %s146 = smul.addr %s145, 4
      %s147 = scalar_lea.vmem %s0, %s146
      %p148 = pneg %p35
      %p149 = pneg %p32
      %p150 = pneg %p56
      %p151 = pneg %p53
      %p152 = pneg %p77
      %p153 = pneg %p74
      %p154 = pneg %p103
      %p155 = pneg %p100
      %p156 = scmp.lt.s32.totalorder %s14, 1
      %s157 = scalar_select %p156, %s14, 1
      %s158 = smul.addr %s157, 32
      %s159 = smul.addr %s158, 8
      %s160 = scalar_lea.vmem %s3, %s159
      %p161 = scmp.lt.s32.totalorder %s14, 1
      %s162 = scalar_select %p161, %s14, 1
      %s163 = smul.addr %s162, 32
      %s164 = smul.addr %s163, 4
      %s165 = scalar_lea.vmem %s0, %s164
      %p166 = scmp.lt.s32.totalorder %s14, 1
      %s167 = scalar_select %p166, %s14, 1
      %s168 = smul.addr %s167, 32
      %s169 = smul.addr %s168, 8
      %s170 = scalar_lea.vmem %s3, %s169
      %v172 = vld [vmem:[%s165] sm:$0xf]
      %v173 = vld [vmem:[%s165 + $0x4] sm:$0xf]
      %v174 = vld [vmem:[%s165 + $0x8] sm:$0xf]
      %v175 = vld [vmem:[%s165 + $0xc] sm:$0xf]
      %v176 = vld [vmem:[%s165 + $0x10] sm:$0xf]
      %v177 = vld [vmem:[%s165 + $0x14] sm:$0xf]
      %v178 = vld [vmem:[%s165 + $0x18] sm:$0xf]
      %v179 = vld [vmem:[%s165 + $0x1c] sm:$0xf]
      %v180 = vld [vmem:[%s165 + $0x20] sm:$0xf]
      %v181 = vld [vmem:[%s165 + $0x24] sm:$0xf]
      %v182 = vld [vmem:[%s165 + $0x28] sm:$0xf]
      %v183 = vld [vmem:[%s165 + $0x2c] sm:$0xf]
      %v184 = vld [vmem:[%s165 + $0x30] sm:$0xf]
      %v185 = vld [vmem:[%s165 + $0x34] sm:$0xf]
      %v186 = vld [vmem:[%s165 + $0x38] sm:$0xf]
      %v187 = vld [vmem:[%s165 + $0x3c] sm:$0xf]
      %v188 = vld [vmem:[%s165 + $0x40] sm:$0xf]
      %v189 = vld [vmem:[%s165 + $0x44] sm:$0xf]
      %v190 = vld [vmem:[%s165 + $0x48] sm:$0xf]
      %v191 = vld [vmem:[%s165 + $0x4c] sm:$0xf]
      %v192 = vld [vmem:[%s165 + $0x50] sm:$0xf]
      %v193 = vld [vmem:[%s165 + $0x54] sm:$0xf]
      %v194 = vld [vmem:[%s165 + $0x58] sm:$0xf]
      %v195 = vld [vmem:[%s165 + $0x5c] sm:$0xf]
      %v196 = vld [vmem:[%s165 + $0x60] sm:$0xf]
      %v197 = vld [vmem:[%s165 + $0x64] sm:$0xf]
      %v198 = vld [vmem:[%s165 + $0x68] sm:$0xf]
      %v199 = vld [vmem:[%s165 + $0x6c] sm:$0xf]
      %v200 = vld [vmem:[%s165 + $0x70] sm:$0xf]
      %v201 = vld [vmem:[%s165 + $0x74] sm:$0xf]
      %v202 = vld [vmem:[%s165 + $0x78] sm:$0xf]
      %v203 = vld [vmem:[%s165 + $0x7c] sm:$0xf]
      %v204 = vld [vmem:[%s1] sm:$0xff]
      %v205 = vld [vmem:[%s1 + $0x8] sm:$0xff]
      %v206 = vld [vmem:[%s1 + $0x10] sm:$0xff]
      %v207 = vld [vmem:[%s1 + $0x18] sm:$0xff]
      %v240 = vunpack.c.l.b16 %v172
      %v241 = vunpack.c.l.b16 %v173
      %v242 = vunpack.c.l.b16 %v174
      %v243 = vunpack.c.l.b16 %v175
      %v244 = vunpack.c.l.b16 %v176
      %v245 = vunpack.c.l.b16 %v177
      %v246 = vunpack.c.l.b16 %v178
      %v247 = vunpack.c.l.b16 %v179
      %v248 = vunpack.c.l.b16 %v180
      %v249 = vunpack.c.l.b16 %v181
      %v250 = vunpack.c.l.b16 %v182
      %v251 = vunpack.c.l.b16 %v183
      %v252 = vunpack.c.l.b16 %v184
      %v253 = vunpack.c.l.b16 %v185
      %v254 = vunpack.c.l.b16 %v186
      %v255 = vunpack.c.l.b16 %v187
      %v256 = vunpack.c.l.b16 %v188
      %v257 = vunpack.c.l.b16 %v189
      %v258 = vunpack.c.l.b16 %v190
      %v259 = vunpack.c.l.b16 %v191
      %v260 = vunpack.c.l.b16 %v192
      %v261 = vunpack.c.l.b16 %v193
      %v262 = vunpack.c.l.b16 %v194
      %v263 = vunpack.c.l.b16 %v195
      %v264 = vunpack.c.l.b16 %v196
      %v265 = vunpack.c.l.b16 %v197
      %v266 = vunpack.c.l.b16 %v198
      %v267 = vunpack.c.l.b16 %v199
      %v268 = vunpack.c.l.b16 %v200
      %v269 = vunpack.c.l.b16 %v201
      %v270 = vunpack.c.l.b16 %v202
      %v271 = vunpack.c.l.b16 %v203
      %v272 = vpack.c.b16 %v241, %v240
      %v273 = vpack.c.b16 %v243, %v242
      %v274 = vpack.c.b16 %v245, %v244
      %v275 = vpack.c.b16 %v247, %v246
      %v276 = vpack.c.b16 %v249, %v248
      %v277 = vpack.c.b16 %v251, %v250
      %v278 = vpack.c.b16 %v253, %v252
      %v279 = vpack.c.b16 %v255, %v254
      %v280 = vpack.c.b16 %v257, %v256
      %v281 = vpack.c.b16 %v259, %v258
      %v282 = vpack.c.b16 %v261, %v260
      %v283 = vpack.c.b16 %v263, %v262
      %v284 = vpack.c.b16 %v265, %v264
      %v285 = vpack.c.b16 %v267, %v266
      %v286 = vpack.c.b16 %v269, %v268
      %v287 = vpack.c.b16 %v271, %v270
      %v292 = vunpack.c.l.b16 %v204
      %v293 = vunpack.c.h.b16 %v204
      %v294 = vunpack.c.l.b16 %v205
      %v295 = vunpack.c.h.b16 %v205
      %v296 = vunpack.c.l.b16 %v206
      %v297 = vunpack.c.h.b16 %v206
      %v298 = vunpack.c.l.b16 %v207
      %v299 = vunpack.c.h.b16 %v207
      %v300 = vpack.c.b16 %v294, %v292
      %v301 = vpack.c.b16 %v295, %v293
      %v302 = vpack.c.b16 %v298, %v296
      %v303 = vpack.c.b16 %v299, %v297
      %vm308 = vcmask 261120
      %v310 = vsel %vm308, %v272, 0
      %v313 = vsel %vm308, %v273, 0
      %v316 = vsel %vm308, %v274, 0
      %v319 = vsel %vm308, %v275, 0
      %v322 = vsel %vm308, %v276, 0
      %v325 = vsel %vm308, %v277, 0
      %v328 = vsel %vm308, %v278, 0
      %v331 = vsel %vm308, %v279, 0
      %v334 = vsel %vm308, %v280, 0
      %v337 = vsel %vm308, %v281, 0
      %v340 = vsel %vm308, %v282, 0
      %v343 = vsel %vm308, %v283, 0
      %v346 = vsel %vm308, %v284, 0
      %v349 = vsel %vm308, %v285, 0
      %v352 = vsel %vm308, %v286, 0
      %v355 = vsel %vm308, %v287, 0
      %357 = vmatprep.subr.bf16.mxu0 %v301
      %358 = vmatpush1.bf16.msra.mxu0 %v300
      %359 = vmatprep.subr.bf16.mxu0 %v303
      %360 = vmatpush1.bf16.msra.mxu0 %v302
      %361 = vmatprep.subr.bf16.mxu0 0
      %362 = vmatpush1.bf16.msra.mxu0 0
      %363 = vmatprep.subr.bf16.mxu0 0
      %364 = vmatpush1.bf16.msra.mxu0 0
      %365 = vmatprep.subr.bf16.mxu0 0
      %366 = vmatpush1.bf16.msra.mxu0 0
      %367 = vmatprep.subr.bf16.mxu0 0
      %368 = vmatpush1.bf16.msra.mxu0 0
      %369 = vmatprep.subr.bf16.mxu0 0
      %370 = vmatpush1.bf16.msra.mxu0 0
      %371 = vmatprep.subr.bf16.mxu0 0
      %372 = vmatpush1.bf16.msra.mxu0 0
      %373 = vmatprep.subr.bf16.mxu0 0
      %374 = vmatpush1.bf16.msra.mxu0 0
      %375 = vmatprep.subr.bf16.mxu0 0
      %376 = vmatpush1.bf16.msra.mxu0 0
      %377 = vmatprep.subr.bf16.mxu0 0
      %378 = vmatpush1.bf16.msra.mxu0 0
      %379 = vmatprep.subr.bf16.mxu0 0
      %380 = vmatpush1.bf16.msra.mxu0 0
      %381 = vmatprep.subr.bf16.mxu0 0
      %382 = vmatpush1.bf16.msra.mxu0 0
      %383 = vmatprep.subr.bf16.mxu0 0
      %384 = vmatpush1.bf16.msra.mxu0 0
      %385 = vmatprep.subr.bf16.mxu0 0
      %386 = vmatpush1.bf16.msra.mxu0 0
      %387 = vmatprep.subr.bf16.mxu0 0
      %388 = vmatpush1.bf16.msra.mxu0 0
      %389 = vmatprep.mubr.bf16.mxu0 0
      %390 = vmatmul.mubr.bf16.gmra.mrb[0].mxu0 %v310
      %v391 = vpop.f32.mrb[0].mxu0
      %v392 = vadd.f32 0.0, %v391
      %v393 = vpop.f32.mrb[0].mxu0
      %v394 = vpop.f32.mrb[0].mxu0
      %v395 = vadd.f32 0.0, %v394
      %v396 = vpop.f32.mrb[0].mxu0
      %397 = vmatprep.mubr.bf16.mxu0 0
      %398 = vmatmul.mubr.bf16.gmra.mrb[0].mxu0 %v313
      %v399 = vpop.f32.mrb[0].mxu0
      %v400 = vadd.f32 0.0, %v399
      %v401 = vpop.f32.mrb[0].mxu0
      %v402 = vadd.f32 0.0, %v401
      %v403 = vpop.f32.mrb[0].mxu0
      %v404 = vadd.f32 0.0, %v403
      %v405 = vpop.f32.mrb[0].mxu0
      %v406 = vadd.f32 0.0, %v405
      %407 = vmatprep.mubr.bf16.mxu0 0
      %408 = vmatmul.mubr.bf16.gmra.mrb[0].mxu0 %v316
      %v409 = vpop.f32.mrb[0].mxu0
      %v410 = vadd.f32 0.0, %v409
      %v411 = vpop.f32.mrb[0].mxu0
      %v412 = vadd.f32 0.0, %v411
      %v413 = vpop.f32.mrb[0].mxu0
      %v414 = vadd.f32 0.0, %v413
      %v415 = vpop.f32.mrb[0].mxu0
      %v416 = vadd.f32 0.0, %v415
      %417 = vmatprep.mubr.bf16.mxu0 0
      %418 = vmatmul.mubr.bf16.gmra.mrb[0].mxu0 %v319
      %v419 = vpop.f32.mrb[0].mxu0
      %v420 = vadd.f32 0.0, %v419
      %v421 = vpop.f32.mrb[0].mxu0
      %v422 = vadd.f32 0.0, %v421
      %v423 = vpop.f32.mrb[0].mxu0
      %v424 = vadd.f32 0.0, %v423
      %v425 = vpop.f32.mrb[0].mxu0
      %v426 = vadd.f32 0.0, %v425
      %427 = vmatprep.mubr.bf16.mxu0 0
      %428 = vmatmul.mubr.bf16.gmra.mrb[0].mxu0 %v322
      %v429 = vpop.f32.mrb[0].mxu0
      %v430 = vadd.f32 0.0, %v429
      %v431 = vpop.f32.mrb[0].mxu0
      %v432 = vadd.f32 0.0, %v431
      %v433 = vpop.f32.mrb[0].mxu0
      %v434 = vadd.f32 0.0, %v433
      %v435 = vpop.f32.mrb[0].mxu0
      %v436 = vadd.f32 0.0, %v435
      %437 = vmatprep.mubr.bf16.mxu0 0
      %438 = vmatmul.mubr.bf16.gmra.mrb[0].mxu0 %v325
      %v439 = vpop.f32.mrb[0].mxu0
      %v440 = vadd.f32 0.0, %v439
      %v441 = vpop.f32.mrb[0].mxu0
      %v442 = vadd.f32 0.0, %v441
      %v443 = vpop.f32.mrb[0].mxu0
      %v444 = vadd.f32 0.0, %v443
      %v445 = vpop.f32.mrb[0].mxu0
      %v446 = vadd.f32 0.0, %v445
      %447 = vmatprep.mubr.bf16.mxu0 0
      %448 = vmatmul.mubr.bf16.gmra.mrb[0].mxu0 %v328
      %v449 = vpop.f32.mrb[0].mxu0
      %v450 = vadd.f32 0.0, %v449
      %v451 = vpop.f32.mrb[0].mxu0
      %v452 = vadd.f32 0.0, %v451
      %v453 = vpop.f32.mrb[0].mxu0
      %v454 = vadd.f32 0.0, %v453
      %v455 = vpop.f32.mrb[0].mxu0
      %v456 = vadd.f32 0.0, %v455
      %457 = vmatprep.mubr.bf16.mxu0 0
      %458 = vmatmul.mubr.bf16.gmra.mrb[0].mxu0 %v331
      %v459 = vpop.f32.mrb[0].mxu0
      %v460 = vadd.f32 0.0, %v459
      %v461 = vpop.f32.mrb[0].mxu0
      %v462 = vadd.f32 0.0, %v461
      %v463 = vpop.f32.mrb[0].mxu0
      %v464 = vadd.f32 0.0, %v463
      %v465 = vpop.f32.mrb[0].mxu0
      %v466 = vadd.f32 0.0, %v465
      %467 = vmatprep.mubr.bf16.mxu0 0
      %468 = vmatmul.mubr.bf16.gmra.mrb[0].mxu0 %v334
      %v469 = vpop.f32.mrb[0].mxu0
      %v470 = vadd.f32 0.0, %v469
      %v471 = vpop.f32.mrb[0].mxu0
      %v472 = vadd.f32 0.0, %v471
      %v473 = vpop.f32.mrb[0].mxu0
      %v474 = vadd.f32 0.0, %v473
      %v475 = vpop.f32.mrb[0].mxu0
      %v476 = vadd.f32 0.0, %v475
      %477 = vmatprep.mubr.bf16.mxu0 0
      %478 = vmatmul.mubr.bf16.gmra.mrb[0].mxu0 %v337
      %v479 = vpop.f32.mrb[0].mxu0
      %v480 = vadd.f32 0.0, %v479
      %v481 = vpop.f32.mrb[0].mxu0
      %v482 = vadd.f32 0.0, %v481
      %v483 = vpop.f32.mrb[0].mxu0
      %v484 = vadd.f32 0.0, %v483
      %v485 = vpop.f32.mrb[0].mxu0
      %v486 = vadd.f32 0.0, %v485
      %487 = vmatprep.mubr.bf16.mxu0 0
      %488 = vmatmul.mubr.bf16.gmra.mrb[0].mxu0 %v340
      %v489 = vpop.f32.mrb[0].mxu0
      %v490 = vadd.f32 0.0, %v489
      %v491 = vpop.f32.mrb[0].mxu0
      %v492 = vadd.f32 0.0, %v491
      %v493 = vpop.f32.mrb[0].mxu0
      %v494 = vadd.f32 0.0, %v493
      %v495 = vpop.f32.mrb[0].mxu0
      %v496 = vadd.f32 0.0, %v495
      %497 = vmatprep.mubr.bf16.mxu0 0
      %498 = vmatmul.mubr.bf16.gmra.mrb[0].mxu0 %v343
      %v499 = vpop.f32.mrb[0].mxu0
      %v500 = vadd.f32 0.0, %v499
      %v501 = vpop.f32.mrb[0].mxu0
      %v502 = vadd.f32 0.0, %v501
      %v503 = vpop.f32.mrb[0].mxu0
      %v504 = vadd.f32 0.0, %v503
      %v505 = vpop.f32.mrb[0].mxu0
      %v506 = vadd.f32 0.0, %v505
      %507 = vmatprep.mubr.bf16.mxu0 0
      %508 = vmatmul.mubr.bf16.gmra.mrb[0].mxu0 %v346
      %v509 = vpop.f32.mrb[0].mxu0
      %v510 = vadd.f32 0.0, %v509
      %v511 = vpop.f32.mrb[0].mxu0
      %v512 = vadd.f32 0.0, %v511
      %v513 = vpop.f32.mrb[0].mxu0
      %v514 = vadd.f32 0.0, %v513
      %v515 = vpop.f32.mrb[0].mxu0
      %v516 = vadd.f32 0.0, %v515
      %517 = vmatprep.mubr.bf16.mxu0 0
      %518 = vmatmul.mubr.bf16.gmra.mrb[0].mxu0 %v349
      %v519 = vpop.f32.mrb[0].mxu0
      %v520 = vadd.f32 0.0, %v519
      %v521 = vpop.f32.mrb[0].mxu0
      %v522 = vadd.f32 0.0, %v521
      %v523 = vpop.f32.mrb[0].mxu0
      %v524 = vadd.f32 0.0, %v523
      %v525 = vpop.f32.mrb[0].mxu0
      %v526 = vadd.f32 0.0, %v525
      %527 = vmatprep.mubr.bf16.mxu0 0
      %528 = vmatmul.mubr.bf16.gmra.mrb[0].mxu0 %v352
      %v529 = vpop.f32.mrb[0].mxu0
      %v530 = vadd.f32 0.0, %v529
      %v531 = vpop.f32.mrb[0].mxu0
      %v532 = vadd.f32 0.0, %v531
      %v533 = vpop.f32.mrb[0].mxu0
      %v534 = vadd.f32 0.0, %v533
      %v535 = vpop.f32.mrb[0].mxu0
      %v536 = vadd.f32 0.0, %v535
      %537 = vmatprep.mubr.bf16.mxu0 0
      %538 = vmatmul.mubr.bf16.gmra.mrb[0].mxu0 %v355
      %v539 = vpop.f32.mrb[0].mxu0
      %v540 = vadd.f32 0.0, %v539
      %v541 = vpop.f32.mrb[0].mxu0
      %v542 = vadd.f32 0.0, %v541
      %v543 = vpop.f32.mrb[0].mxu0
      %v544 = vadd.f32 0.0, %v543
      %v545 = vpop.f32.mrb[0].mxu0
      %v546 = vadd.f32 0.0, %v545
      %547 = vdwg.mxu0
      %v548 = vlaneseq
      %v549 = vshrl.u32 %v548, 7
      %v550 = vadd.s32 %v549, 8
      %v551 = vadd.s32 %v549, 16
      %v552 = vadd.s32 %v549, 24
      %v553 = vadd.s32 %v549, 32
      %v554 = vadd.s32 %v549, 40
      %v555 = vadd.s32 %v549, 48
      %v556 = vadd.s32 %v549, 56
      %v557 = vadd.s32 %v549, 64
      %v558 = vadd.s32 %v549, 72
      %v559 = vadd.s32 %v549, 80
      %v560 = vadd.s32 %v549, 88
      %v561 = vadd.s32 %v549, 96
      %v562 = vadd.s32 %v549, 104
      %v563 = vadd.s32 %v549, 112
      %v564 = vadd.s32 %v549, 120
      %v565 = vadd.s32 %v549, 128
      %v566 = vadd.s32 %v549, 136
      %v567 = vadd.s32 %v549, 144
      %v568 = vadd.s32 %v549, 152
      %v569 = vadd.s32 %v549, 160
      %v570 = vadd.s32 %v549, 168
      %v571 = vadd.s32 %v549, 176
      %v572 = vadd.s32 %v549, 184
      %v573 = vadd.s32 %v549, 192
      %v574 = vadd.s32 %v549, 200
      %v575 = vadd.s32 %v549, 208
      %v576 = vadd.s32 %v549, 216
      %v577 = vadd.s32 %v549, 224
      %v578 = vadd.s32 %v549, 232
      %v579 = vadd.s32 %v549, 240
      %v580 = vadd.s32 %v549, 248
      %vm581 = vcmp.lt.s32.totalorder %v549, 0
      %v582 = vsub.s32 0, %v549
      %v583 = vsel %vm581, %v582, %v549
      %v584 = vshrl.u32 %v583, 4
      %v585 = vand.u32 %v583, 15
      %v586 = vsub.s32 0, %v585
      %v587 = vsel %vm581, %v586, %v585
      %vm588 = vcmp.lt.s32.totalorder %v550, 0
      %v589 = vsub.s32 0, %v550
      %v590 = vsel %vm588, %v589, %v550
      %v591 = vshrl.u32 %v590, 4
      %v592 = vand.u32 %v590, 15
      %v593 = vsub.s32 0, %v592
      %v594 = vsel %vm588, %v593, %v592
      %vm595 = vcmp.lt.s32.totalorder %v551, 0
      %v596 = vsub.s32 0, %v551
      %v597 = vsel %vm595, %v596, %v551
      %v598 = vshrl.u32 %v597, 4
      %v599 = vand.u32 %v597, 15
      %v600 = vsub.s32 0, %v599
      %v601 = vsel %vm595, %v600, %v599
      %vm602 = vcmp.lt.s32.totalorder %v552, 0
      %v603 = vsub.s32 0, %v552
      %v604 = vsel %vm602, %v603, %v552
      %v605 = vshrl.u32 %v604, 4
      %v606 = vand.u32 %v604, 15
      %v607 = vsub.s32 0, %v606
      %v608 = vsel %vm602, %v607, %v606
      %vm609 = vcmp.lt.s32.totalorder %v553, 0
      %v610 = vsub.s32 0, %v553
      %v611 = vsel %vm609, %v610, %v553
      %v612 = vshrl.u32 %v611, 4
      %v613 = vand.u32 %v611, 15
      %v614 = vsub.s32 0, %v613
      %v615 = vsel %vm609, %v614, %v613
      %vm616 = vcmp.lt.s32.totalorder %v554, 0
      %v617 = vsub.s32 0, %v554
      %v618 = vsel %vm616, %v617, %v554
      %v619 = vshrl.u32 %v618, 4
      %v620 = vand.u32 %v618, 15
      %v621 = vsub.s32 0, %v620
      %v622 = vsel %vm616, %v621, %v620
      %vm623 = vcmp.lt.s32.totalorder %v555, 0
      %v624 = vsub.s32 0, %v555
      %v625 = vsel %vm623, %v624, %v555
      %v626 = vshrl.u32 %v625, 4
      %v627 = vand.u32 %v625, 15
      %v628 = vsub.s32 0, %v627
      %v629 = vsel %vm623, %v628, %v627
      %vm630 = vcmp.lt.s32.totalorder %v556, 0
      %v631 = vsub.s32 0, %v556
      %v632 = vsel %vm630, %v631, %v556
      %v633 = vshrl.u32 %v632, 4
      %v634 = vand.u32 %v632, 15
      %v635 = vsub.s32 0, %v634
      %v636 = vsel %vm630, %v635, %v634
      %vm637 = vcmp.lt.s32.totalorder %v557, 0
      %v638 = vsub.s32 0, %v557
      %v639 = vsel %vm637, %v638, %v557
      %v640 = vshrl.u32 %v639, 4
      %v641 = vand.u32 %v639, 15
      %v642 = vsub.s32 0, %v641
      %v643 = vsel %vm637, %v642, %v641
      %vm644 = vcmp.lt.s32.totalorder %v558, 0
      %v645 = vsub.s32 0, %v558
      %v646 = vsel %vm644, %v645, %v558
      %v647 = vshrl.u32 %v646, 4
      %v648 = vand.u32 %v646, 15
      %v649 = vsub.s32 0, %v648
      %v650 = vsel %vm644, %v649, %v648
      %vm651 = vcmp.lt.s32.totalorder %v559, 0
      %v652 = vsub.s32 0, %v559
      %v653 = vsel %vm651, %v652, %v559
      %v654 = vshrl.u32 %v653, 4
      %v655 = vand.u32 %v653, 15
      %v656 = vsub.s32 0, %v655
      %v657 = vsel %vm651, %v656, %v655
      %vm658 = vcmp.lt.s32.totalorder %v560, 0
      %v659 = vsub.s32 0, %v560
      %v660 = vsel %vm658, %v659, %v560
      %v661 = vshrl.u32 %v660, 4
      %v662 = vand.u32 %v660, 15
      %v663 = vsub.s32 0, %v662
      %v664 = vsel %vm658, %v663, %v662
      %vm665 = vcmp.lt.s32.totalorder %v561, 0
      %v666 = vsub.s32 0, %v561
      %v667 = vsel %vm665, %v666, %v561
      %v668 = vshrl.u32 %v667, 4
      %v669 = vand.u32 %v667, 15
      %v670 = vsub.s32 0, %v669
      %v671 = vsel %vm665, %v670, %v669
      %vm672 = vcmp.lt.s32.totalorder %v562, 0
      %v673 = vsub.s32 0, %v562
      %v674 = vsel %vm672, %v673, %v562
      %v675 = vshrl.u32 %v674, 4
      %v676 = vand.u32 %v674, 15
      %v677 = vsub.s32 0, %v676
      %v678 = vsel %vm672, %v677, %v676
      %vm679 = vcmp.lt.s32.totalorder %v563, 0
      %v680 = vsub.s32 0, %v563
      %v681 = vsel %vm679, %v680, %v563
      %v682 = vshrl.u32 %v681, 4
      %v683 = vand.u32 %v681, 15
      %v684 = vsub.s32 0, %v683
      %v685 = vsel %vm679, %v684, %v683
      %vm686 = vcmp.lt.s32.totalorder %v564, 0
      %v687 = vsub.s32 0, %v564
      %v688 = vsel %vm686, %v687, %v564
      %v689 = vshrl.u32 %v688, 4
      %v690 = vand.u32 %v688, 15
      %v691 = vsub.s32 0, %v690
      %v692 = vsel %vm686, %v691, %v690
      %vm693 = vcmp.lt.s32.totalorder %v565, 0
      %v694 = vsub.s32 0, %v565
      %v695 = vsel %vm693, %v694, %v565
      %v696 = vshrl.u32 %v695, 4
      %v697 = vand.u32 %v695, 15
      %v698 = vsub.s32 0, %v697
      %v699 = vsel %vm693, %v698, %v697
      %vm700 = vcmp.lt.s32.totalorder %v566, 0
      %v701 = vsub.s32 0, %v566
      %v702 = vsel %vm700, %v701, %v566
      %v703 = vshrl.u32 %v702, 4
      %v704 = vand.u32 %v702, 15
      %v705 = vsub.s32 0, %v704
      %v706 = vsel %vm700, %v705, %v704
      %vm707 = vcmp.lt.s32.totalorder %v567, 0
      %v708 = vsub.s32 0, %v567
      %v709 = vsel %vm707, %v708, %v567
      %v710 = vshrl.u32 %v709, 4
      %v711 = vand.u32 %v709, 15
      %v712 = vsub.s32 0, %v711
      %v713 = vsel %vm707, %v712, %v711
      %vm714 = vcmp.lt.s32.totalorder %v568, 0
      %v715 = vsub.s32 0, %v568
      %v716 = vsel %vm714, %v715, %v568
      %v717 = vshrl.u32 %v716, 4
      %v718 = vand.u32 %v716, 15
      %v719 = vsub.s32 0, %v718
      %v720 = vsel %vm714, %v719, %v718
      %vm721 = vcmp.lt.s32.totalorder %v569, 0
      %v722 = vsub.s32 0, %v569
      %v723 = vsel %vm721, %v722, %v569
      %v724 = vshrl.u32 %v723, 4
      %v725 = vand.u32 %v723, 15
      %v726 = vsub.s32 0, %v725
      %v727 = vsel %vm721, %v726, %v725
      %vm728 = vcmp.lt.s32.totalorder %v570, 0
      %v729 = vsub.s32 0, %v570
      %v730 = vsel %vm728, %v729, %v570
      %v731 = vshrl.u32 %v730, 4
      %v732 = vand.u32 %v730, 15
      %v733 = vsub.s32 0, %v732
      %v734 = vsel %vm728, %v733, %v732
      %vm735 = vcmp.lt.s32.totalorder %v571, 0
      %v736 = vsub.s32 0, %v571
      %v737 = vsel %vm735, %v736, %v571
      %v738 = vshrl.u32 %v737, 4
      %v739 = vand.u32 %v737, 15
      %v740 = vsub.s32 0, %v739
      %v741 = vsel %vm735, %v740, %v739
      %vm742 = vcmp.lt.s32.totalorder %v572, 0
      %v743 = vsub.s32 0, %v572
      %v744 = vsel %vm742, %v743, %v572
      %v745 = vshrl.u32 %v744, 4
      %v746 = vand.u32 %v744, 15
      %v747 = vsub.s32 0, %v746
      %v748 = vsel %vm742, %v747, %v746
      %vm749 = vcmp.lt.s32.totalorder %v573, 0
      %v750 = vsub.s32 0, %v573
      %v751 = vsel %vm749, %v750, %v573
      %v752 = vshrl.u32 %v751, 4
      %v753 = vand.u32 %v751, 15
      %v754 = vsub.s32 0, %v753
      %v755 = vsel %vm749, %v754, %v753
      %vm756 = vcmp.lt.s32.totalorder %v574, 0
      %v757 = vsub.s32 0, %v574
      %v758 = vsel %vm756, %v757, %v574
      %v759 = vshrl.u32 %v758, 4
      %v760 = vand.u32 %v758, 15
      %v761 = vsub.s32 0, %v760
      %v762 = vsel %vm756, %v761, %v760
      %vm763 = vcmp.lt.s32.totalorder %v575, 0
      %v764 = vsub.s32 0, %v575
      %v765 = vsel %vm763, %v764, %v575
      %v766 = vshrl.u32 %v765, 4
      %v767 = vand.u32 %v765, 15
      %v768 = vsub.s32 0, %v767
      %v769 = vsel %vm763, %v768, %v767
      %vm770 = vcmp.lt.s32.totalorder %v576, 0
      %v771 = vsub.s32 0, %v576
      %v772 = vsel %vm770, %v771, %v576
      %v773 = vshrl.u32 %v772, 4
      %v774 = vand.u32 %v772, 15
      %v775 = vsub.s32 0, %v774
      %v776 = vsel %vm770, %v775, %v774
      %vm777 = vcmp.lt.s32.totalorder %v577, 0
      %v778 = vsub.s32 0, %v577
      %v779 = vsel %vm777, %v778, %v577
      %v780 = vshrl.u32 %v779, 4
      %v781 = vand.u32 %v779, 15
      %v782 = vsub.s32 0, %v781
      %v783 = vsel %vm777, %v782, %v781
      %vm784 = vcmp.lt.s32.totalorder %v578, 0
      %v785 = vsub.s32 0, %v578
      %v786 = vsel %vm784, %v785, %v578
      %v787 = vshrl.u32 %v786, 4
      %v788 = vand.u32 %v786, 15
      %v789 = vsub.s32 0, %v788
      %v790 = vsel %vm784, %v789, %v788
      %vm791 = vcmp.lt.s32.totalorder %v579, 0
      %v792 = vsub.s32 0, %v579
      %v793 = vsel %vm791, %v792, %v579
      %v794 = vshrl.u32 %v793, 4
      %v795 = vand.u32 %v793, 15
      %v796 = vsub.s32 0, %v795
      %v797 = vsel %vm791, %v796, %v795
      %vm798 = vcmp.lt.s32.totalorder %v580, 0
      %v799 = vsub.s32 0, %v580
      %v800 = vsel %vm798, %v799, %v580
      %v801 = vshrl.u32 %v800, 4
      %v802 = vand.u32 %v800, 15
      %v803 = vsub.s32 0, %v802
      %v804 = vsel %vm798, %v803, %v802
      %vm805 = vcmp.ne.s32.totalorder %v587, 0
      %vm806 = vcmp.ne.s32.totalorder %v594, 0
      %vm807 = vcmp.ne.s32.totalorder %v601, 0
      %vm808 = vcmp.ne.s32.totalorder %v608, 0
      %vm809 = vcmp.ne.s32.totalorder %v615, 0
      %vm810 = vcmp.ne.s32.totalorder %v622, 0
      %vm811 = vcmp.ne.s32.totalorder %v629, 0
      %vm812 = vcmp.ne.s32.totalorder %v636, 0
      %vm813 = vcmp.ne.s32.totalorder %v643, 0
      %vm814 = vcmp.ne.s32.totalorder %v650, 0
      %vm815 = vcmp.ne.s32.totalorder %v657, 0
      %vm816 = vcmp.ne.s32.totalorder %v664, 0
      %vm817 = vcmp.ne.s32.totalorder %v671, 0
      %vm818 = vcmp.ne.s32.totalorder %v678, 0
      %vm819 = vcmp.ne.s32.totalorder %v685, 0
      %vm820 = vcmp.ne.s32.totalorder %v692, 0
      %vm821 = vcmp.ne.s32.totalorder %v699, 0
      %vm822 = vcmp.ne.s32.totalorder %v706, 0
      %vm823 = vcmp.ne.s32.totalorder %v713, 0
      %vm824 = vcmp.ne.s32.totalorder %v720, 0
      %vm825 = vcmp.ne.s32.totalorder %v727, 0
      %vm826 = vcmp.ne.s32.totalorder %v734, 0
      %vm827 = vcmp.ne.s32.totalorder %v741, 0
      %vm828 = vcmp.ne.s32.totalorder %v748, 0
      %vm829 = vcmp.ne.s32.totalorder %v755, 0
      %vm830 = vcmp.ne.s32.totalorder %v762, 0
      %vm831 = vcmp.ne.s32.totalorder %v769, 0
      %vm832 = vcmp.ne.s32.totalorder %v776, 0
      %vm833 = vcmp.ne.s32.totalorder %v783, 0
      %vm834 = vcmp.ne.s32.totalorder %v790, 0
      %vm835 = vcmp.ne.s32.totalorder %v797, 0
      %vm836 = vcmp.ne.s32.totalorder %v804, 0
      %vm837 = vcmp.lt.s32.totalorder %v587, 0
      %vm838 = vcmp.lt.s32.totalorder %v594, 0
      %vm839 = vcmp.lt.s32.totalorder %v601, 0
      %vm840 = vcmp.lt.s32.totalorder %v608, 0
      %vm841 = vcmp.lt.s32.totalorder %v615, 0
      %vm842 = vcmp.lt.s32.totalorder %v622, 0
      %vm843 = vcmp.lt.s32.totalorder %v629, 0
      %vm844 = vcmp.lt.s32.totalorder %v636, 0
      %vm845 = vcmp.lt.s32.totalorder %v643, 0
      %vm846 = vcmp.lt.s32.totalorder %v650, 0
      %vm847 = vcmp.lt.s32.totalorder %v657, 0
      %vm848 = vcmp.lt.s32.totalorder %v664, 0
      %vm849 = vcmp.lt.s32.totalorder %v671, 0
      %vm850 = vcmp.lt.s32.totalorder %v678, 0
      %vm851 = vcmp.lt.s32.totalorder %v685, 0
      %vm852 = vcmp.lt.s32.totalorder %v692, 0
      %vm853 = vcmp.lt.s32.totalorder %v699, 0
      %vm854 = vcmp.lt.s32.totalorder %v706, 0
      %vm855 = vcmp.lt.s32.totalorder %v713, 0
      %vm856 = vcmp.lt.s32.totalorder %v720, 0
      %vm857 = vcmp.lt.s32.totalorder %v727, 0
      %vm858 = vcmp.lt.s32.totalorder %v734, 0
      %vm859 = vcmp.lt.s32.totalorder %v741, 0
      %vm860 = vcmp.lt.s32.totalorder %v748, 0
      %vm861 = vcmp.lt.s32.totalorder %v755, 0
      %vm862 = vcmp.lt.s32.totalorder %v762, 0
      %vm863 = vcmp.lt.s32.totalorder %v769, 0
      %vm864 = vcmp.lt.s32.totalorder %v776, 0
      %vm865 = vcmp.lt.s32.totalorder %v783, 0
      %vm866 = vcmp.lt.s32.totalorder %v790, 0
      %vm867 = vcmp.lt.s32.totalorder %v797, 0
      %vm868 = vcmp.lt.s32.totalorder %v804, 0
      %vm869 = vmand %vm837, %vm805
      %vm870 = vmand %vm838, %vm806
      %vm871 = vmand %vm839, %vm807
      %vm872 = vmand %vm840, %vm808
      %vm873 = vmand %vm841, %vm809
      %vm874 = vmand %vm842, %vm810
      %vm875 = vmand %vm843, %vm811
      %vm876 = vmand %vm844, %vm812
      %vm877 = vmand %vm845, %vm813
      %vm878 = vmand %vm846, %vm814
      %vm879 = vmand %vm847, %vm815
      %vm880 = vmand %vm848, %vm816
      %vm881 = vmand %vm849, %vm817
      %vm882 = vmand %vm850, %vm818
      %vm883 = vmand %vm851, %vm819
      %vm884 = vmand %vm852, %vm820
      %vm885 = vmand %vm853, %vm821
      %vm886 = vmand %vm854, %vm822
      %vm887 = vmand %vm855, %vm823
      %vm888 = vmand %vm856, %vm824
      %vm889 = vmand %vm857, %vm825
      %vm890 = vmand %vm858, %vm826
      %vm891 = vmand %vm859, %vm827
      %vm892 = vmand %vm860, %vm828
      %vm893 = vmand %vm861, %vm829
      %vm894 = vmand %vm862, %vm830
      %vm895 = vmand %vm863, %vm831
      %vm896 = vmand %vm864, %vm832
      %vm897 = vmand %vm865, %vm833
      %vm898 = vmand %vm866, %vm834
      %vm899 = vmand %vm867, %vm835
      %vm900 = vmand %vm868, %vm836
      %v901 = vadd.s32 %v587, 16
      %v902 = vadd.s32 %v594, 16
      %v903 = vadd.s32 %v601, 16
      %v904 = vadd.s32 %v608, 16
      %v905 = vadd.s32 %v615, 16
      %v906 = vadd.s32 %v622, 16
      %v907 = vadd.s32 %v629, 16
      %v908 = vadd.s32 %v636, 16
      %v909 = vadd.s32 %v643, 16
      %v910 = vadd.s32 %v650, 16
      %v911 = vadd.s32 %v657, 16
      %v912 = vadd.s32 %v664, 16
      %v913 = vadd.s32 %v671, 16
      %v914 = vadd.s32 %v678, 16
      %v915 = vadd.s32 %v685, 16
      %v916 = vadd.s32 %v692, 16
      %v917 = vadd.s32 %v699, 16
      %v918 = vadd.s32 %v706, 16
      %v919 = vadd.s32 %v713, 16
      %v920 = vadd.s32 %v720, 16
      %v921 = vadd.s32 %v727, 16
      %v922 = vadd.s32 %v734, 16
      %v923 = vadd.s32 %v741, 16
      %v924 = vadd.s32 %v748, 16
      %v925 = vadd.s32 %v755, 16
      %v926 = vadd.s32 %v762, 16
      %v927 = vadd.s32 %v769, 16
      %v928 = vadd.s32 %v776, 16
      %v929 = vadd.s32 %v783, 16
      %v930 = vadd.s32 %v790, 16
      %v931 = vadd.s32 %v797, 16
      %v932 = vadd.s32 %v804, 16
      %v933 = vsel %vm869, %v901, %v587
      %v934 = vsel %vm870, %v902, %v594
      %v935 = vsel %vm871, %v903, %v601
      %v936 = vsel %vm872, %v904, %v608
      %v937 = vsel %vm873, %v905, %v615
      %v938 = vsel %vm874, %v906, %v622
      %v939 = vsel %vm875, %v907, %v629
      %v940 = vsel %vm876, %v908, %v636
      %v941 = vsel %vm877, %v909, %v643
      %v942 = vsel %vm878, %v910, %v650
      %v943 = vsel %vm879, %v911, %v657
      %v944 = vsel %vm880, %v912, %v664
      %v945 = vsel %vm881, %v913, %v671
      %v946 = vsel %vm882, %v914, %v678
      %v947 = vsel %vm883, %v915, %v685
      %v948 = vsel %vm884, %v916, %v692
      %v949 = vsel %vm885, %v917, %v699
      %v950 = vsel %vm886, %v918, %v706
      %v951 = vsel %vm887, %v919, %v713
      %v952 = vsel %vm888, %v920, %v720
      %v953 = vsel %vm889, %v921, %v727
      %v954 = vsel %vm890, %v922, %v734
      %v955 = vsel %vm891, %v923, %v741
      %v956 = vsel %vm892, %v924, %v748
      %v957 = vsel %vm893, %v925, %v755
      %v958 = vsel %vm894, %v926, %v762
      %v959 = vsel %vm895, %v927, %v769
      %v960 = vsel %vm896, %v928, %v776
      %v961 = vsel %vm897, %v929, %v783
      %v962 = vsel %vm898, %v930, %v790
      %v963 = vsel %vm899, %v931, %v797
      %v964 = vsel %vm900, %v932, %v804
      %v965 = vld [vmem:[%s2] sm:$0x1]
      %v967 = vlaneseq
      %v968 = vshrl.u32 %v967, 7
      %v969 = vsub.s32 0, %v968
      %v970 = vrot.slane %v965, %v969
      %971 = vrot.lane.b32.xlu0 %v970, 64
      %v972 = vpop.permute.xlu0 %971
      %v974 = vadd.f32 %v392, %v972
      %v975 = vadd.f32 %v395, %v972
      %v976 = vadd.f32 %v400, %v972
      %v977 = vadd.f32 %v404, %v972
      %v978 = vadd.f32 %v410, %v972
      %v979 = vadd.f32 %v414, %v972
      %v980 = vadd.f32 %v420, %v972
      %v981 = vadd.f32 %v424, %v972
      %v982 = vadd.f32 %v430, %v972
      %v983 = vadd.f32 %v434, %v972
      %v984 = vadd.f32 %v440, %v972
      %v985 = vadd.f32 %v444, %v972
      %v986 = vadd.f32 %v450, %v972
      %v987 = vadd.f32 %v454, %v972
      %v988 = vadd.f32 %v460, %v972
      %v989 = vadd.f32 %v464, %v972
      %v990 = vadd.f32 %v470, %v972
      %v991 = vadd.f32 %v474, %v972
      %v992 = vadd.f32 %v480, %v972
      %v993 = vadd.f32 %v484, %v972
      %v994 = vadd.f32 %v490, %v972
      %v995 = vadd.f32 %v494, %v972
      %v996 = vadd.f32 %v500, %v972
      %v997 = vadd.f32 %v504, %v972
      %v998 = vadd.f32 %v510, %v972
      %v999 = vadd.f32 %v514, %v972
      %v1000 = vadd.f32 %v520, %v972
      %v1001 = vadd.f32 %v524, %v972
      %v1002 = vadd.f32 %v530, %v972
      %v1003 = vadd.f32 %v534, %v972
      %v1004 = vadd.f32 %v540, %v972
      %v1005 = vadd.f32 %v544, %v972
      %1038 = vrot.lane.b32.xlu0 %v974, 64
      %v1039 = vpop.permute.xlu0 %1038
      %1040 = vrot.lane.b32.xlu0 %v975, 64
      %v1041 = vpop.permute.xlu0 %1040
      %1042 = vrot.lane.b32.xlu0 %v976, 64
      %v1043 = vpop.permute.xlu0 %1042
      %1044 = vrot.lane.b32.xlu0 %v977, 64
      %v1045 = vpop.permute.xlu0 %1044
      %1046 = vrot.lane.b32.xlu0 %v978, 64
      %v1047 = vpop.permute.xlu0 %1046
      %1048 = vrot.lane.b32.xlu0 %v979, 64
      %v1049 = vpop.permute.xlu0 %1048
      %1050 = vrot.lane.b32.xlu0 %v980, 64
      %v1051 = vpop.permute.xlu0 %1050
      %1052 = vrot.lane.b32.xlu0 %v981, 64
      %v1053 = vpop.permute.xlu0 %1052
      %1054 = vrot.lane.b32.xlu0 %v982, 64
      %v1055 = vpop.permute.xlu0 %1054
      %1056 = vrot.lane.b32.xlu0 %v983, 64
      %v1057 = vpop.permute.xlu0 %1056
      %1058 = vrot.lane.b32.xlu0 %v984, 64
      %v1059 = vpop.permute.xlu0 %1058
      %1060 = vrot.lane.b32.xlu0 %v985, 64
      %v1061 = vpop.permute.xlu0 %1060
      %1062 = vrot.lane.b32.xlu0 %v986, 64
      %v1063 = vpop.permute.xlu0 %1062
      %1064 = vrot.lane.b32.xlu0 %v987, 64
      %v1065 = vpop.permute.xlu0 %1064
      %1066 = vrot.lane.b32.xlu0 %v988, 64
      %v1067 = vpop.permute.xlu0 %1066
      %1068 = vrot.lane.b32.xlu0 %v989, 64
      %v1069 = vpop.permute.xlu0 %1068
      %1070 = vrot.lane.b32.xlu0 %v990, 64
      %v1071 = vpop.permute.xlu0 %1070
      %1072 = vrot.lane.b32.xlu0 %v991, 64
      %v1073 = vpop.permute.xlu0 %1072
      %1074 = vrot.lane.b32.xlu0 %v992, 64
      %v1075 = vpop.permute.xlu0 %1074
      %1076 = vrot.lane.b32.xlu0 %v993, 64
      %v1077 = vpop.permute.xlu0 %1076
      %1078 = vrot.lane.b32.xlu0 %v994, 64
      %v1079 = vpop.permute.xlu0 %1078
      %1080 = vrot.lane.b32.xlu0 %v995, 64
      %v1081 = vpop.permute.xlu0 %1080
      %1082 = vrot.lane.b32.xlu0 %v996, 64
      %v1083 = vpop.permute.xlu0 %1082
      %1084 = vrot.lane.b32.xlu0 %v997, 64
      %v1085 = vpop.permute.xlu0 %1084
      %1086 = vrot.lane.b32.xlu0 %v998, 64
      %v1087 = vpop.permute.xlu0 %1086
      %1088 = vrot.lane.b32.xlu0 %v999, 64
      %v1089 = vpop.permute.xlu0 %1088
      %1090 = vrot.lane.b32.xlu0 %v1000, 64
      %v1091 = vpop.permute.xlu0 %1090
      %1092 = vrot.lane.b32.xlu0 %v1001, 64
      %v1093 = vpop.permute.xlu0 %1092
      %1094 = vrot.lane.b32.xlu0 %v1002, 64
      %v1095 = vpop.permute.xlu0 %1094
      %1096 = vrot.lane.b32.xlu0 %v1003, 64
      %v1097 = vpop.permute.xlu0 %1096
      %1098 = vrot.lane.b32.xlu0 %v1004, 64
      %v1099 = vpop.permute.xlu0 %1098
      %1100 = vrot.lane.b32.xlu0 %v1005, 64
      %v1101 = vpop.permute.xlu0 %1100
      %vm1134 = vcmask 130048
      %1135 = vst.msk [vmem:[#allocation2] sm:$0xff] %vm1134, %v1039
      %1136 = vst.msk [vmem:[#allocation2 + $0x8] sm:$0xff] %vm1134, %v1041
      %1137 = vst.msk [vmem:[#allocation2 + $0x10] sm:$0xff] %vm1134, %v1043
      %1138 = vst.msk [vmem:[#allocation2 + $0x18] sm:$0xff] %vm1134, %v1045
      %1139 = vst.msk [vmem:[#allocation2 + $0x20] sm:$0xff] %vm1134, %v1047
      %1140 = vst.msk [vmem:[#allocation2 + $0x28] sm:$0xff] %vm1134, %v1049
      %1141 = vst.msk [vmem:[#allocation2 + $0x30] sm:$0xff] %vm1134, %v1051
      %1142 = vst.msk [vmem:[#allocation2 + $0x38] sm:$0xff] %vm1134, %v1053
      %1143 = vst.msk [vmem:[#allocation2 + $0x40] sm:$0xff] %vm1134, %v1055
      %1144 = vst.msk [vmem:[#allocation2 + $0x48] sm:$0xff] %vm1134, %v1057
      %1145 = vst.msk [vmem:[#allocation2 + $0x50] sm:$0xff] %vm1134, %v1059
      %1146 = vst.msk [vmem:[#allocation2 + $0x58] sm:$0xff] %vm1134, %v1061
      %1147 = vst.msk [vmem:[#allocation2 + $0x60] sm:$0xff] %vm1134, %v1063
      %1148 = vst.msk [vmem:[#allocation2 + $0x68] sm:$0xff] %vm1134, %v1065
      %1149 = vst.msk [vmem:[#allocation2 + $0x70] sm:$0xff] %vm1134, %v1067
      %1150 = vst.msk [vmem:[#allocation2 + $0x78] sm:$0xff] %vm1134, %v1069
      %1151 = vst.msk [vmem:[#allocation2 + $0x80] sm:$0xff] %vm1134, %v1071
      %1152 = vst.msk [vmem:[#allocation2 + $0x88] sm:$0xff] %vm1134, %v1073
      %1153 = vst.msk [vmem:[#allocation2 + $0x90] sm:$0xff] %vm1134, %v1075
      %1154 = vst.msk [vmem:[#allocation2 + $0x98] sm:$0xff] %vm1134, %v1077
      %1155 = vst.msk [vmem:[#allocation2 + $0xa0] sm:$0xff] %vm1134, %v1079
      %1156 = vst.msk [vmem:[#allocation2 + $0xa8] sm:$0xff] %vm1134, %v1081
      %1157 = vst.msk [vmem:[#allocation2 + $0xb0] sm:$0xff] %vm1134, %v1083
      %1158 = vst.msk [vmem:[#allocation2 + $0xb8] sm:$0xff] %vm1134, %v1085
      %1159 = vst.msk [vmem:[#allocation2 + $0xc0] sm:$0xff] %vm1134, %v1087
      %1160 = vst.msk [vmem:[#allocation2 + $0xc8] sm:$0xff] %vm1134, %v1089
      %1161 = vst.msk [vmem:[#allocation2 + $0xd0] sm:$0xff] %vm1134, %v1091
      %1162 = vst.msk [vmem:[#allocation2 + $0xd8] sm:$0xff] %vm1134, %v1093
      %1163 = vst.msk [vmem:[#allocation2 + $0xe0] sm:$0xff] %vm1134, %v1095
      %1164 = vst.msk [vmem:[#allocation2 + $0xe8] sm:$0xff] %vm1134, %v1097
      %1165 = vst.msk [vmem:[#allocation2 + $0xf0] sm:$0xff] %vm1134, %v1099
      %1166 = vst.msk [vmem:[#allocation2 + $0xf8] sm:$0xff] %vm1134, %v1101
      %v1167 = vadd.s32 %v935, 4294967295
      %v1168 = vadd.s32 %v936, 4294967295
      %v1169 = vadd.s32 %v937, 4294967295
      %v1170 = vadd.s32 %v938, 4294967295
      %v1171 = vadd.s32 %v939, 4294967295
      %v1172 = vadd.s32 %v940, 4294967295
      %v1173 = vadd.s32 %v941, 4294967295
      %v1174 = vadd.s32 %v942, 4294967295
      %v1175 = vadd.s32 %v943, 4294967295
      %v1176 = vadd.s32 %v944, 4294967295
      %v1177 = vadd.s32 %v945, 4294967295
      %v1178 = vadd.s32 %v946, 4294967295
      %v1179 = vadd.s32 %v947, 4294967295
      %v1180 = vadd.s32 %v948, 4294967295
      %v1181 = vadd.s32 %v949, 4294967295
      %v1182 = vadd.s32 %v950, 4294967295
      %v1183 = vadd.s32 %v951, 4294967295
      %v1184 = vadd.s32 %v952, 4294967295
      %v1185 = vadd.s32 %v953, 4294967295
      %v1186 = vadd.s32 %v954, 4294967295
      %v1187 = vadd.s32 %v955, 4294967295
      %v1188 = vadd.s32 %v956, 4294967295
      %v1189 = vadd.s32 %v957, 4294967295
      %v1190 = vadd.s32 %v958, 4294967295
      %v1191 = vadd.s32 %v959, 4294967295
      %v1192 = vadd.s32 %v960, 4294967295
      %v1193 = vadd.s32 %v961, 4294967295
      %v1194 = vadd.s32 %v962, 4294967295
      %v1195 = vadd.s32 %v963, 4294967295
      %v1196 = vadd.s32 %v964, 4294967295
      %vm1197 = vcmp.ge.s32.totalorder %v1167, 0
      %vm1198 = vcmp.ge.s32.totalorder %v1168, 0
      %vm1199 = vcmp.ge.s32.totalorder %v1169, 0
      %vm1200 = vcmp.ge.s32.totalorder %v1170, 0
      %vm1201 = vcmp.ge.s32.totalorder %v1171, 0
      %vm1202 = vcmp.ge.s32.totalorder %v1172, 0
      %vm1203 = vcmp.ge.s32.totalorder %v1173, 0
      %vm1204 = vcmp.ge.s32.totalorder %v1174, 0
      %vm1205 = vcmp.ge.s32.totalorder %v1175, 0
      %vm1206 = vcmp.ge.s32.totalorder %v1176, 0
      %vm1207 = vcmp.ge.s32.totalorder %v1177, 0
      %vm1208 = vcmp.ge.s32.totalorder %v1178, 0
      %vm1209 = vcmp.ge.s32.totalorder %v1179, 0
      %vm1210 = vcmp.ge.s32.totalorder %v1180, 0
      %vm1211 = vcmp.ge.s32.totalorder %v1181, 0
      %vm1212 = vcmp.ge.s32.totalorder %v1182, 0
      %vm1213 = vcmp.ge.s32.totalorder %v1183, 0
      %vm1214 = vcmp.ge.s32.totalorder %v1184, 0
      %vm1215 = vcmp.ge.s32.totalorder %v1185, 0
      %vm1216 = vcmp.ge.s32.totalorder %v1186, 0
      %vm1217 = vcmp.ge.s32.totalorder %v1187, 0
      %vm1218 = vcmp.ge.s32.totalorder %v1188, 0
      %vm1219 = vcmp.ge.s32.totalorder %v1189, 0
      %vm1220 = vcmp.ge.s32.totalorder %v1190, 0
      %vm1221 = vcmp.ge.s32.totalorder %v1191, 0
      %vm1222 = vcmp.ge.s32.totalorder %v1192, 0
      %vm1223 = vcmp.ge.s32.totalorder %v1193, 0
      %vm1224 = vcmp.ge.s32.totalorder %v1194, 0
      %vm1225 = vcmp.ge.s32.totalorder %v1195, 0
      %vm1226 = vcmp.ge.s32.totalorder %v1196, 0
      %vm1227 = vcmp.lt.s32.totalorder %v1167, 16
      %vm1228 = vcmp.lt.s32.totalorder %v1168, 16
      %vm1229 = vcmp.lt.s32.totalorder %v1169, 16
      %vm1230 = vcmp.lt.s32.totalorder %v1170, 16
      %vm1231 = vcmp.lt.s32.totalorder %v1171, 16
      %vm1232 = vcmp.lt.s32.totalorder %v1172, 16
      %vm1233 = vcmp.lt.s32.totalorder %v1173, 16
      %vm1234 = vcmp.lt.s32.totalorder %v1174, 16
      %vm1235 = vcmp.lt.s32.totalorder %v1175, 16
      %vm1236 = vcmp.lt.s32.totalorder %v1176, 16
      %vm1237 = vcmp.lt.s32.totalorder %v1177, 16
      %vm1238 = vcmp.lt.s32.totalorder %v1178, 16
      %vm1239 = vcmp.lt.s32.totalorder %v1179, 16
      %vm1240 = vcmp.lt.s32.totalorder %v1180, 16
      %vm1241 = vcmp.lt.s32.totalorder %v1181, 16
      %vm1242 = vcmp.lt.s32.totalorder %v1182, 16
      %vm1243 = vcmp.lt.s32.totalorder %v1183, 16
      %vm1244 = vcmp.lt.s32.totalorder %v1184, 16
      %vm1245 = vcmp.lt.s32.totalorder %v1185, 16
      %vm1246 = vcmp.lt.s32.totalorder %v1186, 16
      %vm1247 = vcmp.lt.s32.totalorder %v1187, 16
      %vm1248 = vcmp.lt.s32.totalorder %v1188, 16
      %vm1249 = vcmp.lt.s32.totalorder %v1189, 16
      %vm1250 = vcmp.lt.s32.totalorder %v1190, 16
      %vm1251 = vcmp.lt.s32.totalorder %v1191, 16
      %vm1252 = vcmp.lt.s32.totalorder %v1192, 16
      %vm1253 = vcmp.lt.s32.totalorder %v1193, 16
      %vm1254 = vcmp.lt.s32.totalorder %v1194, 16
      %vm1255 = vcmp.lt.s32.totalorder %v1195, 16
      %vm1256 = vcmp.lt.s32.totalorder %v1196, 16
      %vm1257 = vmand %vm1197, %vm1227
      %vm1258 = vmand %vm1198, %vm1228
      %vm1259 = vmand %vm1199, %vm1229
      %vm1260 = vmand %vm1200, %vm1230
      %vm1261 = vmand %vm1201, %vm1231
      %vm1262 = vmand %vm1202, %vm1232
      %vm1263 = vmand %vm1203, %vm1233
      %vm1264 = vmand %vm1204, %vm1234
      %vm1265 = vmand %vm1205, %vm1235
      %vm1266 = vmand %vm1206, %vm1236
      %vm1267 = vmand %vm1207, %vm1237
      %vm1268 = vmand %vm1208, %vm1238
      %vm1269 = vmand %vm1209, %vm1239
      %vm1270 = vmand %vm1210, %vm1240
      %vm1271 = vmand %vm1211, %vm1241
      %vm1272 = vmand %vm1212, %vm1242
      %vm1273 = vmand %vm1213, %vm1243
      %vm1274 = vmand %vm1214, %vm1244
      %vm1275 = vmand %vm1215, %vm1245
      %vm1276 = vmand %vm1216, %vm1246
      %vm1277 = vmand %vm1217, %vm1247
      %vm1278 = vmand %vm1218, %vm1248
      %vm1279 = vmand %vm1219, %vm1249
      %vm1280 = vmand %vm1220, %vm1250
      %vm1281 = vmand %vm1221, %vm1251
      %vm1282 = vmand %vm1222, %vm1252
      %vm1283 = vmand %vm1223, %vm1253
      %vm1284 = vmand %vm1224, %vm1254
      %vm1285 = vmand %vm1225, %vm1255
      %vm1286 = vmand %vm1226, %vm1256
      %v1287 = vsel %vm1257, 1, 0
      %v1288 = vsel %vm1258, 1, 0
      %v1289 = vsel %vm1259, 1, 0
      %v1290 = vsel %vm1260, 1, 0
      %v1291 = vsel %vm1261, 1, 0
      %v1292 = vsel %vm1262, 1, 0
      %v1293 = vsel %vm1263, 1, 0
      %v1294 = vsel %vm1264, 1, 0
      %v1295 = vsel %vm1265, 1, 0
      %v1296 = vsel %vm1266, 1, 0
      %v1297 = vsel %vm1267, 1, 0
      %v1298 = vsel %vm1268, 1, 0
      %v1299 = vsel %vm1269, 1, 0
      %v1300 = vsel %vm1270, 1, 0
      %v1301 = vsel %vm1271, 1, 0
      %v1302 = vsel %vm1272, 1, 0
      %v1303 = vsel %vm1273, 1, 0
      %v1304 = vsel %vm1274, 1, 0
      %v1305 = vsel %vm1275, 1, 0
      %v1306 = vsel %vm1276, 1, 0
      %v1307 = vsel %vm1277, 1, 0
      %v1308 = vsel %vm1278, 1, 0
      %v1309 = vsel %vm1279, 1, 0
      %v1310 = vsel %vm1280, 1, 0
      %v1311 = vsel %vm1281, 1, 0
      %v1312 = vsel %vm1282, 1, 0
      %v1313 = vsel %vm1283, 1, 0
      %v1314 = vsel %vm1284, 1, 0
      %v1315 = vsel %vm1285, 1, 0
      %v1316 = vsel %vm1286, 1, 0
      %vm1317 = vcmp.eq.s32.totalorder %v1287, 1
      %vm1318 = vcmp.eq.s32.totalorder %v1288, 1
      %vm1319 = vcmp.eq.s32.totalorder %v1289, 1
      %vm1320 = vcmp.eq.s32.totalorder %v1290, 1
      %vm1321 = vcmp.eq.s32.totalorder %v1291, 1
      %vm1322 = vcmp.eq.s32.totalorder %v1292, 1
      %vm1323 = vcmp.eq.s32.totalorder %v1293, 1
      %vm1324 = vcmp.eq.s32.totalorder %v1294, 1
      %vm1325 = vcmp.eq.s32.totalorder %v1295, 1
      %vm1326 = vcmp.eq.s32.totalorder %v1296, 1
      %vm1327 = vcmp.eq.s32.totalorder %v1297, 1
      %vm1328 = vcmp.eq.s32.totalorder %v1298, 1
      %vm1329 = vcmp.eq.s32.totalorder %v1299, 1
      %vm1330 = vcmp.eq.s32.totalorder %v1300, 1
      %vm1331 = vcmp.eq.s32.totalorder %v1301, 1
      %vm1332 = vcmp.eq.s32.totalorder %v1302, 1
      %vm1333 = vcmp.eq.s32.totalorder %v1303, 1
      %vm1334 = vcmp.eq.s32.totalorder %v1304, 1
      %vm1335 = vcmp.eq.s32.totalorder %v1305, 1
      %vm1336 = vcmp.eq.s32.totalorder %v1306, 1
      %vm1337 = vcmp.eq.s32.totalorder %v1307, 1
      %vm1338 = vcmp.eq.s32.totalorder %v1308, 1
      %vm1339 = vcmp.eq.s32.totalorder %v1309, 1
      %vm1340 = vcmp.eq.s32.totalorder %v1310, 1
      %vm1341 = vcmp.eq.s32.totalorder %v1311, 1
      %vm1342 = vcmp.eq.s32.totalorder %v1312, 1
      %vm1343 = vcmp.eq.s32.totalorder %v1313, 1
      %vm1344 = vcmp.eq.s32.totalorder %v1314, 1
      %vm1345 = vcmp.eq.s32.totalorder %v1315, 1
      %vm1346 = vcmp.eq.s32.totalorder %v1316, 1
      %vm1377 = vcmask 1040384
      %v1378 = vrot.slane %v392, 7
      %v1379 = vrot.slane %v395, 7
      %v1380 = vsel %vm1377, %v1378, %v1379
      %v1381 = vrot.slane %v400, 7
      %v1382 = vsel %vm1377, %v1379, %v1381
      %v1383 = vrot.slane %v404, 7
      %v1384 = vsel %vm1377, %v1381, %v1383
      %v1385 = vrot.slane %v410, 7
      %v1386 = vsel %vm1377, %v1383, %v1385
      %v1387 = vrot.slane %v414, 7
      %v1388 = vsel %vm1377, %v1385, %v1387
      %v1389 = vrot.slane %v420, 7
      %v1390 = vsel %vm1377, %v1387, %v1389
      %v1391 = vrot.slane %v424, 7
      %v1392 = vsel %vm1377, %v1389, %v1391
      %v1393 = vrot.slane %v430, 7
      %v1394 = vsel %vm1377, %v1391, %v1393
      %v1395 = vrot.slane %v434, 7
      %v1396 = vsel %vm1377, %v1393, %v1395
      %v1397 = vrot.slane %v440, 7
      %v1398 = vsel %vm1377, %v1395, %v1397
      %v1399 = vrot.slane %v444, 7
      %v1400 = vsel %vm1377, %v1397, %v1399
      %v1401 = vrot.slane %v450, 7
      %v1402 = vsel %vm1377, %v1399, %v1401
      %v1403 = vrot.slane %v454, 7
      %v1404 = vsel %vm1377, %v1401, %v1403
      %v1405 = vrot.slane %v460, 7
      %v1406 = vsel %vm1377, %v1403, %v1405
      %v1407 = vrot.slane %v464, 7
      %v1408 = vsel %vm1377, %v1405, %v1407
      %v1409 = vrot.slane %v470, 7
      %v1410 = vsel %vm1377, %v1407, %v1409
      %v1411 = vrot.slane %v474, 7
      %v1412 = vsel %vm1377, %v1409, %v1411
      %v1413 = vrot.slane %v480, 7
      %v1414 = vsel %vm1377, %v1411, %v1413
      %v1415 = vrot.slane %v484, 7
      %v1416 = vsel %vm1377, %v1413, %v1415
      %v1417 = vrot.slane %v490, 7
      %v1418 = vsel %vm1377, %v1415, %v1417
      %v1419 = vrot.slane %v494, 7
      %v1420 = vsel %vm1377, %v1417, %v1419
      %v1421 = vrot.slane %v500, 7
      %v1422 = vsel %vm1377, %v1419, %v1421
      %v1423 = vrot.slane %v504, 7
      %v1424 = vsel %vm1377, %v1421, %v1423
      %v1425 = vrot.slane %v510, 7
      %v1426 = vsel %vm1377, %v1423, %v1425
      %v1427 = vrot.slane %v514, 7
      %v1428 = vsel %vm1377, %v1425, %v1427
      %v1429 = vrot.slane %v520, 7
      %v1430 = vsel %vm1377, %v1427, %v1429
      %v1431 = vrot.slane %v524, 7
      %v1432 = vsel %vm1377, %v1429, %v1431
      %v1433 = vrot.slane %v530, 7
      %v1434 = vsel %vm1377, %v1431, %v1433
      %v1435 = vrot.slane %v534, 7
      %v1436 = vsel %vm1377, %v1433, %v1435
      %v1467 = vsel %vm1317, %v1378, 0.0
      %v1468 = vsel %vm1318, %v1380, 0.0
      %v1469 = vsel %vm1319, %v1382, 0.0
      %v1470 = vsel %vm1320, %v1384, 0.0
      %v1471 = vsel %vm1321, %v1386, 0.0
      %v1472 = vsel %vm1322, %v1388, 0.0
      %v1473 = vsel %vm1323, %v1390, 0.0
      %v1474 = vsel %vm1324, %v1392, 0.0
      %v1475 = vsel %vm1325, %v1394, 0.0
      %v1476 = vsel %vm1326, %v1396, 0.0
      %v1477 = vsel %vm1327, %v1398, 0.0
      %v1478 = vsel %vm1328, %v1400, 0.0
      %v1479 = vsel %vm1329, %v1402, 0.0
      %v1480 = vsel %vm1330, %v1404, 0.0
      %v1481 = vsel %vm1331, %v1406, 0.0
      %v1482 = vsel %vm1332, %v1408, 0.0
      %v1483 = vsel %vm1333, %v1410, 0.0
      %v1484 = vsel %vm1334, %v1412, 0.0
      %v1485 = vsel %vm1335, %v1414, 0.0
      %v1486 = vsel %vm1336, %v1416, 0.0
      %v1487 = vsel %vm1337, %v1418, 0.0
      %v1488 = vsel %vm1338, %v1420, 0.0
      %v1489 = vsel %vm1339, %v1422, 0.0
      %v1490 = vsel %vm1340, %v1424, 0.0
      %v1491 = vsel %vm1341, %v1426, 0.0
      %v1492 = vsel %vm1342, %v1428, 0.0
      %v1493 = vsel %vm1343, %v1430, 0.0
      %v1494 = vsel %vm1344, %v1432, 0.0
      %v1495 = vsel %vm1345, %v1434, 0.0
      %v1496 = vsel %vm1346, %v1436, 0.0
      %v1497 = vld [vmem:[#allocation2 + $0x11] sm:$0xff]
      %v1498 = vld [vmem:[#allocation2 + $0x19] sm:$0xff]
      %v1499 = vld [vmem:[#allocation2 + $0x21] sm:$0xff]
      %v1500 = vld [vmem:[#allocation2 + $0x29] sm:$0xff]
      %v1501 = vld [vmem:[#allocation2 + $0x31] sm:$0xff]
      %v1502 = vld [vmem:[#allocation2 + $0x39] sm:$0xff]
      %v1503 = vld [vmem:[#allocation2 + $0x41] sm:$0xff]
      %v1504 = vld [vmem:[#allocation2 + $0x49] sm:$0xff]
      %v1505 = vld [vmem:[#allocation2 + $0x51] sm:$0xff]
      %v1506 = vld [vmem:[#allocation2 + $0x59] sm:$0xff]
      %v1507 = vld [vmem:[#allocation2 + $0x61] sm:$0xff]
      %v1508 = vld [vmem:[#allocation2 + $0x69] sm:$0xff]
      %v1509 = vld [vmem:[#allocation2 + $0x71] sm:$0xff]
      %v1510 = vld [vmem:[#allocation2 + $0x79] sm:$0xff]
      %v1511 = vld [vmem:[#allocation2 + $0x81] sm:$0xff]
      %v1512 = vld [vmem:[#allocation2 + $0x89] sm:$0xff]
      %v1513 = vld [vmem:[#allocation2 + $0x91] sm:$0xff]
      %v1514 = vld [vmem:[#allocation2 + $0x99] sm:$0xff]
      %v1515 = vld [vmem:[#allocation2 + $0xa1] sm:$0xff]
      %v1516 = vld [vmem:[#allocation2 + $0xa9] sm:$0xff]
      %v1517 = vld [vmem:[#allocation2 + $0xb1] sm:$0xff]
      %v1518 = vld [vmem:[#allocation2 + $0xb9] sm:$0xff]
      %v1519 = vld [vmem:[#allocation2 + $0xc1] sm:$0xff]
      %v1520 = vld [vmem:[#allocation2 + $0xc9] sm:$0xff]
      %v1521 = vld [vmem:[#allocation2 + $0xd1] sm:$0xff]
      %v1522 = vld [vmem:[#allocation2 + $0xd9] sm:$0xff]
      %v1523 = vld [vmem:[#allocation2 + $0xe1] sm:$0xff]
      %v1524 = vld [vmem:[#allocation2 + $0xe9] sm:$0xff]
      %v1525 = vld [vmem:[#allocation2 + $0xf1] sm:$0xff]
      %v1526 = vld [vmem:[#allocation2 + $0xf9] sm:$0x7f]
      %vm1557 = vcmask 1046528
      %v1558 = vrot.slane %v1467, 1
      %v1559 = vrot.slane %v1468, 1
      %v1560 = vsel %vm1557, %v1558, %v1559
      %v1561 = vrot.slane %v1469, 1
      %v1562 = vsel %vm1557, %v1559, %v1561
      %v1563 = vrot.slane %v1470, 1
      %v1564 = vsel %vm1557, %v1561, %v1563
      %v1565 = vrot.slane %v1471, 1
      %v1566 = vsel %vm1557, %v1563, %v1565
      %v1567 = vrot.slane %v1472, 1
      %v1568 = vsel %vm1557, %v1565, %v1567
      %v1569 = vrot.slane %v1473, 1
      %v1570 = vsel %vm1557, %v1567, %v1569
      %v1571 = vrot.slane %v1474, 1
      %v1572 = vsel %vm1557, %v1569, %v1571
      %v1573 = vrot.slane %v1475, 1
      %v1574 = vsel %vm1557, %v1571, %v1573
      %v1575 = vrot.slane %v1476, 1
      %v1576 = vsel %vm1557, %v1573, %v1575
      %v1577 = vrot.slane %v1477, 1
      %v1578 = vsel %vm1557, %v1575, %v1577
      %v1579 = vrot.slane %v1478, 1
      %v1580 = vsel %vm1557, %v1577, %v1579
      %v1581 = vrot.slane %v1479, 1
      %v1582 = vsel %vm1557, %v1579, %v1581
      %v1583 = vrot.slane %v1480, 1
      %v1584 = vsel %vm1557, %v1581, %v1583
      %v1585 = vrot.slane %v1481, 1
      %v1586 = vsel %vm1557, %v1583, %v1585
      %v1587 = vrot.slane %v1482, 1
      %v1588 = vsel %vm1557, %v1585, %v1587
      %v1589 = vrot.slane %v1483, 1
      %v1590 = vsel %vm1557, %v1587, %v1589
      %v1591 = vrot.slane %v1484, 1
      %v1592 = vsel %vm1557, %v1589, %v1591
      %v1593 = vrot.slane %v1485, 1
      %v1594 = vsel %vm1557, %v1591, %v1593
      %v1595 = vrot.slane %v1486, 1
      %v1596 = vsel %vm1557, %v1593, %v1595
      %v1597 = vrot.slane %v1487, 1
      %v1598 = vsel %vm1557, %v1595, %v1597
      %v1599 = vrot.slane %v1488, 1
      %v1600 = vsel %vm1557, %v1597, %v1599
      %v1601 = vrot.slane %v1489, 1
      %v1602 = vsel %vm1557, %v1599, %v1601
      %v1603 = vrot.slane %v1490, 1
      %v1604 = vsel %vm1557, %v1601, %v1603
      %v1605 = vrot.slane %v1491, 1
      %v1606 = vsel %vm1557, %v1603, %v1605
      %v1607 = vrot.slane %v1492, 1
      %v1608 = vsel %vm1557, %v1605, %v1607
      %v1609 = vrot.slane %v1493, 1
      %v1610 = vsel %vm1557, %v1607, %v1609
      %v1611 = vrot.slane %v1494, 1
      %v1612 = vsel %vm1557, %v1609, %v1611
      %v1613 = vrot.slane %v1495, 1
      %v1614 = vsel %vm1557, %v1611, %v1613
      %v1615 = vrot.slane %v1496, 1
      %v1616 = vsel %vm1557, %v1613, %v1615
      %v1647 = vadd.f32 %v1497, %v1560
      %v1648 = vadd.f32 %v1498, %v1562
      %v1649 = vadd.f32 %v1499, %v1564
      %v1650 = vadd.f32 %v1500, %v1566
      %v1651 = vadd.f32 %v1501, %v1568
      %v1652 = vadd.f32 %v1502, %v1570
      %v1653 = vadd.f32 %v1503, %v1572
      %v1654 = vadd.f32 %v1504, %v1574
      %v1655 = vadd.f32 %v1505, %v1576
      %v1656 = vadd.f32 %v1506, %v1578
      %v1657 = vadd.f32 %v1507, %v1580
      %v1658 = vadd.f32 %v1508, %v1582
      %v1659 = vadd.f32 %v1509, %v1584
      %v1660 = vadd.f32 %v1510, %v1586
      %v1661 = vadd.f32 %v1511, %v1588
      %v1662 = vadd.f32 %v1512, %v1590
      %v1663 = vadd.f32 %v1513, %v1592
      %v1664 = vadd.f32 %v1514, %v1594
      %v1665 = vadd.f32 %v1515, %v1596
      %v1666 = vadd.f32 %v1516, %v1598
      %v1667 = vadd.f32 %v1517, %v1600
      %v1668 = vadd.f32 %v1518, %v1602
      %v1669 = vadd.f32 %v1519, %v1604
      %v1670 = vadd.f32 %v1520, %v1606
      %v1671 = vadd.f32 %v1521, %v1608
      %v1672 = vadd.f32 %v1522, %v1610
      %v1673 = vadd.f32 %v1523, %v1612
      %v1674 = vadd.f32 %v1524, %v1614
      %v1675 = vadd.f32 %v1525, %v1616
      %v1676 = vadd.f32 %v1526, %v1615
      %1677 = vst.msk [vmem:[#allocation2 + $0x11] sm:$0xff] %vm1134, %v1647
      %1678 = vst.msk [vmem:[#allocation2 + $0x19] sm:$0xff] %vm1134, %v1648
      %1679 = vst.msk [vmem:[#allocation2 + $0x21] sm:$0xff] %vm1134, %v1649
      %1680 = vst.msk [vmem:[#allocation2 + $0x29] sm:$0xff] %vm1134, %v1650
      %1681 = vst.msk [vmem:[#allocation2 + $0x31] sm:$0xff] %vm1134, %v1651
      %1682 = vst.msk [vmem:[#allocation2 + $0x39] sm:$0xff] %vm1134, %v1652
      %1683 = vst.msk [vmem:[#allocation2 + $0x41] sm:$0xff] %vm1134, %v1653
      %1684 = vst.msk [vmem:[#allocation2 + $0x49] sm:$0xff] %vm1134, %v1654
      %1685 = vst.msk [vmem:[#allocation2 + $0x51] sm:$0xff] %vm1134, %v1655
      %1686 = vst.msk [vmem:[#allocation2 + $0x59] sm:$0xff] %vm1134, %v1656
      %1687 = vst.msk [vmem:[#allocation2 + $0x61] sm:$0xff] %vm1134, %v1657
      %1688 = vst.msk [vmem:[#allocation2 + $0x69] sm:$0xff] %vm1134, %v1658
      %1689 = vst.msk [vmem:[#allocation2 + $0x71] sm:$0xff] %vm1134, %v1659
      %1690 = vst.msk [vmem:[#allocation2 + $0x79] sm:$0xff] %vm1134, %v1660
      %1691 = vst.msk [vmem:[#allocation2 + $0x81] sm:$0xff] %vm1134, %v1661
      %1692 = vst.msk [vmem:[#allocation2 + $0x89] sm:$0xff] %vm1134, %v1662
      %1693 = vst.msk [vmem:[#allocation2 + $0x91] sm:$0xff] %vm1134, %v1663
      %1694 = vst.msk [vmem:[#allocation2 + $0x99] sm:$0xff] %vm1134, %v1664
      %1695 = vst.msk [vmem:[#allocation2 + $0xa1] sm:$0xff] %vm1134, %v1665
      %1696 = vst.msk [vmem:[#allocation2 + $0xa9] sm:$0xff] %vm1134, %v1666
      %1697 = vst.msk [vmem:[#allocation2 + $0xb1] sm:$0xff] %vm1134, %v1667
      %1698 = vst.msk [vmem:[#allocation2 + $0xb9] sm:$0xff] %vm1134, %v1668
      %1699 = vst.msk [vmem:[#allocation2 + $0xc1] sm:$0xff] %vm1134, %v1669
      %1700 = vst.msk [vmem:[#allocation2 + $0xc9] sm:$0xff] %vm1134, %v1670
      %1701 = vst.msk [vmem:[#allocation2 + $0xd1] sm:$0xff] %vm1134, %v1671
      %1702 = vst.msk [vmem:[#allocation2 + $0xd9] sm:$0xff] %vm1134, %v1672
      %1703 = vst.msk [vmem:[#allocation2 + $0xe1] sm:$0xff] %vm1134, %v1673
      %1704 = vst.msk [vmem:[#allocation2 + $0xe9] sm:$0xff] %vm1134, %v1674
      %1705 = vst.msk [vmem:[#allocation2 + $0xf1] sm:$0xff] %vm1134, %v1675
      %vm1706 = vcmask 129024
      %1707 = vst.msk [vmem:[#allocation2 + $0xf9] sm:$0x7f] %vm1706, %v1676
      %v1708 = vld [vmem:[#allocation2 + $0x10] sm:$0xff]
      %v1709 = vld [vmem:[#allocation2 + $0x18] sm:$0xff]
      %v1710 = vld [vmem:[#allocation2 + $0x20] sm:$0xff]
      %v1711 = vld [vmem:[#allocation2 + $0x28] sm:$0xff]
      %v1712 = vld [vmem:[#allocation2 + $0x30] sm:$0xff]
      %v1713 = vld [vmem:[#allocation2 + $0x38] sm:$0xff]
      %v1714 = vld [vmem:[#allocation2 + $0x40] sm:$0xff]
      %v1715 = vld [vmem:[#allocation2 + $0x48] sm:$0xff]
      %v1716 = vld [vmem:[#allocation2 + $0x50] sm:$0xff]
      %v1717 = vld [vmem:[#allocation2 + $0x58] sm:$0xff]
      %v1718 = vld [vmem:[#allocation2 + $0x60] sm:$0xff]
      %v1719 = vld [vmem:[#allocation2 + $0x68] sm:$0xff]
      %v1720 = vld [vmem:[#allocation2 + $0x70] sm:$0xff]
      %v1721 = vld [vmem:[#allocation2 + $0x78] sm:$0xff]
      %v1722 = vld [vmem:[#allocation2 + $0x80] sm:$0xff]
      %v1723 = vld [vmem:[#allocation2 + $0x88] sm:$0xff]
      %v1724 = vld [vmem:[#allocation2 + $0x90] sm:$0xff]
      %v1725 = vld [vmem:[#allocation2 + $0x98] sm:$0xff]
      %v1726 = vld [vmem:[#allocation2 + $0xa0] sm:$0xff]
      %v1727 = vld [vmem:[#allocation2 + $0xa8] sm:$0xff]
      %v1728 = vld [vmem:[#allocation2 + $0xb0] sm:$0xff]
      %v1729 = vld [vmem:[#allocation2 + $0xb8] sm:$0xff]
      %v1730 = vld [vmem:[#allocation2 + $0xc0] sm:$0xff]
      %v1731 = vld [vmem:[#allocation2 + $0xc8] sm:$0xff]
      %v1732 = vld [vmem:[#allocation2 + $0xd0] sm:$0xff]
      %v1733 = vld [vmem:[#allocation2 + $0xd8] sm:$0xff]
      %v1734 = vld [vmem:[#allocation2 + $0xe0] sm:$0xff]
      %v1735 = vld [vmem:[#allocation2 + $0xe8] sm:$0xff]
      %v1736 = vld [vmem:[#allocation2 + $0xf0] sm:$0xff]
      %v1737 = vld [vmem:[#allocation2 + $0xf8] sm:$0xff]
      %1738 = vrot.lane.b32.xlu0 %v392, 112
      %v1739 = vpop.permute.xlu0 %1738
      %1740 = vrot.lane.b32.xlu0 %v395, 112
      %v1741 = vpop.permute.xlu0 %1740
      %1742 = vrot.lane.b32.xlu0 %v400, 112
      %v1743 = vpop.permute.xlu0 %1742
      %1744 = vrot.lane.b32.xlu0 %v404, 112
      %v1745 = vpop.permute.xlu0 %1744
      %1746 = vrot.lane.b32.xlu0 %v410, 112
      %v1747 = vpop.permute.xlu0 %1746
      %1748 = vrot.lane.b32.xlu0 %v414, 112
      %v1749 = vpop.permute.xlu0 %1748
      %1750 = vrot.lane.b32.xlu0 %v420, 112
      %v1751 = vpop.permute.xlu0 %1750
      %1752 = vrot.lane.b32.xlu0 %v424, 112
      %v1753 = vpop.permute.xlu0 %1752
      %1754 = vrot.lane.b32.xlu0 %v430, 112
      %v1755 = vpop.permute.xlu0 %1754
      %1756 = vrot.lane.b32.xlu0 %v434, 112
      %v1757 = vpop.permute.xlu0 %1756
      %1758 = vrot.lane.b32.xlu0 %v440, 112
      %v1759 = vpop.permute.xlu0 %1758
      %1760 = vrot.lane.b32.xlu0 %v444, 112
      %v1761 = vpop.permute.xlu0 %1760
      %1762 = vrot.lane.b32.xlu0 %v450, 112
      %v1763 = vpop.permute.xlu0 %1762
      %1764 = vrot.lane.b32.xlu0 %v454, 112
      %v1765 = vpop.permute.xlu0 %1764
      %1766 = vrot.lane.b32.xlu0 %v460, 112
      %v1767 = vpop.permute.xlu0 %1766
      %1768 = vrot.lane.b32.xlu0 %v464, 112
      %v1769 = vpop.permute.xlu0 %1768
      %1770 = vrot.lane.b32.xlu0 %v470, 112
      %v1771 = vpop.permute.xlu0 %1770
      %1772 = vrot.lane.b32.xlu0 %v474, 112
      %v1773 = vpop.permute.xlu0 %1772
      %1774 = vrot.lane.b32.xlu0 %v480, 112
      %v1775 = vpop.permute.xlu0 %1774
      %1776 = vrot.lane.b32.xlu0 %v484, 112
      %v1777 = vpop.permute.xlu0 %1776
      %1778 = vrot.lane.b32.xlu0 %v490, 112
      %v1779 = vpop.permute.xlu0 %1778
      %1780 = vrot.lane.b32.xlu0 %v494, 112
      %v1781 = vpop.permute.xlu0 %1780
      %1782 = vrot.lane.b32.xlu0 %v500, 112
      %v1783 = vpop.permute.xlu0 %1782
      %1784 = vrot.lane.b32.xlu0 %v504, 112
      %v1785 = vpop.permute.xlu0 %1784
      %1786 = vrot.lane.b32.xlu0 %v510, 112
      %v1787 = vpop.permute.xlu0 %1786
      %1788 = vrot.lane.b32.xlu0 %v514, 112
      %v1789 = vpop.permute.xlu0 %1788
      %1790 = vrot.lane.b32.xlu0 %v520, 112
      %v1791 = vpop.permute.xlu0 %1790
      %1792 = vrot.lane.b32.xlu0 %v524, 112
      %v1793 = vpop.permute.xlu0 %1792
      %1794 = vrot.lane.b32.xlu0 %v530, 112
      %v1795 = vpop.permute.xlu0 %1794
      %1796 = vrot.lane.b32.xlu0 %v534, 112
      %v1797 = vpop.permute.xlu0 %1796
      %v1828 = vadd.f32 %v1708, %v1739
      %v1829 = vadd.f32 %v1709, %v1741
      %v1830 = vadd.f32 %v1710, %v1743
      %v1831 = vadd.f32 %v1711, %v1745
      %v1832 = vadd.f32 %v1712, %v1747
      %v1833 = vadd.f32 %v1713, %v1749
      %v1834 = vadd.f32 %v1714, %v1751
      %v1835 = vadd.f32 %v1715, %v1753
      %v1836 = vadd.f32 %v1716, %v1755
      %v1837 = vadd.f32 %v1717, %v1757
      %v1838 = vadd.f32 %v1718, %v1759
      %v1839 = vadd.f32 %v1719, %v1761
      %v1840 = vadd.f32 %v1720, %v1763
      %v1841 = vadd.f32 %v1721, %v1765
      %v1842 = vadd.f32 %v1722, %v1767
      %v1843 = vadd.f32 %v1723, %v1769
      %v1844 = vadd.f32 %v1724, %v1771
      %v1845 = vadd.f32 %v1725, %v1773
      %v1846 = vadd.f32 %v1726, %v1775
      %v1847 = vadd.f32 %v1727, %v1777
      %v1848 = vadd.f32 %v1728, %v1779
      %v1849 = vadd.f32 %v1729, %v1781
      %v1850 = vadd.f32 %v1730, %v1783
      %v1851 = vadd.f32 %v1731, %v1785
      %v1852 = vadd.f32 %v1732, %v1787
      %v1853 = vadd.f32 %v1733, %v1789
      %v1854 = vadd.f32 %v1734, %v1791
      %v1855 = vadd.f32 %v1735, %v1793
      %v1856 = vadd.f32 %v1736, %v1795
      %v1857 = vadd.f32 %v1737, %v1797
      %1858 = vst.msk [vmem:[#allocation2 + $0x10] sm:$0xff] %vm1134, %v1828
      %1859 = vst.msk [vmem:[#allocation2 + $0x18] sm:$0xff] %vm1134, %v1829
      %1860 = vst.msk [vmem:[#allocation2 + $0x20] sm:$0xff] %vm1134, %v1830
      %1861 = vst.msk [vmem:[#allocation2 + $0x28] sm:$0xff] %vm1134, %v1831
      %1862 = vst.msk [vmem:[#allocation2 + $0x30] sm:$0xff] %vm1134, %v1832
      %1863 = vst.msk [vmem:[#allocation2 + $0x38] sm:$0xff] %vm1134, %v1833
      %1864 = vst.msk [vmem:[#allocation2 + $0x40] sm:$0xff] %vm1134, %v1834
      %1865 = vst.msk [vmem:[#allocation2 + $0x48] sm:$0xff] %vm1134, %v1835
      %1866 = vst.msk [vmem:[#allocation2 + $0x50] sm:$0xff] %vm1134, %v1836
      %1867 = vst.msk [vmem:[#allocation2 + $0x58] sm:$0xff] %vm1134, %v1837
      %1868 = vst.msk [vmem:[#allocation2 + $0x60] sm:$0xff] %vm1134, %v1838
      %1869 = vst.msk [vmem:[#allocation2 + $0x68] sm:$0xff] %vm1134, %v1839
      %1870 = vst.msk [vmem:[#allocation2 + $0x70] sm:$0xff] %vm1134, %v1840
      %1871 = vst.msk [vmem:[#allocation2 + $0x78] sm:$0xff] %vm1134, %v1841
      %1872 = vst.msk [vmem:[#allocation2 + $0x80] sm:$0xff] %vm1134, %v1842
      %1873 = vst.msk [vmem:[#allocation2 + $0x88] sm:$0xff] %vm1134, %v1843
      %1874 = vst.msk [vmem:[#allocation2 + $0x90] sm:$0xff] %vm1134, %v1844
      %1875 = vst.msk [vmem:[#allocation2 + $0x98] sm:$0xff] %vm1134, %v1845
      %1876 = vst.msk [vmem:[#allocation2 + $0xa0] sm:$0xff] %vm1134, %v1846
      %1877 = vst.msk [vmem:[#allocation2 + $0xa8] sm:$0xff] %vm1134, %v1847
      %1878 = vst.msk [vmem:[#allocation2 + $0xb0] sm:$0xff] %vm1134, %v1848
      %1879 = vst.msk [vmem:[#allocation2 + $0xb8] sm:$0xff] %vm1134, %v1849
      %1880 = vst.msk [vmem:[#allocation2 + $0xc0] sm:$0xff] %vm1134, %v1850
      %1881 = vst.msk [vmem:[#allocation2 + $0xc8] sm:$0xff] %vm1134, %v1851
      %1882 = vst.msk [vmem:[#allocation2 + $0xd0] sm:$0xff] %vm1134, %v1852
      %1883 = vst.msk [vmem:[#allocation2 + $0xd8] sm:$0xff] %vm1134, %v1853
      %1884 = vst.msk [vmem:[#allocation2 + $0xe0] sm:$0xff] %vm1134, %v1854
      %1885 = vst.msk [vmem:[#allocation2 + $0xe8] sm:$0xff] %vm1134, %v1855
      %1886 = vst.msk [vmem:[#allocation2 + $0xf0] sm:$0xff] %vm1134, %v1856
      %1887 = vst.msk [vmem:[#allocation2 + $0xf8] sm:$0xff] %vm1134, %v1857
      %v1888 = vadd.s32 %v934, 1
      %v1889 = vadd.s32 %v935, 1
      %v1890 = vadd.s32 %v936, 1
      %v1891 = vadd.s32 %v937, 1
      %v1892 = vadd.s32 %v938, 1
      %v1893 = vadd.s32 %v939, 1
      %v1894 = vadd.s32 %v940, 1
      %v1895 = vadd.s32 %v941, 1
      %v1896 = vadd.s32 %v942, 1
      %v1897 = vadd.s32 %v943, 1
      %v1898 = vadd.s32 %v944, 1
      %v1899 = vadd.s32 %v945, 1
      %v1900 = vadd.s32 %v946, 1
      %v1901 = vadd.s32 %v947, 1
      %v1902 = vadd.s32 %v948, 1
      %v1903 = vadd.s32 %v949, 1
      %v1904 = vadd.s32 %v950, 1
      %v1905 = vadd.s32 %v951, 1
      %v1906 = vadd.s32 %v952, 1
      %v1907 = vadd.s32 %v953, 1
      %v1908 = vadd.s32 %v954, 1
      %v1909 = vadd.s32 %v955, 1
      %v1910 = vadd.s32 %v956, 1
      %v1911 = vadd.s32 %v957, 1
      %v1912 = vadd.s32 %v958, 1
      %v1913 = vadd.s32 %v959, 1
      %v1914 = vadd.s32 %v960, 1
      %v1915 = vadd.s32 %v961, 1
      %v1916 = vadd.s32 %v962, 1
      %v1917 = vadd.s32 %v963, 1
      %v1918 = vadd.s32 %v964, 1
      %vm1919 = vcmp.ge.s32.totalorder %v1888, 0
      %vm1920 = vcmp.ge.s32.totalorder %v1889, 0
      %vm1921 = vcmp.ge.s32.totalorder %v1890, 0
      %vm1922 = vcmp.ge.s32.totalorder %v1891, 0
      %vm1923 = vcmp.ge.s32.totalorder %v1892, 0
      %vm1924 = vcmp.ge.s32.totalorder %v1893, 0
      %vm1925 = vcmp.ge.s32.totalorder %v1894, 0
      %vm1926 = vcmp.ge.s32.totalorder %v1895, 0
      %vm1927 = vcmp.ge.s32.totalorder %v1896, 0
      %vm1928 = vcmp.ge.s32.totalorder %v1897, 0
      %vm1929 = vcmp.ge.s32.totalorder %v1898, 0
      %vm1930 = vcmp.ge.s32.totalorder %v1899, 0
      %vm1931 = vcmp.ge.s32.totalorder %v1900, 0
      %vm1932 = vcmp.ge.s32.totalorder %v1901, 0
      %vm1933 = vcmp.ge.s32.totalorder %v1902, 0
      %vm1934 = vcmp.ge.s32.totalorder %v1903, 0
      %vm1935 = vcmp.ge.s32.totalorder %v1904, 0
      %vm1936 = vcmp.ge.s32.totalorder %v1905, 0
      %vm1937 = vcmp.ge.s32.totalorder %v1906, 0
      %vm1938 = vcmp.ge.s32.totalorder %v1907, 0
      %vm1939 = vcmp.ge.s32.totalorder %v1908, 0
      %vm1940 = vcmp.ge.s32.totalorder %v1909, 0
      %vm1941 = vcmp.ge.s32.totalorder %v1910, 0
      %vm1942 = vcmp.ge.s32.totalorder %v1911, 0
      %vm1943 = vcmp.ge.s32.totalorder %v1912, 0
      %vm1944 = vcmp.ge.s32.totalorder %v1913, 0
      %vm1945 = vcmp.ge.s32.totalorder %v1914, 0
      %vm1946 = vcmp.ge.s32.totalorder %v1915, 0
      %vm1947 = vcmp.ge.s32.totalorder %v1916, 0
      %vm1948 = vcmp.ge.s32.totalorder %v1917, 0
      %vm1949 = vcmp.ge.s32.totalorder %v1918, 0
      %vm1950 = vcmp.lt.s32.totalorder %v1888, 16
      %vm1951 = vcmp.lt.s32.totalorder %v1889, 16
      %vm1952 = vcmp.lt.s32.totalorder %v1890, 16
      %vm1953 = vcmp.lt.s32.totalorder %v1891, 16
      %vm1954 = vcmp.lt.s32.totalorder %v1892, 16
      %vm1955 = vcmp.lt.s32.totalorder %v1893, 16
      %vm1956 = vcmp.lt.s32.totalorder %v1894, 16
      %vm1957 = vcmp.lt.s32.totalorder %v1895, 16
      %vm1958 = vcmp.lt.s32.totalorder %v1896, 16
      %vm1959 = vcmp.lt.s32.totalorder %v1897, 16
      %vm1960 = vcmp.lt.s32.totalorder %v1898, 16
      %vm1961 = vcmp.lt.s32.totalorder %v1899, 16
      %vm1962 = vcmp.lt.s32.totalorder %v1900, 16
      %vm1963 = vcmp.lt.s32.totalorder %v1901, 16
      %vm1964 = vcmp.lt.s32.totalorder %v1902, 16
      %vm1965 = vcmp.lt.s32.totalorder %v1903, 16
      %vm1966 = vcmp.lt.s32.totalorder %v1904, 16
      %vm1967 = vcmp.lt.s32.totalorder %v1905, 16
      %vm1968 = vcmp.lt.s32.totalorder %v1906, 16
      %vm1969 = vcmp.lt.s32.totalorder %v1907, 16
      %vm1970 = vcmp.lt.s32.totalorder %v1908, 16
      %vm1971 = vcmp.lt.s32.totalorder %v1909, 16
      %vm1972 = vcmp.lt.s32.totalorder %v1910, 16
      %vm1973 = vcmp.lt.s32.totalorder %v1911, 16
      %vm1974 = vcmp.lt.s32.totalorder %v1912, 16
      %vm1975 = vcmp.lt.s32.totalorder %v1913, 16
      %vm1976 = vcmp.lt.s32.totalorder %v1914, 16
      %vm1977 = vcmp.lt.s32.totalorder %v1915, 16
      %vm1978 = vcmp.lt.s32.totalorder %v1916, 16
      %vm1979 = vcmp.lt.s32.totalorder %v1917, 16
      %vm1980 = vcmp.lt.s32.totalorder %v1918, 16
      %vm1981 = vmand %vm1919, %vm1950
      %vm1982 = vmand %vm1920, %vm1951
      %vm1983 = vmand %vm1921, %vm1952
      %vm1984 = vmand %vm1922, %vm1953
      %vm1985 = vmand %vm1923, %vm1954
      %vm1986 = vmand %vm1924, %vm1955
      %vm1987 = vmand %vm1925, %vm1956
      %vm1988 = vmand %vm1926, %vm1957
      %vm1989 = vmand %vm1927, %vm1958
      %vm1990 = vmand %vm1928, %vm1959
      %vm1991 = vmand %vm1929, %vm1960
      %vm1992 = vmand %vm1930, %vm1961
      %vm1993 = vmand %vm1931, %vm1962
      %vm1994 = vmand %vm1932, %vm1963
      %vm1995 = vmand %vm1933, %vm1964
      %vm1996 = vmand %vm1934, %vm1965
      %vm1997 = vmand %vm1935, %vm1966
      %vm1998 = vmand %vm1936, %vm1967
      %vm1999 = vmand %vm1937, %vm1968
      %vm2000 = vmand %vm1938, %vm1969
      %vm2001 = vmand %vm1939, %vm1970
      %vm2002 = vmand %vm1940, %vm1971
      %vm2003 = vmand %vm1941, %vm1972
      %vm2004 = vmand %vm1942, %vm1973
      %vm2005 = vmand %vm1943, %vm1974
      %vm2006 = vmand %vm1944, %vm1975
      %vm2007 = vmand %vm1945, %vm1976
      %vm2008 = vmand %vm1946, %vm1977
      %vm2009 = vmand %vm1947, %vm1978
      %vm2010 = vmand %vm1948, %vm1979
      %vm2011 = vmand %vm1949, %vm1980
      %v2012 = vsel %vm1981, 1, 0
      %v2013 = vsel %vm1982, 1, 0
      %v2014 = vsel %vm1983, 1, 0
      %v2015 = vsel %vm1984, 1, 0
      %v2016 = vsel %vm1985, 1, 0
      %v2017 = vsel %vm1986, 1, 0
      %v2018 = vsel %vm1987, 1, 0
      %v2019 = vsel %vm1988, 1, 0
      %v2020 = vsel %vm1989, 1, 0
      %v2021 = vsel %vm1990, 1, 0
      %v2022 = vsel %vm1991, 1, 0
      %v2023 = vsel %vm1992, 1, 0
      %v2024 = vsel %vm1993, 1, 0
      %v2025 = vsel %vm1994, 1, 0
      %v2026 = vsel %vm1995, 1, 0
      %v2027 = vsel %vm1996, 1, 0
      %v2028 = vsel %vm1997, 1, 0
      %v2029 = vsel %vm1998, 1, 0
      %v2030 = vsel %vm1999, 1, 0
      %v2031 = vsel %vm2000, 1, 0
      %v2032 = vsel %vm2001, 1, 0
      %v2033 = vsel %vm2002, 1, 0
      %v2034 = vsel %vm2003, 1, 0
      %v2035 = vsel %vm2004, 1, 0
      %v2036 = vsel %vm2005, 1, 0
      %v2037 = vsel %vm2006, 1, 0
      %v2038 = vsel %vm2007, 1, 0
      %v2039 = vsel %vm2008, 1, 0
      %v2040 = vsel %vm2009, 1, 0
      %v2041 = vsel %vm2010, 1, 0
      %v2042 = vsel %vm2011, 1, 0
      %vm2043 = vcmp.eq.s32.totalorder %v2012, 1
      %vm2044 = vcmp.eq.s32.totalorder %v2013, 1
      %vm2045 = vcmp.eq.s32.totalorder %v2014, 1
      %vm2046 = vcmp.eq.s32.totalorder %v2015, 1
      %vm2047 = vcmp.eq.s32.totalorder %v2016, 1
      %vm2048 = vcmp.eq.s32.totalorder %v2017, 1
      %vm2049 = vcmp.eq.s32.totalorder %v2018, 1
      %vm2050 = vcmp.eq.s32.totalorder %v2019, 1
      %vm2051 = vcmp.eq.s32.totalorder %v2020, 1
      %vm2052 = vcmp.eq.s32.totalorder %v2021, 1
      %vm2053 = vcmp.eq.s32.totalorder %v2022, 1
      %vm2054 = vcmp.eq.s32.totalorder %v2023, 1
      %vm2055 = vcmp.eq.s32.totalorder %v2024, 1
      %vm2056 = vcmp.eq.s32.totalorder %v2025, 1
      %vm2057 = vcmp.eq.s32.totalorder %v2026, 1
      %vm2058 = vcmp.eq.s32.totalorder %v2027, 1
      %vm2059 = vcmp.eq.s32.totalorder %v2028, 1
      %vm2060 = vcmp.eq.s32.totalorder %v2029, 1
      %vm2061 = vcmp.eq.s32.totalorder %v2030, 1
      %vm2062 = vcmp.eq.s32.totalorder %v2031, 1
      %vm2063 = vcmp.eq.s32.totalorder %v2032, 1
      %vm2064 = vcmp.eq.s32.totalorder %v2033, 1
      %vm2065 = vcmp.eq.s32.totalorder %v2034, 1
      %vm2066 = vcmp.eq.s32.totalorder %v2035, 1
      %vm2067 = vcmp.eq.s32.totalorder %v2036, 1
      %vm2068 = vcmp.eq.s32.totalorder %v2037, 1
      %vm2069 = vcmp.eq.s32.totalorder %v2038, 1
      %vm2070 = vcmp.eq.s32.totalorder %v2039, 1
      %vm2071 = vcmp.eq.s32.totalorder %v2040, 1
      %vm2072 = vcmp.eq.s32.totalorder %v2041, 1
      %vm2073 = vcmp.eq.s32.totalorder %v2042, 1
      %v2075 = vrot.slane %v392, 1
      %v2076 = vrot.slane %v395, 1
      %v2077 = vsel %vm1557, %v2075, %v2076
      %v2078 = vrot.slane %v400, 1
      %v2079 = vsel %vm1557, %v2076, %v2078
      %v2080 = vrot.slane %v404, 1
      %v2081 = vsel %vm1557, %v2078, %v2080
      %v2082 = vrot.slane %v410, 1
      %v2083 = vsel %vm1557, %v2080, %v2082
      %v2084 = vrot.slane %v414, 1
      %v2085 = vsel %vm1557, %v2082, %v2084
      %v2086 = vrot.slane %v420, 1
      %v2087 = vsel %vm1557, %v2084, %v2086
      %v2088 = vrot.slane %v424, 1
      %v2089 = vsel %vm1557, %v2086, %v2088
      %v2090 = vrot.slane %v430, 1
      %v2091 = vsel %vm1557, %v2088, %v2090
      %v2092 = vrot.slane %v434, 1
      %v2093 = vsel %vm1557, %v2090, %v2092
      %v2094 = vrot.slane %v440, 1
      %v2095 = vsel %vm1557, %v2092, %v2094
      %v2096 = vrot.slane %v444, 1
      %v2097 = vsel %vm1557, %v2094, %v2096
      %v2098 = vrot.slane %v450, 1
      %v2099 = vsel %vm1557, %v2096, %v2098
      %v2100 = vrot.slane %v454, 1
      %v2101 = vsel %vm1557, %v2098, %v2100
      %v2102 = vrot.slane %v460, 1
      %v2103 = vsel %vm1557, %v2100, %v2102
      %v2104 = vrot.slane %v464, 1
      %v2105 = vsel %vm1557, %v2102, %v2104
      %v2106 = vrot.slane %v470, 1
      %v2107 = vsel %vm1557, %v2104, %v2106
      %v2108 = vrot.slane %v474, 1
      %v2109 = vsel %vm1557, %v2106, %v2108
      %v2110 = vrot.slane %v480, 1
      %v2111 = vsel %vm1557, %v2108, %v2110
      %v2112 = vrot.slane %v484, 1
      %v2113 = vsel %vm1557, %v2110, %v2112
      %v2114 = vrot.slane %v490, 1
      %v2115 = vsel %vm1557, %v2112, %v2114
      %v2116 = vrot.slane %v494, 1
      %v2117 = vsel %vm1557, %v2114, %v2116
      %v2118 = vrot.slane %v500, 1
      %v2119 = vsel %vm1557, %v2116, %v2118
      %v2120 = vrot.slane %v504, 1
      %v2121 = vsel %vm1557, %v2118, %v2120
      %v2122 = vrot.slane %v510, 1
      %v2123 = vsel %vm1557, %v2120, %v2122
      %v2124 = vrot.slane %v514, 1
      %v2125 = vsel %vm1557, %v2122, %v2124
      %v2126 = vrot.slane %v520, 1
      %v2127 = vsel %vm1557, %v2124, %v2126
      %v2128 = vrot.slane %v524, 1
      %v2129 = vsel %vm1557, %v2126, %v2128
      %v2130 = vrot.slane %v530, 1
      %v2131 = vsel %vm1557, %v2128, %v2130
      %v2132 = vrot.slane %v534, 1
      %v2133 = vsel %vm1557, %v2130, %v2132
      %v2134 = vrot.slane %v540, 1
      %v2135 = vsel %vm1557, %v2132, %v2134
      %2136 = vrot.lane.b32.xlu0 %v2075, 96
      %v2137 = vpop.permute.xlu0 %2136
      %2138 = vrot.lane.b32.xlu0 %v2077, 96
      %v2139 = vpop.permute.xlu0 %2138
      %2140 = vrot.lane.b32.xlu0 %v2079, 96
      %v2141 = vpop.permute.xlu0 %2140
      %2142 = vrot.lane.b32.xlu0 %v2081, 96
      %v2143 = vpop.permute.xlu0 %2142
      %2144 = vrot.lane.b32.xlu0 %v2083, 96
      %v2145 = vpop.permute.xlu0 %2144
      %2146 = vrot.lane.b32.xlu0 %v2085, 96
      %v2147 = vpop.permute.xlu0 %2146
      %2148 = vrot.lane.b32.xlu0 %v2087, 96
      %v2149 = vpop.permute.xlu0 %2148
      %2150 = vrot.lane.b32.xlu0 %v2089, 96
      %v2151 = vpop.permute.xlu0 %2150
      %2152 = vrot.lane.b32.xlu0 %v2091, 96
      %v2153 = vpop.permute.xlu0 %2152
      %2154 = vrot.lane.b32.xlu0 %v2093, 96
      %v2155 = vpop.permute.xlu0 %2154
      %2156 = vrot.lane.b32.xlu0 %v2095, 96
      %v2157 = vpop.permute.xlu0 %2156
      %2158 = vrot.lane.b32.xlu0 %v2097, 96
      %v2159 = vpop.permute.xlu0 %2158
      %2160 = vrot.lane.b32.xlu0 %v2099, 96
      %v2161 = vpop.permute.xlu0 %2160
      %2162 = vrot.lane.b32.xlu0 %v2101, 96
      %v2163 = vpop.permute.xlu0 %2162
      %2164 = vrot.lane.b32.xlu0 %v2103, 96
      %v2165 = vpop.permute.xlu0 %2164
      %2166 = vrot.lane.b32.xlu0 %v2105, 96
      %v2167 = vpop.permute.xlu0 %2166
      %2168 = vrot.lane.b32.xlu0 %v2107, 96
      %v2169 = vpop.permute.xlu0 %2168
      %2170 = vrot.lane.b32.xlu0 %v2109, 96
      %v2171 = vpop.permute.xlu0 %2170
      %2172 = vrot.lane.b32.xlu0 %v2111, 96
      %v2173 = vpop.permute.xlu0 %2172
      %2174 = vrot.lane.b32.xlu0 %v2113, 96
      %v2175 = vpop.permute.xlu0 %2174
      %2176 = vrot.lane.b32.xlu0 %v2115, 96
      %v2177 = vpop.permute.xlu0 %2176
      %2178 = vrot.lane.b32.xlu0 %v2117, 96
      %v2179 = vpop.permute.xlu0 %2178
      %2180 = vrot.lane.b32.xlu0 %v2119, 96
      %v2181 = vpop.permute.xlu0 %2180
      %2182 = vrot.lane.b32.xlu0 %v2121, 96
      %v2183 = vpop.permute.xlu0 %2182
      %2184 = vrot.lane.b32.xlu0 %v2123, 96
      %v2185 = vpop.permute.xlu0 %2184
      %2186 = vrot.lane.b32.xlu0 %v2125, 96
      %v2187 = vpop.permute.xlu0 %2186
      %2188 = vrot.lane.b32.xlu0 %v2127, 96
      %v2189 = vpop.permute.xlu0 %2188
      %2190 = vrot.lane.b32.xlu0 %v2129, 96
      %v2191 = vpop.permute.xlu0 %2190
      %2192 = vrot.lane.b32.xlu0 %v2131, 96
      %v2193 = vpop.permute.xlu0 %2192
      %2194 = vrot.lane.b32.xlu0 %v2133, 96
      %v2195 = vpop.permute.xlu0 %2194
      %2196 = vrot.lane.b32.xlu0 %v2135, 96
      %v2197 = vpop.permute.xlu0 %2196
      %v2229 = vsel %vm2043, %v2137, 0.0
      %v2230 = vsel %vm2044, %v2139, 0.0
      %v2231 = vsel %vm2045, %v2141, 0.0
      %v2232 = vsel %vm2046, %v2143, 0.0
      %v2233 = vsel %vm2047, %v2145, 0.0
      %v2234 = vsel %vm2048, %v2147, 0.0
      %v2235 = vsel %vm2049, %v2149, 0.0
      %v2236 = vsel %vm2050, %v2151, 0.0
      %v2237 = vsel %vm2051, %v2153, 0.0
      %v2238 = vsel %vm2052, %v2155, 0.0
      %v2239 = vsel %vm2053, %v2157, 0.0
      %v2240 = vsel %vm2054, %v2159, 0.0
      %v2241 = vsel %vm2055, %v2161, 0.0
      %v2242 = vsel %vm2056, %v2163, 0.0
      %v2243 = vsel %vm2057, %v2165, 0.0
      %v2244 = vsel %vm2058, %v2167, 0.0
      %v2245 = vsel %vm2059, %v2169, 0.0
      %v2246 = vsel %vm2060, %v2171, 0.0
      %v2247 = vsel %vm2061, %v2173, 0.0
      %v2248 = vsel %vm2062, %v2175, 0.0
      %v2249 = vsel %vm2063, %v2177, 0.0
      %v2250 = vsel %vm2064, %v2179, 0.0
      %v2251 = vsel %vm2065, %v2181, 0.0
      %v2252 = vsel %vm2066, %v2183, 0.0
      %v2253 = vsel %vm2067, %v2185, 0.0
      %v2254 = vsel %vm2068, %v2187, 0.0
      %v2255 = vsel %vm2069, %v2189, 0.0
      %v2256 = vsel %vm2070, %v2191, 0.0
      %v2257 = vsel %vm2071, %v2193, 0.0
      %v2258 = vsel %vm2072, %v2195, 0.0
      %v2259 = vsel %vm2073, %v2197, 0.0
      %v2260 = vld [vmem:[#allocation2 + $0xf] sm:$0xff]
      %v2261 = vld [vmem:[#allocation2 + $0x17] sm:$0xff]
      %v2262 = vld [vmem:[#allocation2 + $0x1f] sm:$0xff]
      %v2263 = vld [vmem:[#allocation2 + $0x27] sm:$0xff]
      %v2264 = vld [vmem:[#allocation2 + $0x2f] sm:$0xff]
      %v2265 = vld [vmem:[#allocation2 + $0x37] sm:$0xff]
      %v2266 = vld [vmem:[#allocation2 + $0x3f] sm:$0xff]
      %v2267 = vld [vmem:[#allocation2 + $0x47] sm:$0xff]
      %v2268 = vld [vmem:[#allocation2 + $0x4f] sm:$0xff]
      %v2269 = vld [vmem:[#allocation2 + $0x57] sm:$0xff]
      %v2270 = vld [vmem:[#allocation2 + $0x5f] sm:$0xff]
      %v2271 = vld [vmem:[#allocation2 + $0x67] sm:$0xff]
      %v2272 = vld [vmem:[#allocation2 + $0x6f] sm:$0xff]
      %v2273 = vld [vmem:[#allocation2 + $0x77] sm:$0xff]
      %v2274 = vld [vmem:[#allocation2 + $0x7f] sm:$0xff]
      %v2275 = vld [vmem:[#allocation2 + $0x87] sm:$0xff]
      %v2276 = vld [vmem:[#allocation2 + $0x8f] sm:$0xff]
      %v2277 = vld [vmem:[#allocation2 + $0x97] sm:$0xff]
      %v2278 = vld [vmem:[#allocation2 + $0x9f] sm:$0xff]
      %v2279 = vld [vmem:[#allocation2 + $0xa7] sm:$0xff]
      %v2280 = vld [vmem:[#allocation2 + $0xaf] sm:$0xff]
      %v2281 = vld [vmem:[#allocation2 + $0xb7] sm:$0xff]
      %v2282 = vld [vmem:[#allocation2 + $0xbf] sm:$0xff]
      %v2283 = vld [vmem:[#allocation2 + $0xc7] sm:$0xff]
      %v2284 = vld [vmem:[#allocation2 + $0xcf] sm:$0xff]
      %v2285 = vld [vmem:[#allocation2 + $0xd7] sm:$0xff]
      %v2286 = vld [vmem:[#allocation2 + $0xdf] sm:$0xff]
      %v2287 = vld [vmem:[#allocation2 + $0xe7] sm:$0xff]
      %v2288 = vld [vmem:[#allocation2 + $0xef] sm:$0xff]
      %v2289 = vld [vmem:[#allocation2 + $0xf7] sm:$0xff]
      %v2290 = vld [vmem:[#allocation2 + $0xff] sm:$0x1]
      %v2322 = vrot.slane %v2229, 7
      %v2323 = vrot.slane %v2230, 7
      %v2324 = vsel %vm1377, %v2322, %v2323
      %v2325 = vrot.slane %v2231, 7
      %v2326 = vsel %vm1377, %v2323, %v2325
      %v2327 = vrot.slane %v2232, 7
      %v2328 = vsel %vm1377, %v2325, %v2327
      %v2329 = vrot.slane %v2233, 7
      %v2330 = vsel %vm1377, %v2327, %v2329
      %v2331 = vrot.slane %v2234, 7
      %v2332 = vsel %vm1377, %v2329, %v2331
      %v2333 = vrot.slane %v2235, 7
      %v2334 = vsel %vm1377, %v2331, %v2333
      %v2335 = vrot.slane %v2236, 7
      %v2336 = vsel %vm1377, %v2333, %v2335
      %v2337 = vrot.slane %v2237, 7
      %v2338 = vsel %vm1377, %v2335, %v2337
      %v2339 = vrot.slane %v2238, 7
      %v2340 = vsel %vm1377, %v2337, %v2339
      %v2341 = vrot.slane %v2239, 7
      %v2342 = vsel %vm1377, %v2339, %v2341
      %v2343 = vrot.slane %v2240, 7
      %v2344 = vsel %vm1377, %v2341, %v2343
      %v2345 = vrot.slane %v2241, 7
      %v2346 = vsel %vm1377, %v2343, %v2345
      %v2347 = vrot.slane %v2242, 7
      %v2348 = vsel %vm1377, %v2345, %v2347
      %v2349 = vrot.slane %v2243, 7
      %v2350 = vsel %vm1377, %v2347, %v2349
      %v2351 = vrot.slane %v2244, 7
      %v2352 = vsel %vm1377, %v2349, %v2351
      %v2353 = vrot.slane %v2245, 7
      %v2354 = vsel %vm1377, %v2351, %v2353
      %v2355 = vrot.slane %v2246, 7
      %v2356 = vsel %vm1377, %v2353, %v2355
      %v2357 = vrot.slane %v2247, 7
      %v2358 = vsel %vm1377, %v2355, %v2357
      %v2359 = vrot.slane %v2248, 7
      %v2360 = vsel %vm1377, %v2357, %v2359
      %v2361 = vrot.slane %v2249, 7
      %v2362 = vsel %vm1377, %v2359, %v2361
      %v2363 = vrot.slane %v2250, 7
      %v2364 = vsel %vm1377, %v2361, %v2363
      %v2365 = vrot.slane %v2251, 7
      %v2366 = vsel %vm1377, %v2363, %v2365
      %v2367 = vrot.slane %v2252, 7
      %v2368 = vsel %vm1377, %v2365, %v2367
      %v2369 = vrot.slane %v2253, 7
      %v2370 = vsel %vm1377, %v2367, %v2369
      %v2371 = vrot.slane %v2254, 7
      %v2372 = vsel %vm1377, %v2369, %v2371
      %v2373 = vrot.slane %v2255, 7
      %v2374 = vsel %vm1377, %v2371, %v2373
      %v2375 = vrot.slane %v2256, 7
      %v2376 = vsel %vm1377, %v2373, %v2375
      %v2377 = vrot.slane %v2257, 7
      %v2378 = vsel %vm1377, %v2375, %v2377
      %v2379 = vrot.slane %v2258, 7
      %v2380 = vsel %vm1377, %v2377, %v2379
      %v2381 = vrot.slane %v2259, 7
      %v2382 = vsel %vm1377, %v2379, %v2381
      %v2414 = vadd.f32 %v2260, %v2324
      %v2415 = vadd.f32 %v2261, %v2326
      %v2416 = vadd.f32 %v2262, %v2328
      %v2417 = vadd.f32 %v2263, %v2330
      %v2418 = vadd.f32 %v2264, %v2332
      %v2419 = vadd.f32 %v2265, %v2334
      %v2420 = vadd.f32 %v2266, %v2336
      %v2421 = vadd.f32 %v2267, %v2338
      %v2422 = vadd.f32 %v2268, %v2340
      %v2423 = vadd.f32 %v2269, %v2342
      %v2424 = vadd.f32 %v2270, %v2344
      %v2425 = vadd.f32 %v2271, %v2346
      %v2426 = vadd.f32 %v2272, %v2348
      %v2427 = vadd.f32 %v2273, %v2350
      %v2428 = vadd.f32 %v2274, %v2352
      %v2429 = vadd.f32 %v2275, %v2354
      %v2430 = vadd.f32 %v2276, %v2356
      %v2431 = vadd.f32 %v2277, %v2358
      %v2432 = vadd.f32 %v2278, %v2360
      %v2433 = vadd.f32 %v2279, %v2362
      %v2434 = vadd.f32 %v2280, %v2364
      %v2435 = vadd.f32 %v2281, %v2366
      %v2436 = vadd.f32 %v2282, %v2368
      %v2437 = vadd.f32 %v2283, %v2370
      %v2438 = vadd.f32 %v2284, %v2372
      %v2439 = vadd.f32 %v2285, %v2374
      %v2440 = vadd.f32 %v2286, %v2376
      %v2441 = vadd.f32 %v2287, %v2378
      %v2442 = vadd.f32 %v2288, %v2380
      %v2443 = vadd.f32 %v2289, %v2382
      %v2444 = vadd.f32 %v2290, %v2381
      %2445 = vst.msk [vmem:[#allocation2 + $0xf] sm:$0xff] %vm1134, %v2414
      %2446 = vst.msk [vmem:[#allocation2 + $0x17] sm:$0xff] %vm1134, %v2415
      %2447 = vst.msk [vmem:[#allocation2 + $0x1f] sm:$0xff] %vm1134, %v2416
      %2448 = vst.msk [vmem:[#allocation2 + $0x27] sm:$0xff] %vm1134, %v2417
      %2449 = vst.msk [vmem:[#allocation2 + $0x2f] sm:$0xff] %vm1134, %v2418
      %2450 = vst.msk [vmem:[#allocation2 + $0x37] sm:$0xff] %vm1134, %v2419
      %2451 = vst.msk [vmem:[#allocation2 + $0x3f] sm:$0xff] %vm1134, %v2420
      %2452 = vst.msk [vmem:[#allocation2 + $0x47] sm:$0xff] %vm1134, %v2421
      %2453 = vst.msk [vmem:[#allocation2 + $0x4f] sm:$0xff] %vm1134, %v2422
      %2454 = vst.msk [vmem:[#allocation2 + $0x57] sm:$0xff] %vm1134, %v2423
      %2455 = vst.msk [vmem:[#allocation2 + $0x5f] sm:$0xff] %vm1134, %v2424
      %2456 = vst.msk [vmem:[#allocation2 + $0x67] sm:$0xff] %vm1134, %v2425
      %2457 = vst.msk [vmem:[#allocation2 + $0x6f] sm:$0xff] %vm1134, %v2426
      %2458 = vst.msk [vmem:[#allocation2 + $0x77] sm:$0xff] %vm1134, %v2427
      %2459 = vst.msk [vmem:[#allocation2 + $0x7f] sm:$0xff] %vm1134, %v2428
      %2460 = vst.msk [vmem:[#allocation2 + $0x87] sm:$0xff] %vm1134, %v2429
      %2461 = vst.msk [vmem:[#allocation2 + $0x8f] sm:$0xff] %vm1134, %v2430
      %2462 = vst.msk [vmem:[#allocation2 + $0x97] sm:$0xff] %vm1134, %v2431
      %2463 = vst.msk [vmem:[#allocation2 + $0x9f] sm:$0xff] %vm1134, %v2432
      %2464 = vst.msk [vmem:[#allocation2 + $0xa7] sm:$0xff] %vm1134, %v2433
      %2465 = vst.msk [vmem:[#allocation2 + $0xaf] sm:$0xff] %vm1134, %v2434
      %2466 = vst.msk [vmem:[#allocation2 + $0xb7] sm:$0xff] %vm1134, %v2435
      %2467 = vst.msk [vmem:[#allocation2 + $0xbf] sm:$0xff] %vm1134, %v2436
      %2468 = vst.msk [vmem:[#allocation2 + $0xc7] sm:$0xff] %vm1134, %v2437
      %2469 = vst.msk [vmem:[#allocation2 + $0xcf] sm:$0xff] %vm1134, %v2438
      %2470 = vst.msk [vmem:[#allocation2 + $0xd7] sm:$0xff] %vm1134, %v2439
      %2471 = vst.msk [vmem:[#allocation2 + $0xdf] sm:$0xff] %vm1134, %v2440
      %2472 = vst.msk [vmem:[#allocation2 + $0xe7] sm:$0xff] %vm1134, %v2441
      %2473 = vst.msk [vmem:[#allocation2 + $0xef] sm:$0xff] %vm1134, %v2442
      %2474 = vst.msk [vmem:[#allocation2 + $0xf7] sm:$0xff] %vm1134, %v2443
      %vm2475 = vcmask 122880
      %2476 = vst.msk [vmem:[#allocation2 + $0xff] sm:$0x1] %vm2475, %v2444
      %v2477 = vadd.s32 %v933, 4294967295
      %v2478 = vadd.s32 %v934, 4294967295
      %vm2479 = vcmp.ge.s32.totalorder %v2477, 0
      %vm2480 = vcmp.ge.s32.totalorder %v2478, 0
      %vm2481 = vcmp.lt.s32.totalorder %v2477, 16
      %vm2482 = vcmp.lt.s32.totalorder %v2478, 16
      %vm2483 = vmand %vm2479, %vm2481
      %vm2484 = vmand %vm2480, %vm2482
      %v2485 = vsel %vm2483, 1, 0
      %v2486 = vsel %vm2484, 1, 0
      %vm2487 = vcmp.eq.s32.totalorder %v2485, 1
      %vm2488 = vcmp.eq.s32.totalorder %v2486, 1
      %v2490 = vrot.slane %v540, 7
      %v2491 = vsel %vm1377, %v1435, %v2490
      %v2492 = vrot.slane %v544, 7
      %v2493 = vsel %vm1377, %v2490, %v2492
      %2494 = vrot.lane.b32.xlu0 %v1378, 80
      %v2495 = vpop.permute.xlu0 %2494
      %2496 = vrot.lane.b32.xlu0 %v1380, 80
      %v2497 = vpop.permute.xlu0 %2496
      %2498 = vrot.lane.b32.xlu0 %v1382, 80
      %v2499 = vpop.permute.xlu0 %2498
      %2500 = vrot.lane.b32.xlu0 %v1384, 80
      %v2501 = vpop.permute.xlu0 %2500
      %2502 = vrot.lane.b32.xlu0 %v1386, 80
      %v2503 = vpop.permute.xlu0 %2502
      %2504 = vrot.lane.b32.xlu0 %v1388, 80
      %v2505 = vpop.permute.xlu0 %2504
      %2506 = vrot.lane.b32.xlu0 %v1390, 80
      %v2507 = vpop.permute.xlu0 %2506
      %2508 = vrot.lane.b32.xlu0 %v1392, 80
      %v2509 = vpop.permute.xlu0 %2508
      %2510 = vrot.lane.b32.xlu0 %v1394, 80
      %v2511 = vpop.permute.xlu0 %2510
      %2512 = vrot.lane.b32.xlu0 %v1396, 80
      %v2513 = vpop.permute.xlu0 %2512
      %2514 = vrot.lane.b32.xlu0 %v1398, 80
      %v2515 = vpop.permute.xlu0 %2514
      %2516 = vrot.lane.b32.xlu0 %v1400, 80
      %v2517 = vpop.permute.xlu0 %2516
      %2518 = vrot.lane.b32.xlu0 %v1402, 80
      %v2519 = vpop.permute.xlu0 %2518
      %2520 = vrot.lane.b32.xlu0 %v1404, 80
      %v2521 = vpop.permute.xlu0 %2520
      %2522 = vrot.lane.b32.xlu0 %v1406, 80
      %v2523 = vpop.permute.xlu0 %2522
      %2524 = vrot.lane.b32.xlu0 %v1408, 80
      %v2525 = vpop.permute.xlu0 %2524
      %2526 = vrot.lane.b32.xlu0 %v1410, 80
      %v2527 = vpop.permute.xlu0 %2526
      %2528 = vrot.lane.b32.xlu0 %v1412, 80
      %v2529 = vpop.permute.xlu0 %2528
      %2530 = vrot.lane.b32.xlu0 %v1414, 80
      %v2531 = vpop.permute.xlu0 %2530
      %2532 = vrot.lane.b32.xlu0 %v1416, 80
      %v2533 = vpop.permute.xlu0 %2532
      %2534 = vrot.lane.b32.xlu0 %v1418, 80
      %v2535 = vpop.permute.xlu0 %2534
      %2536 = vrot.lane.b32.xlu0 %v1420, 80
      %v2537 = vpop.permute.xlu0 %2536
      %2538 = vrot.lane.b32.xlu0 %v1422, 80
      %v2539 = vpop.permute.xlu0 %2538
      %2540 = vrot.lane.b32.xlu0 %v1424, 80
      %v2541 = vpop.permute.xlu0 %2540
      %2542 = vrot.lane.b32.xlu0 %v1426, 80
      %v2543 = vpop.permute.xlu0 %2542
      %2544 = vrot.lane.b32.xlu0 %v1428, 80
      %v2545 = vpop.permute.xlu0 %2544
      %2546 = vrot.lane.b32.xlu0 %v1430, 80
      %v2547 = vpop.permute.xlu0 %2546
      %2548 = vrot.lane.b32.xlu0 %v1432, 80
      %v2549 = vpop.permute.xlu0 %2548
      %2550 = vrot.lane.b32.xlu0 %v1434, 80
      %v2551 = vpop.permute.xlu0 %2550
      %2552 = vrot.lane.b32.xlu0 %v1436, 80
      %v2553 = vpop.permute.xlu0 %2552
      %2554 = vrot.lane.b32.xlu0 %v2491, 80
      %v2555 = vpop.permute.xlu0 %2554
      %2556 = vrot.lane.b32.xlu0 %v2493, 80
      %v2557 = vpop.permute.xlu0 %2556
      %v2590 = vsel %vm2487, %v2495, 0.0
      %v2591 = vsel %vm2488, %v2497, 0.0
      %v2592 = vsel %vm1317, %v2499, 0.0
      %v2593 = vsel %vm1318, %v2501, 0.0
      %v2594 = vsel %vm1319, %v2503, 0.0
      %v2595 = vsel %vm1320, %v2505, 0.0
      %v2596 = vsel %vm1321, %v2507, 0.0
      %v2597 = vsel %vm1322, %v2509, 0.0
      %v2598 = vsel %vm1323, %v2511, 0.0
      %v2599 = vsel %vm1324, %v2513, 0.0
      %v2600 = vsel %vm1325, %v2515, 0.0
      %v2601 = vsel %vm1326, %v2517, 0.0
      %v2602 = vsel %vm1327, %v2519, 0.0
      %v2603 = vsel %vm1328, %v2521, 0.0
      %v2604 = vsel %vm1329, %v2523, 0.0
      %v2605 = vsel %vm1330, %v2525, 0.0
      %v2606 = vsel %vm1331, %v2527, 0.0
      %v2607 = vsel %vm1332, %v2529, 0.0
      %v2608 = vsel %vm1333, %v2531, 0.0
      %v2609 = vsel %vm1334, %v2533, 0.0
      %v2610 = vsel %vm1335, %v2535, 0.0
      %v2611 = vsel %vm1336, %v2537, 0.0
      %v2612 = vsel %vm1337, %v2539, 0.0
      %v2613 = vsel %vm1338, %v2541, 0.0
      %v2614 = vsel %vm1339, %v2543, 0.0
      %v2615 = vsel %vm1340, %v2545, 0.0
      %v2616 = vsel %vm1341, %v2547, 0.0
      %v2617 = vsel %vm1342, %v2549, 0.0
      %v2618 = vsel %vm1343, %v2551, 0.0
      %v2619 = vsel %vm1344, %v2553, 0.0
      %v2620 = vsel %vm1345, %v2555, 0.0
      %v2621 = vsel %vm1346, %v2557, 0.0
      %v2622 = vld [vmem:[#allocation2 + $0x1] sm:$0xff]
      %v2623 = vld [vmem:[#allocation2 + $0x9] sm:$0xff]
      %v2624 = vld [vmem:[#allocation2 + $0x11] sm:$0xff]
      %v2625 = vld [vmem:[#allocation2 + $0x19] sm:$0xff]
      %v2626 = vld [vmem:[#allocation2 + $0x21] sm:$0xff]
      %v2627 = vld [vmem:[#allocation2 + $0x29] sm:$0xff]
      %v2628 = vld [vmem:[#allocation2 + $0x31] sm:$0xff]
      %v2629 = vld [vmem:[#allocation2 + $0x39] sm:$0xff]
      %v2630 = vld [vmem:[#allocation2 + $0x41] sm:$0xff]
      %v2631 = vld [vmem:[#allocation2 + $0x49] sm:$0xff]
      %v2632 = vld [vmem:[#allocation2 + $0x51] sm:$0xff]
      %v2633 = vld [vmem:[#allocation2 + $0x59] sm:$0xff]
      %v2634 = vld [vmem:[#allocation2 + $0x61] sm:$0xff]
      %v2635 = vld [vmem:[#allocation2 + $0x69] sm:$0xff]
      %v2636 = vld [vmem:[#allocation2 + $0x71] sm:$0xff]
      %v2637 = vld [vmem:[#allocation2 + $0x79] sm:$0xff]
      %v2638 = vld [vmem:[#allocation2 + $0x81] sm:$0xff]
      %v2639 = vld [vmem:[#allocation2 + $0x89] sm:$0xff]
      %v2640 = vld [vmem:[#allocation2 + $0x91] sm:$0xff]
      %v2641 = vld [vmem:[#allocation2 + $0x99] sm:$0xff]
      %v2642 = vld [vmem:[#allocation2 + $0xa1] sm:$0xff]
      %v2643 = vld [vmem:[#allocation2 + $0xa9] sm:$0xff]
      %v2644 = vld [vmem:[#allocation2 + $0xb1] sm:$0xff]
      %v2645 = vld [vmem:[#allocation2 + $0xb9] sm:$0xff]
      %v2646 = vld [vmem:[#allocation2 + $0xc1] sm:$0xff]
      %v2647 = vld [vmem:[#allocation2 + $0xc9] sm:$0xff]
      %v2648 = vld [vmem:[#allocation2 + $0xd1] sm:$0xff]
      %v2649 = vld [vmem:[#allocation2 + $0xd9] sm:$0xff]
      %v2650 = vld [vmem:[#allocation2 + $0xe1] sm:$0xff]
      %v2651 = vld [vmem:[#allocation2 + $0xe9] sm:$0xff]
      %v2652 = vld [vmem:[#allocation2 + $0xf1] sm:$0xff]
      %v2653 = vld [vmem:[#allocation2 + $0xf9] sm:$0x7f]
      %v2686 = vrot.slane %v2590, 1
      %v2687 = vrot.slane %v2591, 1
      %v2688 = vsel %vm1557, %v2686, %v2687
      %v2689 = vrot.slane %v2592, 1
      %v2690 = vsel %vm1557, %v2687, %v2689
      %v2691 = vrot.slane %v2593, 1
      %v2692 = vsel %vm1557, %v2689, %v2691
      %v2693 = vrot.slane %v2594, 1
      %v2694 = vsel %vm1557, %v2691, %v2693
      %v2695 = vrot.slane %v2595, 1
      %v2696 = vsel %vm1557, %v2693, %v2695
      %v2697 = vrot.slane %v2596, 1
      %v2698 = vsel %vm1557, %v2695, %v2697
      %v2699 = vrot.slane %v2597, 1
      %v2700 = vsel %vm1557, %v2697, %v2699
      %v2701 = vrot.slane %v2598, 1
      %v2702 = vsel %vm1557, %v2699, %v2701
      %v2703 = vrot.slane %v2599, 1
      %v2704 = vsel %vm1557, %v2701, %v2703
      %v2705 = vrot.slane %v2600, 1
      %v2706 = vsel %vm1557, %v2703, %v2705
      %v2707 = vrot.slane %v2601, 1
      %v2708 = vsel %vm1557, %v2705, %v2707
      %v2709 = vrot.slane %v2602, 1
      %v2710 = vsel %vm1557, %v2707, %v2709
      %v2711 = vrot.slane %v2603, 1
      %v2712 = vsel %vm1557, %v2709, %v2711
      %v2713 = vrot.slane %v2604, 1
      %v2714 = vsel %vm1557, %v2711, %v2713
      %v2715 = vrot.slane %v2605, 1
      %v2716 = vsel %vm1557, %v2713, %v2715
      %v2717 = vrot.slane %v2606, 1
      %v2718 = vsel %vm1557, %v2715, %v2717
      %v2719 = vrot.slane %v2607, 1
      %v2720 = vsel %vm1557, %v2717, %v2719
      %v2721 = vrot.slane %v2608, 1
      %v2722 = vsel %vm1557, %v2719, %v2721
      %v2723 = vrot.slane %v2609, 1
      %v2724 = vsel %vm1557, %v2721, %v2723
      %v2725 = vrot.slane %v2610, 1
      %v2726 = vsel %vm1557, %v2723, %v2725
      %v2727 = vrot.slane %v2611, 1
      %v2728 = vsel %vm1557, %v2725, %v2727
      %v2729 = vrot.slane %v2612, 1
      %v2730 = vsel %vm1557, %v2727, %v2729
      %v2731 = vrot.slane %v2613, 1
      %v2732 = vsel %vm1557, %v2729, %v2731
      %v2733 = vrot.slane %v2614, 1
      %v2734 = vsel %vm1557, %v2731, %v2733
      %v2735 = vrot.slane %v2615, 1
      %v2736 = vsel %vm1557, %v2733, %v2735
      %v2737 = vrot.slane %v2616, 1
      %v2738 = vsel %vm1557, %v2735, %v2737
      %v2739 = vrot.slane %v2617, 1
      %v2740 = vsel %vm1557, %v2737, %v2739
      %v2741 = vrot.slane %v2618, 1
      %v2742 = vsel %vm1557, %v2739, %v2741
      %v2743 = vrot.slane %v2619, 1
      %v2744 = vsel %vm1557, %v2741, %v2743
      %v2745 = vrot.slane %v2620, 1
      %v2746 = vsel %vm1557, %v2743, %v2745
      %v2747 = vrot.slane %v2621, 1
      %v2748 = vsel %vm1557, %v2745, %v2747
      %v2781 = vadd.f32 %v2622, %v2688
      %v2782 = vadd.f32 %v2623, %v2690
      %v2783 = vadd.f32 %v2624, %v2692
      %v2784 = vadd.f32 %v2625, %v2694
      %v2785 = vadd.f32 %v2626, %v2696
      %v2786 = vadd.f32 %v2627, %v2698
      %v2787 = vadd.f32 %v2628, %v2700
      %v2788 = vadd.f32 %v2629, %v2702
      %v2789 = vadd.f32 %v2630, %v2704
      %v2790 = vadd.f32 %v2631, %v2706
      %v2791 = vadd.f32 %v2632, %v2708
      %v2792 = vadd.f32 %v2633, %v2710
      %v2793 = vadd.f32 %v2634, %v2712
      %v2794 = vadd.f32 %v2635, %v2714
      %v2795 = vadd.f32 %v2636, %v2716
      %v2796 = vadd.f32 %v2637, %v2718
      %v2797 = vadd.f32 %v2638, %v2720
      %v2798 = vadd.f32 %v2639, %v2722
      %v2799 = vadd.f32 %v2640, %v2724
      %v2800 = vadd.f32 %v2641, %v2726
      %v2801 = vadd.f32 %v2642, %v2728
      %v2802 = vadd.f32 %v2643, %v2730
      %v2803 = vadd.f32 %v2644, %v2732
      %v2804 = vadd.f32 %v2645, %v2734
      %v2805 = vadd.f32 %v2646, %v2736
      %v2806 = vadd.f32 %v2647, %v2738
      %v2807 = vadd.f32 %v2648, %v2740
      %v2808 = vadd.f32 %v2649, %v2742
      %v2809 = vadd.f32 %v2650, %v2744
      %v2810 = vadd.f32 %v2651, %v2746
      %v2811 = vadd.f32 %v2652, %v2748
      %v2812 = vadd.f32 %v2653, %v2747
      %2813 = vst.msk [vmem:[#allocation2 + $0x1] sm:$0xff] %vm1134, %v2781
      %2814 = vst.msk [vmem:[#allocation2 + $0x9] sm:$0xff] %vm1134, %v2782
      %2815 = vst.msk [vmem:[#allocation2 + $0x11] sm:$0xff] %vm1134, %v2783
      %2816 = vst.msk [vmem:[#allocation2 + $0x19] sm:$0xff] %vm1134, %v2784
      %2817 = vst.msk [vmem:[#allocation2 + $0x21] sm:$0xff] %vm1134, %v2785
      %2818 = vst.msk [vmem:[#allocation2 + $0x29] sm:$0xff] %vm1134, %v2786
      %2819 = vst.msk [vmem:[#allocation2 + $0x31] sm:$0xff] %vm1134, %v2787
      %2820 = vst.msk [vmem:[#allocation2 + $0x39] sm:$0xff] %vm1134, %v2788
      %2821 = vst.msk [vmem:[#allocation2 + $0x41] sm:$0xff] %vm1134, %v2789
      %2822 = vst.msk [vmem:[#allocation2 + $0x49] sm:$0xff] %vm1134, %v2790
      %2823 = vst.msk [vmem:[#allocation2 + $0x51] sm:$0xff] %vm1134, %v2791
      %2824 = vst.msk [vmem:[#allocation2 + $0x59] sm:$0xff] %vm1134, %v2792
      %2825 = vst.msk [vmem:[#allocation2 + $0x61] sm:$0xff] %vm1134, %v2793
      %2826 = vst.msk [vmem:[#allocation2 + $0x69] sm:$0xff] %vm1134, %v2794
      %2827 = vst.msk [vmem:[#allocation2 + $0x71] sm:$0xff] %vm1134, %v2795
      %2828 = vst.msk [vmem:[#allocation2 + $0x79] sm:$0xff] %vm1134, %v2796
      %2829 = vst.msk [vmem:[#allocation2 + $0x81] sm:$0xff] %vm1134, %v2797
      %2830 = vst.msk [vmem:[#allocation2 + $0x89] sm:$0xff] %vm1134, %v2798
      %2831 = vst.msk [vmem:[#allocation2 + $0x91] sm:$0xff] %vm1134, %v2799
      %2832 = vst.msk [vmem:[#allocation2 + $0x99] sm:$0xff] %vm1134, %v2800
      %2833 = vst.msk [vmem:[#allocation2 + $0xa1] sm:$0xff] %vm1134, %v2801
      %2834 = vst.msk [vmem:[#allocation2 + $0xa9] sm:$0xff] %vm1134, %v2802
      %2835 = vst.msk [vmem:[#allocation2 + $0xb1] sm:$0xff] %vm1134, %v2803
      %2836 = vst.msk [vmem:[#allocation2 + $0xb9] sm:$0xff] %vm1134, %v2804
      %2837 = vst.msk [vmem:[#allocation2 + $0xc1] sm:$0xff] %vm1134, %v2805
      %2838 = vst.msk [vmem:[#allocation2 + $0xc9] sm:$0xff] %vm1134, %v2806
      %2839 = vst.msk [vmem:[#allocation2 + $0xd1] sm:$0xff] %vm1134, %v2807
      %2840 = vst.msk [vmem:[#allocation2 + $0xd9] sm:$0xff] %vm1134, %v2808
      %2841 = vst.msk [vmem:[#allocation2 + $0xe1] sm:$0xff] %vm1134, %v2809
      %2842 = vst.msk [vmem:[#allocation2 + $0xe9] sm:$0xff] %vm1134, %v2810
      %2843 = vst.msk [vmem:[#allocation2 + $0xf1] sm:$0xff] %vm1134, %v2811
      %2844 = vst.msk [vmem:[#allocation2 + $0xf9] sm:$0x7f] %vm1706, %v2812
      %v2845 = vadd.s32 %v933, 1
      %vm2846 = vcmp.ge.s32.totalorder %v2845, 0
      %vm2847 = vcmp.lt.s32.totalorder %v2845, 16
      %vm2848 = vmand %vm2846, %vm2847
      %v2849 = vsel %vm2848, 1, 0
      %vm2850 = vcmp.eq.s32.totalorder %v2849, 1
      %v2851 = vrot.slane %v544, 1
      %v2852 = vsel %vm1557, %v2134, %v2851
      %2853 = vrot.lane.b32.xlu0 %v2077, 48
      %v2854 = vpop.permute.xlu0 %2853
      %2855 = vrot.lane.b32.xlu0 %v2079, 48
      %v2856 = vpop.permute.xlu0 %2855
      %2857 = vrot.lane.b32.xlu0 %v2081, 48
      %v2858 = vpop.permute.xlu0 %2857
      %2859 = vrot.lane.b32.xlu0 %v2083, 48
      %v2860 = vpop.permute.xlu0 %2859
      %2861 = vrot.lane.b32.xlu0 %v2085, 48
      %v2862 = vpop.permute.xlu0 %2861
      %2863 = vrot.lane.b32.xlu0 %v2087, 48
      %v2864 = vpop.permute.xlu0 %2863
      %2865 = vrot.lane.b32.xlu0 %v2089, 48
      %v2866 = vpop.permute.xlu0 %2865
      %2867 = vrot.lane.b32.xlu0 %v2091, 48
      %v2868 = vpop.permute.xlu0 %2867
      %2869 = vrot.lane.b32.xlu0 %v2093, 48
      %v2870 = vpop.permute.xlu0 %2869
      %2871 = vrot.lane.b32.xlu0 %v2095, 48
      %v2872 = vpop.permute.xlu0 %2871
      %2873 = vrot.lane.b32.xlu0 %v2097, 48
      %v2874 = vpop.permute.xlu0 %2873
      %2875 = vrot.lane.b32.xlu0 %v2099, 48
      %v2876 = vpop.permute.xlu0 %2875
      %2877 = vrot.lane.b32.xlu0 %v2101, 48
      %v2878 = vpop.permute.xlu0 %2877
      %2879 = vrot.lane.b32.xlu0 %v2103, 48
      %v2880 = vpop.permute.xlu0 %2879
      %2881 = vrot.lane.b32.xlu0 %v2105, 48
      %v2882 = vpop.permute.xlu0 %2881
      %2883 = vrot.lane.b32.xlu0 %v2107, 48
      %v2884 = vpop.permute.xlu0 %2883
      %2885 = vrot.lane.b32.xlu0 %v2109, 48
      %v2886 = vpop.permute.xlu0 %2885
      %2887 = vrot.lane.b32.xlu0 %v2111, 48
      %v2888 = vpop.permute.xlu0 %2887
      %2889 = vrot.lane.b32.xlu0 %v2113, 48
      %v2890 = vpop.permute.xlu0 %2889
      %2891 = vrot.lane.b32.xlu0 %v2115, 48
      %v2892 = vpop.permute.xlu0 %2891
      %2893 = vrot.lane.b32.xlu0 %v2117, 48
      %v2894 = vpop.permute.xlu0 %2893
      %2895 = vrot.lane.b32.xlu0 %v2119, 48
      %v2896 = vpop.permute.xlu0 %2895
      %2897 = vrot.lane.b32.xlu0 %v2121, 48
      %v2898 = vpop.permute.xlu0 %2897
      %2899 = vrot.lane.b32.xlu0 %v2123, 48
      %v2900 = vpop.permute.xlu0 %2899
      %2901 = vrot.lane.b32.xlu0 %v2125, 48
      %v2902 = vpop.permute.xlu0 %2901
      %2903 = vrot.lane.b32.xlu0 %v2127, 48
      %v2904 = vpop.permute.xlu0 %2903
      %2905 = vrot.lane.b32.xlu0 %v2129, 48
      %v2906 = vpop.permute.xlu0 %2905
      %2907 = vrot.lane.b32.xlu0 %v2131, 48
      %v2908 = vpop.permute.xlu0 %2907
      %2909 = vrot.lane.b32.xlu0 %v2133, 48
      %v2910 = vpop.permute.xlu0 %2909
      %2911 = vrot.lane.b32.xlu0 %v2135, 48
      %v2912 = vpop.permute.xlu0 %2911
      %2913 = vrot.lane.b32.xlu0 %v2852, 48
      %v2914 = vpop.permute.xlu0 %2913
      %2915 = vrot.lane.b32.xlu0 %v2851, 48
      %v2916 = vpop.permute.xlu0 %2915
      %v2949 = vsel %vm2850, %v2854, 0.0
      %v2950 = vsel %vm2043, %v2856, 0.0
      %v2951 = vsel %vm2044, %v2858, 0.0
      %v2952 = vsel %vm2045, %v2860, 0.0
      %v2953 = vsel %vm2046, %v2862, 0.0
      %v2954 = vsel %vm2047, %v2864, 0.0
      %v2955 = vsel %vm2048, %v2866, 0.0
      %v2956 = vsel %vm2049, %v2868, 0.0
      %v2957 = vsel %vm2050, %v2870, 0.0
      %v2958 = vsel %vm2051, %v2872, 0.0
      %v2959 = vsel %vm2052, %v2874, 0.0
      %v2960 = vsel %vm2053, %v2876, 0.0
      %v2961 = vsel %vm2054, %v2878, 0.0
      %v2962 = vsel %vm2055, %v2880, 0.0
      %v2963 = vsel %vm2056, %v2882, 0.0
      %v2964 = vsel %vm2057, %v2884, 0.0
      %v2965 = vsel %vm2058, %v2886, 0.0
      %v2966 = vsel %vm2059, %v2888, 0.0
      %v2967 = vsel %vm2060, %v2890, 0.0
      %v2968 = vsel %vm2061, %v2892, 0.0
      %v2969 = vsel %vm2062, %v2894, 0.0
      %v2970 = vsel %vm2063, %v2896, 0.0
      %v2971 = vsel %vm2064, %v2898, 0.0
      %v2972 = vsel %vm2065, %v2900, 0.0
      %v2973 = vsel %vm2066, %v2902, 0.0
      %v2974 = vsel %vm2067, %v2904, 0.0
      %v2975 = vsel %vm2068, %v2906, 0.0
      %v2976 = vsel %vm2069, %v2908, 0.0
      %v2977 = vsel %vm2070, %v2910, 0.0
      %v2978 = vsel %vm2071, %v2912, 0.0
      %v2979 = vsel %vm2072, %v2914, 0.0
      %v2980 = vsel %vm2073, %v2916, 0.0
      %v2981 = vld [vmem:[#allocation2] sm:$0xff]
      %v2982 = vld [vmem:[#allocation2 + $0x8] sm:$0xff]
      %v2983 = vld [vmem:[#allocation2 + $0x10] sm:$0xff]
      %v2984 = vld [vmem:[#allocation2 + $0x18] sm:$0xff]
      %v2985 = vld [vmem:[#allocation2 + $0x20] sm:$0xff]
      %v2986 = vld [vmem:[#allocation2 + $0x28] sm:$0xff]
      %v2987 = vld [vmem:[#allocation2 + $0x30] sm:$0xff]
      %v2988 = vld [vmem:[#allocation2 + $0x38] sm:$0xff]
      %v2989 = vld [vmem:[#allocation2 + $0x40] sm:$0xff]
      %v2990 = vld [vmem:[#allocation2 + $0x48] sm:$0xff]
      %v2991 = vld [vmem:[#allocation2 + $0x50] sm:$0xff]
      %v2992 = vld [vmem:[#allocation2 + $0x58] sm:$0xff]
      %v2993 = vld [vmem:[#allocation2 + $0x60] sm:$0xff]
      %v2994 = vld [vmem:[#allocation2 + $0x68] sm:$0xff]
      %v2995 = vld [vmem:[#allocation2 + $0x70] sm:$0xff]
      %v2996 = vld [vmem:[#allocation2 + $0x78] sm:$0xff]
      %v2997 = vld [vmem:[#allocation2 + $0x80] sm:$0xff]
      %v2998 = vld [vmem:[#allocation2 + $0x88] sm:$0xff]
      %v2999 = vld [vmem:[#allocation2 + $0x90] sm:$0xff]
      %v3000 = vld [vmem:[#allocation2 + $0x98] sm:$0xff]
      %v3001 = vld [vmem:[#allocation2 + $0xa0] sm:$0xff]
      %v3002 = vld [vmem:[#allocation2 + $0xa8] sm:$0xff]
      %v3003 = vld [vmem:[#allocation2 + $0xb0] sm:$0xff]
      %v3004 = vld [vmem:[#allocation2 + $0xb8] sm:$0xff]
      %v3005 = vld [vmem:[#allocation2 + $0xc0] sm:$0xff]
      %v3006 = vld [vmem:[#allocation2 + $0xc8] sm:$0xff]
      %v3007 = vld [vmem:[#allocation2 + $0xd0] sm:$0xff]
      %v3008 = vld [vmem:[#allocation2 + $0xd8] sm:$0xff]
      %v3009 = vld [vmem:[#allocation2 + $0xe0] sm:$0xff]
      %v3010 = vld [vmem:[#allocation2 + $0xe8] sm:$0xff]
      %v3011 = vld [vmem:[#allocation2 + $0xf0] sm:$0xff]
      %v3012 = vld [vmem:[#allocation2 + $0xf8] sm:$0x7f]
      %v3013 = vadd.f32 %v2981, %v2949
      %v3014 = vadd.f32 %v2982, %v2950
      %v3015 = vadd.f32 %v2983, %v2951
      %v3016 = vadd.f32 %v2984, %v2952
      %v3017 = vadd.f32 %v2985, %v2953
      %v3018 = vadd.f32 %v2986, %v2954
      %v3019 = vadd.f32 %v2987, %v2955
      %v3020 = vadd.f32 %v2988, %v2956
      %v3021 = vadd.f32 %v2989, %v2957
      %v3022 = vadd.f32 %v2990, %v2958
      %v3023 = vadd.f32 %v2991, %v2959
      %v3024 = vadd.f32 %v2992, %v2960
      %v3025 = vadd.f32 %v2993, %v2961
      %v3026 = vadd.f32 %v2994, %v2962
      %v3027 = vadd.f32 %v2995, %v2963
      %v3028 = vadd.f32 %v2996, %v2964
      %v3029 = vadd.f32 %v2997, %v2965
      %v3030 = vadd.f32 %v2998, %v2966
      %v3031 = vadd.f32 %v2999, %v2967
      %v3032 = vadd.f32 %v3000, %v2968
      %v3033 = vadd.f32 %v3001, %v2969
      %v3034 = vadd.f32 %v3002, %v2970
      %v3035 = vadd.f32 %v3003, %v2971
      %v3036 = vadd.f32 %v3004, %v2972
      %v3037 = vadd.f32 %v3005, %v2973
      %v3038 = vadd.f32 %v3006, %v2974
      %v3039 = vadd.f32 %v3007, %v2975
      %v3040 = vadd.f32 %v3008, %v2976
      %v3041 = vadd.f32 %v3009, %v2977
      %v3042 = vadd.f32 %v3010, %v2978
      %v3043 = vadd.f32 %v3011, %v2979
      %v3044 = vadd.f32 %v3012, %v2980
      %3045 = vst.msk [vmem:[#allocation2] sm:$0xff] %vm1134, %v3013
      %3046 = vst.msk [vmem:[#allocation2 + $0x8] sm:$0xff] %vm1134, %v3014
      %3047 = vst.msk [vmem:[#allocation2 + $0x10] sm:$0xff] %vm1134, %v3015
      %3048 = vst.msk [vmem:[#allocation2 + $0x18] sm:$0xff] %vm1134, %v3016
      %3049 = vst.msk [vmem:[#allocation2 + $0x20] sm:$0xff] %vm1134, %v3017
      %3050 = vst.msk [vmem:[#allocation2 + $0x28] sm:$0xff] %vm1134, %v3018
      %3051 = vst.msk [vmem:[#allocation2 + $0x30] sm:$0xff] %vm1134, %v3019
      %3052 = vst.msk [vmem:[#allocation2 + $0x38] sm:$0xff] %vm1134, %v3020
      %3053 = vst.msk [vmem:[#allocation2 + $0x40] sm:$0xff] %vm1134, %v3021
      %3054 = vst.msk [vmem:[#allocation2 + $0x48] sm:$0xff] %vm1134, %v3022
      %3055 = vst.msk [vmem:[#allocation2 + $0x50] sm:$0xff] %vm1134, %v3023
      %3056 = vst.msk [vmem:[#allocation2 + $0x58] sm:$0xff] %vm1134, %v3024
      %3057 = vst.msk [vmem:[#allocation2 + $0x60] sm:$0xff] %vm1134, %v3025
      %3058 = vst.msk [vmem:[#allocation2 + $0x68] sm:$0xff] %vm1134, %v3026
      %3059 = vst.msk [vmem:[#allocation2 + $0x70] sm:$0xff] %vm1134, %v3027
      %3060 = vst.msk [vmem:[#allocation2 + $0x78] sm:$0xff] %vm1134, %v3028
      %3061 = vst.msk [vmem:[#allocation2 + $0x80] sm:$0xff] %vm1134, %v3029
      %3062 = vst.msk [vmem:[#allocation2 + $0x88] sm:$0xff] %vm1134, %v3030
      %3063 = vst.msk [vmem:[#allocation2 + $0x90] sm:$0xff] %vm1134, %v3031
      %3064 = vst.msk [vmem:[#allocation2 + $0x98] sm:$0xff] %vm1134, %v3032
      %3065 = vst.msk [vmem:[#allocation2 + $0xa0] sm:$0xff] %vm1134, %v3033
      %3066 = vst.msk [vmem:[#allocation2 + $0xa8] sm:$0xff] %vm1134, %v3034
      %3067 = vst.msk [vmem:[#allocation2 + $0xb0] sm:$0xff] %vm1134, %v3035
      %3068 = vst.msk [vmem:[#allocation2 + $0xb8] sm:$0xff] %vm1134, %v3036
      %3069 = vst.msk [vmem:[#allocation2 + $0xc0] sm:$0xff] %vm1134, %v3037
      %3070 = vst.msk [vmem:[#allocation2 + $0xc8] sm:$0xff] %vm1134, %v3038
      %3071 = vst.msk [vmem:[#allocation2 + $0xd0] sm:$0xff] %vm1134, %v3039
      %3072 = vst.msk [vmem:[#allocation2 + $0xd8] sm:$0xff] %vm1134, %v3040
      %3073 = vst.msk [vmem:[#allocation2 + $0xe0] sm:$0xff] %vm1134, %v3041
      %3074 = vst.msk [vmem:[#allocation2 + $0xe8] sm:$0xff] %vm1134, %v3042
      %3075 = vst.msk [vmem:[#allocation2 + $0xf0] sm:$0xff] %vm1134, %v3043
      %3076 = vst.msk [vmem:[#allocation2 + $0xf8] sm:$0x7f] %vm1706, %v3044
      %3077 = vrot.lane.b32.xlu0 %v1382, 32
      %v3078 = vpop.permute.xlu0 %3077
      %3079 = vrot.lane.b32.xlu0 %v1384, 32
      %v3080 = vpop.permute.xlu0 %3079
      %3081 = vrot.lane.b32.xlu0 %v1386, 32
      %v3082 = vpop.permute.xlu0 %3081
      %3083 = vrot.lane.b32.xlu0 %v1388, 32
      %v3084 = vpop.permute.xlu0 %3083
      %3085 = vrot.lane.b32.xlu0 %v1390, 32
      %v3086 = vpop.permute.xlu0 %3085
      %3087 = vrot.lane.b32.xlu0 %v1392, 32
      %v3088 = vpop.permute.xlu0 %3087
      %3089 = vrot.lane.b32.xlu0 %v1394, 32
      %v3090 = vpop.permute.xlu0 %3089
      %3091 = vrot.lane.b32.xlu0 %v1396, 32
      %v3092 = vpop.permute.xlu0 %3091
      %3093 = vrot.lane.b32.xlu0 %v1398, 32
      %v3094 = vpop.permute.xlu0 %3093
      %3095 = vrot.lane.b32.xlu0 %v1400, 32
      %v3096 = vpop.permute.xlu0 %3095
      %3097 = vrot.lane.b32.xlu0 %v1402, 32
      %v3098 = vpop.permute.xlu0 %3097
      %3099 = vrot.lane.b32.xlu0 %v1404, 32
      %v3100 = vpop.permute.xlu0 %3099
      %3101 = vrot.lane.b32.xlu0 %v1406, 32
      %v3102 = vpop.permute.xlu0 %3101
      %3103 = vrot.lane.b32.xlu0 %v1408, 32
      %v3104 = vpop.permute.xlu0 %3103
      %3105 = vrot.lane.b32.xlu0 %v1410, 32
      %v3106 = vpop.permute.xlu0 %3105
      %3107 = vrot.lane.b32.xlu0 %v1412, 32
      %v3108 = vpop.permute.xlu0 %3107
      %3109 = vrot.lane.b32.xlu0 %v1414, 32
      %v3110 = vpop.permute.xlu0 %3109
      %3111 = vrot.lane.b32.xlu0 %v1416, 32
      %v3112 = vpop.permute.xlu0 %3111
      %3113 = vrot.lane.b32.xlu0 %v1418, 32
      %v3114 = vpop.permute.xlu0 %3113
      %3115 = vrot.lane.b32.xlu0 %v1420, 32
      %v3116 = vpop.permute.xlu0 %3115
      %3117 = vrot.lane.b32.xlu0 %v1422, 32
      %v3118 = vpop.permute.xlu0 %3117
      %3119 = vrot.lane.b32.xlu0 %v1424, 32
      %v3120 = vpop.permute.xlu0 %3119
      %3121 = vrot.lane.b32.xlu0 %v1426, 32
      %v3122 = vpop.permute.xlu0 %3121
      %3123 = vrot.lane.b32.xlu0 %v1428, 32
      %v3124 = vpop.permute.xlu0 %3123
      %3125 = vrot.lane.b32.xlu0 %v1430, 32
      %v3126 = vpop.permute.xlu0 %3125
      %3127 = vrot.lane.b32.xlu0 %v1432, 32
      %v3128 = vpop.permute.xlu0 %3127
      %3129 = vrot.lane.b32.xlu0 %v1434, 32
      %v3130 = vpop.permute.xlu0 %3129
      %3131 = vrot.lane.b32.xlu0 %v1436, 32
      %v3132 = vpop.permute.xlu0 %3131
      %3133 = vrot.lane.b32.xlu0 %v2491, 32
      %v3134 = vpop.permute.xlu0 %3133
      %3135 = vrot.lane.b32.xlu0 %v2493, 32
      %v3136 = vpop.permute.xlu0 %3135
      %3137 = vrot.lane.b32.xlu0 %v2492, 32
      %v3138 = vpop.permute.xlu0 %3137
      %v3170 = vsel %vm2487, %v3078, 0.0
      %v3171 = vsel %vm2488, %v3080, 0.0
      %v3172 = vsel %vm1317, %v3082, 0.0
      %v3173 = vsel %vm1318, %v3084, 0.0
      %v3174 = vsel %vm1319, %v3086, 0.0
      %v3175 = vsel %vm1320, %v3088, 0.0
      %v3176 = vsel %vm1321, %v3090, 0.0
      %v3177 = vsel %vm1322, %v3092, 0.0
      %v3178 = vsel %vm1323, %v3094, 0.0
      %v3179 = vsel %vm1324, %v3096, 0.0
      %v3180 = vsel %vm1325, %v3098, 0.0
      %v3181 = vsel %vm1326, %v3100, 0.0
      %v3182 = vsel %vm1327, %v3102, 0.0
      %v3183 = vsel %vm1328, %v3104, 0.0
      %v3184 = vsel %vm1329, %v3106, 0.0
      %v3185 = vsel %vm1330, %v3108, 0.0
      %v3186 = vsel %vm1331, %v3110, 0.0
      %v3187 = vsel %vm1332, %v3112, 0.0
      %v3188 = vsel %vm1333, %v3114, 0.0
      %v3189 = vsel %vm1334, %v3116, 0.0
      %v3190 = vsel %vm1335, %v3118, 0.0
      %v3191 = vsel %vm1336, %v3120, 0.0
      %v3192 = vsel %vm1337, %v3122, 0.0
      %v3193 = vsel %vm1338, %v3124, 0.0
      %v3194 = vsel %vm1339, %v3126, 0.0
      %v3195 = vsel %vm1340, %v3128, 0.0
      %v3196 = vsel %vm1341, %v3130, 0.0
      %v3197 = vsel %vm1342, %v3132, 0.0
      %v3198 = vsel %vm1343, %v3134, 0.0
      %v3199 = vsel %vm1344, %v3136, 0.0
      %v3200 = vsel %vm1345, %v3138, 0.0
      %v3201 = vld [vmem:[#allocation2] sm:$0xff]
      %v3202 = vld [vmem:[#allocation2 + $0x8] sm:$0xff]
      %v3203 = vld [vmem:[#allocation2 + $0x10] sm:$0xff]
      %v3204 = vld [vmem:[#allocation2 + $0x18] sm:$0xff]
      %v3205 = vld [vmem:[#allocation2 + $0x20] sm:$0xff]
      %v3206 = vld [vmem:[#allocation2 + $0x28] sm:$0xff]
      %v3207 = vld [vmem:[#allocation2 + $0x30] sm:$0xff]
      %v3208 = vld [vmem:[#allocation2 + $0x38] sm:$0xff]
      %v3209 = vld [vmem:[#allocation2 + $0x40] sm:$0xff]
      %v3210 = vld [vmem:[#allocation2 + $0x48] sm:$0xff]
      %v3211 = vld [vmem:[#allocation2 + $0x50] sm:$0xff]
      %v3212 = vld [vmem:[#allocation2 + $0x58] sm:$0xff]
      %v3213 = vld [vmem:[#allocation2 + $0x60] sm:$0xff]
      %v3214 = vld [vmem:[#allocation2 + $0x68] sm:$0xff]
      %v3215 = vld [vmem:[#allocation2 + $0x70] sm:$0xff]
      %v3216 = vld [vmem:[#allocation2 + $0x78] sm:$0xff]
      %v3217 = vld [vmem:[#allocation2 + $0x80] sm:$0xff]
      %v3218 = vld [vmem:[#allocation2 + $0x88] sm:$0xff]
      %v3219 = vld [vmem:[#allocation2 + $0x90] sm:$0xff]
      %v3220 = vld [vmem:[#allocation2 + $0x98] sm:$0xff]
      %v3221 = vld [vmem:[#allocation2 + $0xa0] sm:$0xff]
      %v3222 = vld [vmem:[#allocation2 + $0xa8] sm:$0xff]
      %v3223 = vld [vmem:[#allocation2 + $0xb0] sm:$0xff]
      %v3224 = vld [vmem:[#allocation2 + $0xb8] sm:$0xff]
      %v3225 = vld [vmem:[#allocation2 + $0xc0] sm:$0xff]
      %v3226 = vld [vmem:[#allocation2 + $0xc8] sm:$0xff]
      %v3227 = vld [vmem:[#allocation2 + $0xd0] sm:$0xff]
      %v3228 = vld [vmem:[#allocation2 + $0xd8] sm:$0xff]
      %v3229 = vld [vmem:[#allocation2 + $0xe0] sm:$0xff]
      %v3230 = vld [vmem:[#allocation2 + $0xe8] sm:$0xff]
      %v3231 = vld [vmem:[#allocation2 + $0xf0] sm:$0x1]
      %v3232 = vadd.f32 %v3201, %v3170
      %v3233 = vadd.f32 %v3202, %v3171
      %v3234 = vadd.f32 %v3203, %v3172
      %v3235 = vadd.f32 %v3204, %v3173
      %v3236 = vadd.f32 %v3205, %v3174
      %v3237 = vadd.f32 %v3206, %v3175
      %v3238 = vadd.f32 %v3207, %v3176
      %v3239 = vadd.f32 %v3208, %v3177
      %v3240 = vadd.f32 %v3209, %v3178
      %v3241 = vadd.f32 %v3210, %v3179
      %v3242 = vadd.f32 %v3211, %v3180
      %v3243 = vadd.f32 %v3212, %v3181
      %v3244 = vadd.f32 %v3213, %v3182
      %v3245 = vadd.f32 %v3214, %v3183
      %v3246 = vadd.f32 %v3215, %v3184
      %v3247 = vadd.f32 %v3216, %v3185
      %v3248 = vadd.f32 %v3217, %v3186
      %v3249 = vadd.f32 %v3218, %v3187
      %v3250 = vadd.f32 %v3219, %v3188
      %v3251 = vadd.f32 %v3220, %v3189
      %v3252 = vadd.f32 %v3221, %v3190
      %v3253 = vadd.f32 %v3222, %v3191
      %v3254 = vadd.f32 %v3223, %v3192
      %v3255 = vadd.f32 %v3224, %v3193
      %v3256 = vadd.f32 %v3225, %v3194
      %v3257 = vadd.f32 %v3226, %v3195
      %v3258 = vadd.f32 %v3227, %v3196
      %v3259 = vadd.f32 %v3228, %v3197
      %v3260 = vadd.f32 %v3229, %v3198
      %v3261 = vadd.f32 %v3230, %v3199
      %v3262 = vadd.f32 %v3231, %v3200
      %3263 = vst.msk [vmem:[#allocation2] sm:$0xff] %vm1134, %v3232
      %3264 = vst.msk [vmem:[#allocation2 + $0x8] sm:$0xff] %vm1134, %v3233
      %3265 = vst.msk [vmem:[#allocation2 + $0x10] sm:$0xff] %vm1134, %v3234
      %3266 = vst.msk [vmem:[#allocation2 + $0x18] sm:$0xff] %vm1134, %v3235
      %3267 = vst.msk [vmem:[#allocation2 + $0x20] sm:$0xff] %vm1134, %v3236
      %3268 = vst.msk [vmem:[#allocation2 + $0x28] sm:$0xff] %vm1134, %v3237
      %3269 = vst.msk [vmem:[#allocation2 + $0x30] sm:$0xff] %vm1134, %v3238
      %3270 = vst.msk [vmem:[#allocation2 + $0x38] sm:$0xff] %vm1134, %v3239
      %3271 = vst.msk [vmem:[#allocation2 + $0x40] sm:$0xff] %vm1134, %v3240
      %3272 = vst.msk [vmem:[#allocation2 + $0x48] sm:$0xff] %vm1134, %v3241
      %3273 = vst.msk [vmem:[#allocation2 + $0x50] sm:$0xff] %vm1134, %v3242
      %3274 = vst.msk [vmem:[#allocation2 + $0x58] sm:$0xff] %vm1134, %v3243
      %3275 = vst.msk [vmem:[#allocation2 + $0x60] sm:$0xff] %vm1134, %v3244
      %3276 = vst.msk [vmem:[#allocation2 + $0x68] sm:$0xff] %vm1134, %v3245
      %3277 = vst.msk [vmem:[#allocation2 + $0x70] sm:$0xff] %vm1134, %v3246
      %3278 = vst.msk [vmem:[#allocation2 + $0x78] sm:$0xff] %vm1134, %v3247
      %3279 = vst.msk [vmem:[#allocation2 + $0x80] sm:$0xff] %vm1134, %v3248
      %3280 = vst.msk [vmem:[#allocation2 + $0x88] sm:$0xff] %vm1134, %v3249
      %3281 = vst.msk [vmem:[#allocation2 + $0x90] sm:$0xff] %vm1134, %v3250
      %3282 = vst.msk [vmem:[#allocation2 + $0x98] sm:$0xff] %vm1134, %v3251
      %3283 = vst.msk [vmem:[#allocation2 + $0xa0] sm:$0xff] %vm1134, %v3252
      %3284 = vst.msk [vmem:[#allocation2 + $0xa8] sm:$0xff] %vm1134, %v3253
      %3285 = vst.msk [vmem:[#allocation2 + $0xb0] sm:$0xff] %vm1134, %v3254
      %3286 = vst.msk [vmem:[#allocation2 + $0xb8] sm:$0xff] %vm1134, %v3255
      %3287 = vst.msk [vmem:[#allocation2 + $0xc0] sm:$0xff] %vm1134, %v3256
      %3288 = vst.msk [vmem:[#allocation2 + $0xc8] sm:$0xff] %vm1134, %v3257
      %3289 = vst.msk [vmem:[#allocation2 + $0xd0] sm:$0xff] %vm1134, %v3258
      %3290 = vst.msk [vmem:[#allocation2 + $0xd8] sm:$0xff] %vm1134, %v3259
      %3291 = vst.msk [vmem:[#allocation2 + $0xe0] sm:$0xff] %vm1134, %v3260
      %3292 = vst.msk [vmem:[#allocation2 + $0xe8] sm:$0xff] %vm1134, %v3261
      %3293 = vst.msk [vmem:[#allocation2 + $0xf0] sm:$0x1] %vm2475, %v3262
      %v3294 = vld [vmem:[#allocation2] sm:$0xff]
      %v3295 = vld [vmem:[#allocation2 + $0x8] sm:$0xff]
      %v3296 = vld [vmem:[#allocation2 + $0x10] sm:$0xff]
      %v3297 = vld [vmem:[#allocation2 + $0x18] sm:$0xff]
      %v3298 = vld [vmem:[#allocation2 + $0x20] sm:$0xff]
      %v3299 = vld [vmem:[#allocation2 + $0x28] sm:$0xff]
      %v3300 = vld [vmem:[#allocation2 + $0x30] sm:$0xff]
      %v3301 = vld [vmem:[#allocation2 + $0x38] sm:$0xff]
      %v3302 = vld [vmem:[#allocation2 + $0x40] sm:$0xff]
      %v3303 = vld [vmem:[#allocation2 + $0x48] sm:$0xff]
      %v3304 = vld [vmem:[#allocation2 + $0x50] sm:$0xff]
      %v3305 = vld [vmem:[#allocation2 + $0x58] sm:$0xff]
      %v3306 = vld [vmem:[#allocation2 + $0x60] sm:$0xff]
      %v3307 = vld [vmem:[#allocation2 + $0x68] sm:$0xff]
      %v3308 = vld [vmem:[#allocation2 + $0x70] sm:$0xff]
      %v3309 = vld [vmem:[#allocation2 + $0x78] sm:$0xff]
      %v3310 = vld [vmem:[#allocation2 + $0x80] sm:$0xff]
      %v3311 = vld [vmem:[#allocation2 + $0x88] sm:$0xff]
      %v3312 = vld [vmem:[#allocation2 + $0x90] sm:$0xff]
      %v3313 = vld [vmem:[#allocation2 + $0x98] sm:$0xff]
      %v3314 = vld [vmem:[#allocation2 + $0xa0] sm:$0xff]
      %v3315 = vld [vmem:[#allocation2 + $0xa8] sm:$0xff]
      %v3316 = vld [vmem:[#allocation2 + $0xb0] sm:$0xff]
      %v3317 = vld [vmem:[#allocation2 + $0xb8] sm:$0xff]
      %v3318 = vld [vmem:[#allocation2 + $0xc0] sm:$0xff]
      %v3319 = vld [vmem:[#allocation2 + $0xc8] sm:$0xff]
      %v3320 = vld [vmem:[#allocation2 + $0xd0] sm:$0xff]
      %v3321 = vld [vmem:[#allocation2 + $0xd8] sm:$0xff]
      %v3322 = vld [vmem:[#allocation2 + $0xe0] sm:$0xff]
      %v3323 = vld [vmem:[#allocation2 + $0xe8] sm:$0xff]
      %3324 = vrot.lane.b32.xlu0 %v400, 16
      %v3325 = vpop.permute.xlu0 %3324
      %3326 = vrot.lane.b32.xlu0 %v404, 16
      %v3327 = vpop.permute.xlu0 %3326
      %3328 = vrot.lane.b32.xlu0 %v410, 16
      %v3329 = vpop.permute.xlu0 %3328
      %3330 = vrot.lane.b32.xlu0 %v414, 16
      %v3331 = vpop.permute.xlu0 %3330
      %3332 = vrot.lane.b32.xlu0 %v420, 16
      %v3333 = vpop.permute.xlu0 %3332
      %3334 = vrot.lane.b32.xlu0 %v424, 16
      %v3335 = vpop.permute.xlu0 %3334
      %3336 = vrot.lane.b32.xlu0 %v430, 16
      %v3337 = vpop.permute.xlu0 %3336
      %3338 = vrot.lane.b32.xlu0 %v434, 16
      %v3339 = vpop.permute.xlu0 %3338
      %3340 = vrot.lane.b32.xlu0 %v440, 16
      %v3341 = vpop.permute.xlu0 %3340
      %3342 = vrot.lane.b32.xlu0 %v444, 16
      %v3343 = vpop.permute.xlu0 %3342
      %3344 = vrot.lane.b32.xlu0 %v450, 16
      %v3345 = vpop.permute.xlu0 %3344
      %3346 = vrot.lane.b32.xlu0 %v454, 16
      %v3347 = vpop.permute.xlu0 %3346
      %3348 = vrot.lane.b32.xlu0 %v460, 16
      %v3349 = vpop.permute.xlu0 %3348
      %3350 = vrot.lane.b32.xlu0 %v464, 16
      %v3351 = vpop.permute.xlu0 %3350
      %3352 = vrot.lane.b32.xlu0 %v470, 16
      %v3353 = vpop.permute.xlu0 %3352
      %3354 = vrot.lane.b32.xlu0 %v474, 16
      %v3355 = vpop.permute.xlu0 %3354
      %3356 = vrot.lane.b32.xlu0 %v480, 16
      %v3357 = vpop.permute.xlu0 %3356
      %3358 = vrot.lane.b32.xlu0 %v484, 16
      %v3359 = vpop.permute.xlu0 %3358
      %3360 = vrot.lane.b32.xlu0 %v490, 16
      %v3361 = vpop.permute.xlu0 %3360
      %3362 = vrot.lane.b32.xlu0 %v494, 16
      %v3363 = vpop.permute.xlu0 %3362
      %3364 = vrot.lane.b32.xlu0 %v500, 16
      %v3365 = vpop.permute.xlu0 %3364
      %3366 = vrot.lane.b32.xlu0 %v504, 16
      %v3367 = vpop.permute.xlu0 %3366
      %3368 = vrot.lane.b32.xlu0 %v510, 16
      %v3369 = vpop.permute.xlu0 %3368
      %3370 = vrot.lane.b32.xlu0 %v514, 16
      %v3371 = vpop.permute.xlu0 %3370
      %3372 = vrot.lane.b32.xlu0 %v520, 16
      %v3373 = vpop.permute.xlu0 %3372
      %3374 = vrot.lane.b32.xlu0 %v524, 16
      %v3375 = vpop.permute.xlu0 %3374
      %3376 = vrot.lane.b32.xlu0 %v530, 16
      %v3377 = vpop.permute.xlu0 %3376
      %3378 = vrot.lane.b32.xlu0 %v534, 16
      %v3379 = vpop.permute.xlu0 %3378
      %3380 = vrot.lane.b32.xlu0 %v540, 16
      %v3381 = vpop.permute.xlu0 %3380
      %3382 = vrot.lane.b32.xlu0 %v544, 16
      %v3383 = vpop.permute.xlu0 %3382
      %v3414 = vadd.f32 %v3294, %v3325
      %v3415 = vadd.f32 %v3295, %v3327
      %v3416 = vadd.f32 %v3296, %v3329
      %v3417 = vadd.f32 %v3297, %v3331
      %v3418 = vadd.f32 %v3298, %v3333
      %v3419 = vadd.f32 %v3299, %v3335
      %v3420 = vadd.f32 %v3300, %v3337
      %v3421 = vadd.f32 %v3301, %v3339
      %v3422 = vadd.f32 %v3302, %v3341
      %v3423 = vadd.f32 %v3303, %v3343
      %v3424 = vadd.f32 %v3304, %v3345
      %v3425 = vadd.f32 %v3305, %v3347
      %v3426 = vadd.f32 %v3306, %v3349
      %v3427 = vadd.f32 %v3307, %v3351
      %v3428 = vadd.f32 %v3308, %v3353
      %v3429 = vadd.f32 %v3309, %v3355
      %v3430 = vadd.f32 %v3310, %v3357
      %v3431 = vadd.f32 %v3311, %v3359
      %v3432 = vadd.f32 %v3312, %v3361
      %v3433 = vadd.f32 %v3313, %v3363
      %v3434 = vadd.f32 %v3314, %v3365
      %v3435 = vadd.f32 %v3315, %v3367
      %v3436 = vadd.f32 %v3316, %v3369
      %v3437 = vadd.f32 %v3317, %v3371
      %v3438 = vadd.f32 %v3318, %v3373
      %v3439 = vadd.f32 %v3319, %v3375
      %v3440 = vadd.f32 %v3320, %v3377
      %v3441 = vadd.f32 %v3321, %v3379
      %v3442 = vadd.f32 %v3322, %v3381
      %v3443 = vadd.f32 %v3323, %v3383
      %3444 = vst.msk [vmem:[#allocation2] sm:$0xff] %vm1134, %v3414
      %3445 = vst.msk [vmem:[#allocation2 + $0x8] sm:$0xff] %vm1134, %v3415
      %3446 = vst.msk [vmem:[#allocation2 + $0x10] sm:$0xff] %vm1134, %v3416
      %3447 = vst.msk [vmem:[#allocation2 + $0x18] sm:$0xff] %vm1134, %v3417
      %3448 = vst.msk [vmem:[#allocation2 + $0x20] sm:$0xff] %vm1134, %v3418
      %3449 = vst.msk [vmem:[#allocation2 + $0x28] sm:$0xff] %vm1134, %v3419
      %3450 = vst.msk [vmem:[#allocation2 + $0x30] sm:$0xff] %vm1134, %v3420
      %3451 = vst.msk [vmem:[#allocation2 + $0x38] sm:$0xff] %vm1134, %v3421
      %3452 = vst.msk [vmem:[#allocation2 + $0x40] sm:$0xff] %vm1134, %v3422
      %3453 = vst.msk [vmem:[#allocation2 + $0x48] sm:$0xff] %vm1134, %v3423
      %3454 = vst.msk [vmem:[#allocation2 + $0x50] sm:$0xff] %vm1134, %v3424
      %3455 = vst.msk [vmem:[#allocation2 + $0x58] sm:$0xff] %vm1134, %v3425
      %3456 = vst.msk [vmem:[#allocation2 + $0x60] sm:$0xff] %vm1134, %v3426
      %3457 = vst.msk [vmem:[#allocation2 + $0x68] sm:$0xff] %vm1134, %v3427
      %3458 = vst.msk [vmem:[#allocation2 + $0x70] sm:$0xff] %vm1134, %v3428
      %3459 = vst.msk [vmem:[#allocation2 + $0x78] sm:$0xff] %vm1134, %v3429
      %3460 = vst.msk [vmem:[#allocation2 + $0x80] sm:$0xff] %vm1134, %v3430
      %3461 = vst.msk [vmem:[#allocation2 + $0x88] sm:$0xff] %vm1134, %v3431
      %3462 = vst.msk [vmem:[#allocation2 + $0x90] sm:$0xff] %vm1134, %v3432
      %3463 = vst.msk [vmem:[#allocation2 + $0x98] sm:$0xff] %vm1134, %v3433
      %3464 = vst.msk [vmem:[#allocation2 + $0xa0] sm:$0xff] %vm1134, %v3434
      %3465 = vst.msk [vmem:[#allocation2 + $0xa8] sm:$0xff] %vm1134, %v3435
      %3466 = vst.msk [vmem:[#allocation2 + $0xb0] sm:$0xff] %vm1134, %v3436
      %3467 = vst.msk [vmem:[#allocation2 + $0xb8] sm:$0xff] %vm1134, %v3437
      %3468 = vst.msk [vmem:[#allocation2 + $0xc0] sm:$0xff] %vm1134, %v3438
      %3469 = vst.msk [vmem:[#allocation2 + $0xc8] sm:$0xff] %vm1134, %v3439
      %3470 = vst.msk [vmem:[#allocation2 + $0xd0] sm:$0xff] %vm1134, %v3440
      %3471 = vst.msk [vmem:[#allocation2 + $0xd8] sm:$0xff] %vm1134, %v3441
      %3472 = vst.msk [vmem:[#allocation2 + $0xe0] sm:$0xff] %vm1134, %v3442
      %3473 = vst.msk [vmem:[#allocation2 + $0xe8] sm:$0xff] %vm1134, %v3443
      %v3504 = vrot.slane %v402, 1
      %v3505 = vrot.slane %v406, 1
      %v3506 = vsel %vm1557, %v3504, %v3505
      %v3507 = vrot.slane %v412, 1
      %v3508 = vsel %vm1557, %v3505, %v3507
      %v3509 = vrot.slane %v416, 1
      %v3510 = vsel %vm1557, %v3507, %v3509
      %v3511 = vrot.slane %v422, 1
      %v3512 = vsel %vm1557, %v3509, %v3511
      %v3513 = vrot.slane %v426, 1
      %v3514 = vsel %vm1557, %v3511, %v3513
      %v3515 = vrot.slane %v432, 1
      %v3516 = vsel %vm1557, %v3513, %v3515
      %v3517 = vrot.slane %v436, 1
      %v3518 = vsel %vm1557, %v3515, %v3517
      %v3519 = vrot.slane %v442, 1
      %v3520 = vsel %vm1557, %v3517, %v3519
      %v3521 = vrot.slane %v446, 1
      %v3522 = vsel %vm1557, %v3519, %v3521
      %v3523 = vrot.slane %v452, 1
      %v3524 = vsel %vm1557, %v3521, %v3523
      %v3525 = vrot.slane %v456, 1
      %v3526 = vsel %vm1557, %v3523, %v3525
      %v3527 = vrot.slane %v462, 1
      %v3528 = vsel %vm1557, %v3525, %v3527
      %v3529 = vrot.slane %v466, 1
      %v3530 = vsel %vm1557, %v3527, %v3529
      %v3531 = vrot.slane %v472, 1
      %v3532 = vsel %vm1557, %v3529, %v3531
      %v3533 = vrot.slane %v476, 1
      %v3534 = vsel %vm1557, %v3531, %v3533
      %v3535 = vrot.slane %v482, 1
      %v3536 = vsel %vm1557, %v3533, %v3535
      %v3537 = vrot.slane %v486, 1
      %v3538 = vsel %vm1557, %v3535, %v3537
      %v3539 = vrot.slane %v492, 1
      %v3540 = vsel %vm1557, %v3537, %v3539
      %v3541 = vrot.slane %v496, 1
      %v3542 = vsel %vm1557, %v3539, %v3541
      %v3543 = vrot.slane %v502, 1
      %v3544 = vsel %vm1557, %v3541, %v3543
      %v3545 = vrot.slane %v506, 1
      %v3546 = vsel %vm1557, %v3543, %v3545
      %v3547 = vrot.slane %v512, 1
      %v3548 = vsel %vm1557, %v3545, %v3547
      %v3549 = vrot.slane %v516, 1
      %v3550 = vsel %vm1557, %v3547, %v3549
      %v3551 = vrot.slane %v522, 1
      %v3552 = vsel %vm1557, %v3549, %v3551
      %v3553 = vrot.slane %v526, 1
      %v3554 = vsel %vm1557, %v3551, %v3553
      %v3555 = vrot.slane %v532, 1
      %v3556 = vsel %vm1557, %v3553, %v3555
      %v3557 = vrot.slane %v536, 1
      %v3558 = vsel %vm1557, %v3555, %v3557
      %v3559 = vrot.slane %v542, 1
      %v3560 = vsel %vm1557, %v3557, %v3559
      %v3561 = vrot.slane %v546, 1
      %v3562 = vsel %vm1557, %v3559, %v3561
      %v3593 = vsel %vm2850, %v3506, 0.0
      %v3594 = vsel %vm2043, %v3508, 0.0
      %v3595 = vsel %vm2044, %v3510, 0.0
      %v3596 = vsel %vm2045, %v3512, 0.0
      %v3597 = vsel %vm2046, %v3514, 0.0
      %v3598 = vsel %vm2047, %v3516, 0.0
      %v3599 = vsel %vm2048, %v3518, 0.0
      %v3600 = vsel %vm2049, %v3520, 0.0
      %v3601 = vsel %vm2050, %v3522, 0.0
      %v3602 = vsel %vm2051, %v3524, 0.0
      %v3603 = vsel %vm2052, %v3526, 0.0
      %v3604 = vsel %vm2053, %v3528, 0.0
      %v3605 = vsel %vm2054, %v3530, 0.0
      %v3606 = vsel %vm2055, %v3532, 0.0
      %v3607 = vsel %vm2056, %v3534, 0.0
      %v3608 = vsel %vm2057, %v3536, 0.0
      %v3609 = vsel %vm2058, %v3538, 0.0
      %v3610 = vsel %vm2059, %v3540, 0.0
      %v3611 = vsel %vm2060, %v3542, 0.0
      %v3612 = vsel %vm2061, %v3544, 0.0
      %v3613 = vsel %vm2062, %v3546, 0.0
      %v3614 = vsel %vm2063, %v3548, 0.0
      %v3615 = vsel %vm2064, %v3550, 0.0
      %v3616 = vsel %vm2065, %v3552, 0.0
      %v3617 = vsel %vm2066, %v3554, 0.0
      %v3618 = vsel %vm2067, %v3556, 0.0
      %v3619 = vsel %vm2068, %v3558, 0.0
      %v3620 = vsel %vm2069, %v3560, 0.0
      %v3621 = vsel %vm2070, %v3562, 0.0
      %v3622 = vsel %vm2071, %v3561, 0.0
      %v3623 = vld [vmem:[#allocation2] sm:$0xff]
      %v3624 = vld [vmem:[#allocation2 + $0x8] sm:$0xff]
      %v3625 = vld [vmem:[#allocation2 + $0x10] sm:$0xff]
      %v3626 = vld [vmem:[#allocation2 + $0x18] sm:$0xff]
      %v3627 = vld [vmem:[#allocation2 + $0x20] sm:$0xff]
      %v3628 = vld [vmem:[#allocation2 + $0x28] sm:$0xff]
      %v3629 = vld [vmem:[#allocation2 + $0x30] sm:$0xff]
      %v3630 = vld [vmem:[#allocation2 + $0x38] sm:$0xff]
      %v3631 = vld [vmem:[#allocation2 + $0x40] sm:$0xff]
      %v3632 = vld [vmem:[#allocation2 + $0x48] sm:$0xff]
      %v3633 = vld [vmem:[#allocation2 + $0x50] sm:$0xff]
      %v3634 = vld [vmem:[#allocation2 + $0x58] sm:$0xff]
      %v3635 = vld [vmem:[#allocation2 + $0x60] sm:$0xff]
      %v3636 = vld [vmem:[#allocation2 + $0x68] sm:$0xff]
      %v3637 = vld [vmem:[#allocation2 + $0x70] sm:$0xff]
      %v3638 = vld [vmem:[#allocation2 + $0x78] sm:$0xff]
      %v3639 = vld [vmem:[#allocation2 + $0x80] sm:$0xff]
      %v3640 = vld [vmem:[#allocation2 + $0x88] sm:$0xff]
      %v3641 = vld [vmem:[#allocation2 + $0x90] sm:$0xff]
      %v3642 = vld [vmem:[#allocation2 + $0x98] sm:$0xff]
      %v3643 = vld [vmem:[#allocation2 + $0xa0] sm:$0xff]
      %v3644 = vld [vmem:[#allocation2 + $0xa8] sm:$0xff]
      %v3645 = vld [vmem:[#allocation2 + $0xb0] sm:$0xff]
      %v3646 = vld [vmem:[#allocation2 + $0xb8] sm:$0xff]
      %v3647 = vld [vmem:[#allocation2 + $0xc0] sm:$0xff]
      %v3648 = vld [vmem:[#allocation2 + $0xc8] sm:$0xff]
      %v3649 = vld [vmem:[#allocation2 + $0xd0] sm:$0xff]
      %v3650 = vld [vmem:[#allocation2 + $0xd8] sm:$0xff]
      %v3651 = vld [vmem:[#allocation2 + $0xe0] sm:$0xff]
      %v3652 = vld [vmem:[#allocation2 + $0xe8] sm:$0x7f]
      %v3653 = vadd.f32 %v3623, %v3593
      %v3654 = vadd.f32 %v3624, %v3594
      %v3655 = vadd.f32 %v3625, %v3595
      %v3656 = vadd.f32 %v3626, %v3596
      %v3657 = vadd.f32 %v3627, %v3597
      %v3658 = vadd.f32 %v3628, %v3598
      %v3659 = vadd.f32 %v3629, %v3599
      %v3660 = vadd.f32 %v3630, %v3600
      %v3661 = vadd.f32 %v3631, %v3601
      %v3662 = vadd.f32 %v3632, %v3602
      %v3663 = vadd.f32 %v3633, %v3603
      %v3664 = vadd.f32 %v3634, %v3604
      %v3665 = vadd.f32 %v3635, %v3605
      %v3666 = vadd.f32 %v3636, %v3606
      %v3667 = vadd.f32 %v3637, %v3607
      %v3668 = vadd.f32 %v3638, %v3608
      %v3669 = vadd.f32 %v3639, %v3609
      %v3670 = vadd.f32 %v3640, %v3610
      %v3671 = vadd.f32 %v3641, %v3611
      %v3672 = vadd.f32 %v3642, %v3612
      %v3673 = vadd.f32 %v3643, %v3613
      %v3674 = vadd.f32 %v3644, %v3614
      %v3675 = vadd.f32 %v3645, %v3615
      %v3676 = vadd.f32 %v3646, %v3616
      %v3677 = vadd.f32 %v3647, %v3617
      %v3678 = vadd.f32 %v3648, %v3618
      %v3679 = vadd.f32 %v3649, %v3619
      %v3680 = vadd.f32 %v3650, %v3620
      %v3681 = vadd.f32 %v3651, %v3621
      %v3682 = vadd.f32 %v3652, %v3622
      %3683 = vst.msk [vmem:[#allocation2] sm:$0xff] %vm1134, %v3653
      %3684 = vst.msk [vmem:[#allocation2 + $0x8] sm:$0xff] %vm1134, %v3654
      %3685 = vst.msk [vmem:[#allocation2 + $0x10] sm:$0xff] %vm1134, %v3655
      %3686 = vst.msk [vmem:[#allocation2 + $0x18] sm:$0xff] %vm1134, %v3656
      %3687 = vst.msk [vmem:[#allocation2 + $0x20] sm:$0xff] %vm1134, %v3657
      %3688 = vst.msk [vmem:[#allocation2 + $0x28] sm:$0xff] %vm1134, %v3658
      %3689 = vst.msk [vmem:[#allocation2 + $0x30] sm:$0xff] %vm1134, %v3659
      %3690 = vst.msk [vmem:[#allocation2 + $0x38] sm:$0xff] %vm1134, %v3660
      %3691 = vst.msk [vmem:[#allocation2 + $0x40] sm:$0xff] %vm1134, %v3661
      %3692 = vst.msk [vmem:[#allocation2 + $0x48] sm:$0xff] %vm1134, %v3662
      %3693 = vst.msk [vmem:[#allocation2 + $0x50] sm:$0xff] %vm1134, %v3663
      %3694 = vst.msk [vmem:[#allocation2 + $0x58] sm:$0xff] %vm1134, %v3664
      %3695 = vst.msk [vmem:[#allocation2 + $0x60] sm:$0xff] %vm1134, %v3665
      %3696 = vst.msk [vmem:[#allocation2 + $0x68] sm:$0xff] %vm1134, %v3666
      %3697 = vst.msk [vmem:[#allocation2 + $0x70] sm:$0xff] %vm1134, %v3667
      %3698 = vst.msk [vmem:[#allocation2 + $0x78] sm:$0xff] %vm1134, %v3668
      %3699 = vst.msk [vmem:[#allocation2 + $0x80] sm:$0xff] %vm1134, %v3669
      %3700 = vst.msk [vmem:[#allocation2 + $0x88] sm:$0xff] %vm1134, %v3670
      %3701 = vst.msk [vmem:[#allocation2 + $0x90] sm:$0xff] %vm1134, %v3671
      %3702 = vst.msk [vmem:[#allocation2 + $0x98] sm:$0xff] %vm1134, %v3672
      %3703 = vst.msk [vmem:[#allocation2 + $0xa0] sm:$0xff] %vm1134, %v3673
      %3704 = vst.msk [vmem:[#allocation2 + $0xa8] sm:$0xff] %vm1134, %v3674
      %3705 = vst.msk [vmem:[#allocation2 + $0xb0] sm:$0xff] %vm1134, %v3675
      %3706 = vst.msk [vmem:[#allocation2 + $0xb8] sm:$0xff] %vm1134, %v3676
      %3707 = vst.msk [vmem:[#allocation2 + $0xc0] sm:$0xff] %vm1134, %v3677
      %3708 = vst.msk [vmem:[#allocation2 + $0xc8] sm:$0xff] %vm1134, %v3678
      %3709 = vst.msk [vmem:[#allocation2 + $0xd0] sm:$0xff] %vm1134, %v3679
      %3710 = vst.msk [vmem:[#allocation2 + $0xd8] sm:$0xff] %vm1134, %v3680
      %3711 = vst.msk [vmem:[#allocation2 + $0xe0] sm:$0xff] %vm1134, %v3681
      %3712 = vst.msk [vmem:[#allocation2 + $0xe8] sm:$0x7f] %vm1706, %v3682
      %v3713 = vld [vmem:[#allocation2] sm:$0xff]
      %v3714 = vld [vmem:[#allocation2 + $0x8] sm:$0xff]
      %v3715 = vld [vmem:[#allocation2 + $0x10] sm:$0xff]
      %v3716 = vld [vmem:[#allocation2 + $0x18] sm:$0xff]
      %v3717 = vld [vmem:[#allocation2 + $0x20] sm:$0xff]
      %v3718 = vld [vmem:[#allocation2 + $0x28] sm:$0xff]
      %v3719 = vld [vmem:[#allocation2 + $0x30] sm:$0xff]
      %v3720 = vld [vmem:[#allocation2 + $0x38] sm:$0xff]
      %v3721 = vld [vmem:[#allocation2 + $0x40] sm:$0xff]
      %v3722 = vld [vmem:[#allocation2 + $0x48] sm:$0xff]
      %v3723 = vld [vmem:[#allocation2 + $0x50] sm:$0xff]
      %v3724 = vld [vmem:[#allocation2 + $0x58] sm:$0xff]
      %v3725 = vld [vmem:[#allocation2 + $0x60] sm:$0xff]
      %v3726 = vld [vmem:[#allocation2 + $0x68] sm:$0xff]
      %v3727 = vld [vmem:[#allocation2 + $0x70] sm:$0xff]
      %v3728 = vld [vmem:[#allocation2 + $0x78] sm:$0xff]
      %v3729 = vld [vmem:[#allocation2 + $0x80] sm:$0xff]
      %v3730 = vld [vmem:[#allocation2 + $0x88] sm:$0xff]
      %v3731 = vld [vmem:[#allocation2 + $0x90] sm:$0xff]
      %v3732 = vld [vmem:[#allocation2 + $0x98] sm:$0xff]
      %v3733 = vld [vmem:[#allocation2 + $0xa0] sm:$0xff]
      %v3734 = vld [vmem:[#allocation2 + $0xa8] sm:$0xff]
      %v3735 = vld [vmem:[#allocation2 + $0xb0] sm:$0xff]
      %v3736 = vld [vmem:[#allocation2 + $0xb8] sm:$0xff]
      %v3737 = vld [vmem:[#allocation2 + $0xc0] sm:$0xff]
      %v3738 = vld [vmem:[#allocation2 + $0xc8] sm:$0xff]
      %v3739 = vld [vmem:[#allocation2 + $0xd0] sm:$0xff]
      %v3740 = vld [vmem:[#allocation2 + $0xd8] sm:$0xff]
      %v3741 = vld [vmem:[#allocation2 + $0xe0] sm:$0xff]
      %v3742 = vld [vmem:[#allocation2 + $0xe8] sm:$0xff]
      %v3743 = vld [vmem:[#allocation2 + $0xf0] sm:$0xff]
      %v3744 = vld [vmem:[#allocation2 + $0xf8] sm:$0xff]
      %3745 = vst.msk [vmem:[%s170] sm:$0xff] %vm1134, %v3713
      %3746 = vst.msk [vmem:[%s170 + $0x8] sm:$0xff] %vm1134, %v3714
      %3747 = vst.msk [vmem:[%s170 + $0x10] sm:$0xff] %vm1134, %v3715
      %3748 = vst.msk [vmem:[%s170 + $0x18] sm:$0xff] %vm1134, %v3716
      %3749 = vst.msk [vmem:[%s170 + $0x20] sm:$0xff] %vm1134, %v3717
      %3750 = vst.msk [vmem:[%s170 + $0x28] sm:$0xff] %vm1134, %v3718
      %3751 = vst.msk [vmem:[%s170 + $0x30] sm:$0xff] %vm1134, %v3719
      %3752 = vst.msk [vmem:[%s170 + $0x38] sm:$0xff] %vm1134, %v3720
      %3753 = vst.msk [vmem:[%s170 + $0x40] sm:$0xff] %vm1134, %v3721
      %3754 = vst.msk [vmem:[%s170 + $0x48] sm:$0xff] %vm1134, %v3722
      %3755 = vst.msk [vmem:[%s170 + $0x50] sm:$0xff] %vm1134, %v3723
      %3756 = vst.msk [vmem:[%s170 + $0x58] sm:$0xff] %vm1134, %v3724
      %3757 = vst.msk [vmem:[%s170 + $0x60] sm:$0xff] %vm1134, %v3725
      %3758 = vst.msk [vmem:[%s170 + $0x68] sm:$0xff] %vm1134, %v3726
      %3759 = vst.msk [vmem:[%s170 + $0x70] sm:$0xff] %vm1134, %v3727
      %3760 = vst.msk [vmem:[%s170 + $0x78] sm:$0xff] %vm1134, %v3728
      %3761 = vst.msk [vmem:[%s170 + $0x80] sm:$0xff] %vm1134, %v3729
      %3762 = vst.msk [vmem:[%s170 + $0x88] sm:$0xff] %vm1134, %v3730
      %3763 = vst.msk [vmem:[%s170 + $0x90] sm:$0xff] %vm1134, %v3731
      %3764 = vst.msk [vmem:[%s170 + $0x98] sm:$0xff] %vm1134, %v3732
      %3765 = vst.msk [vmem:[%s170 + $0xa0] sm:$0xff] %vm1134, %v3733
      %3766 = vst.msk [vmem:[%s170 + $0xa8] sm:$0xff] %vm1134, %v3734
      %3767 = vst.msk [vmem:[%s170 + $0xb0] sm:$0xff] %vm1134, %v3735
      %3768 = vst.msk [vmem:[%s170 + $0xb8] sm:$0xff] %vm1134, %v3736
      %3769 = vst.msk [vmem:[%s170 + $0xc0] sm:$0xff] %vm1134, %v3737
      %3770 = vst.msk [vmem:[%s170 + $0xc8] sm:$0xff] %vm1134, %v3738
      %3771 = vst.msk [vmem:[%s170 + $0xd0] sm:$0xff] %vm1134, %v3739
      %3772 = vst.msk [vmem:[%s170 + $0xd8] sm:$0xff] %vm1134, %v3740
      %3773 = vst.msk [vmem:[%s170 + $0xe0] sm:$0xff] %vm1134, %v3741
      %3774 = vst.msk [vmem:[%s170 + $0xe8] sm:$0xff] %vm1134, %v3742
      %3775 = vst.msk [vmem:[%s170 + $0xf0] sm:$0xff] %vm1134, %v3743
      %3776 = vst.msk [vmem:[%s170 + $0xf8] sm:$0xff] %vm1134, %v3744
      %p3777 = scmp.lt.s32.totalorder %s14, 1
      %s3778 = scalar_select %p3777, %s14, 1
      %s3779 = smul.addr %s3778, 32
      %s3780 = smul.addr %s3779, 8
      %s3781 = scalar_lea.vmem %s3, %s3780
      // Predicated region
      $region33: #{tpu_custom_call.1} parent=31 // pred_check
        %p3782 = pneg %p100
      $region34: #{tpu_custom_call.1} parent=31 // pred_check_branch
        %3784 = sbr.rel (%p3782) target = $region36
      $region35: #{tpu_custom_call.1} parent=31 // pred_region
        _
      $region36: #{tpu_custom_call.1} parent=31 // pred_fallthru
        _
    $region32: #{tpu_custom_call.1} parent=5 // pred_fallthru
      _
    %p3785 = scmp.le.s32.totalorder 2, %s9
    // Predicated region
    $region37: #{tpu_custom_call.1} parent=5 // pred_check
      %p3786 = pneg %p3785
    $region38: #{tpu_custom_call.1} parent=5 // pred_check_branch
      %3788 = sbr.rel (%p3786) target = $region40
    $region39: #{tpu_custom_call.1} parent=5 // pred_region
      %s3789 = ssub.s32 %s9, 2
      // Predicated region
      $region41: #{tpu_custom_call.1} parent=39 // pred_check
        %p3790 = pneg %p106
      $region42: #{tpu_custom_call.1} parent=39 // pred_check_branch
        %3792 = sbr.rel (%p3790) target = $region44
      $region43: #{tpu_custom_call.1} parent=39 // pred_region
        %p3793 = scmp.lt.s32.totalorder %s15, 1
        %s3794 = scalar_select %p3793, %s15, 1
        %s3795 = smul.addr %s3794, 32
        %s3796 = smul.addr %s3795, 8
        %s3797 = scalar_lea.vmem %s3, %s3796
      $region44: #{tpu_custom_call.1} parent=39 // pred_fallthru
        _
    $region40: #{tpu_custom_call.1} parent=5 // pred_fallthru
      _
  $region6: #{tpu_custom_call.1} parent=0 // loop_footer
    %s13 = sadd.s32 1, %s9
  $region7: #{tpu_custom_call.1} parent=0 // loop_footer_branch
    %8 = sbr.rel target = $region3
  $region8: #{tpu_custom_call.1} parent=0 // loop_exit
    _

</llo_original>
